<compile_context>
chip_gen: v5e
topology: v5e:2x2
jax: 0.10.0
libtpu: 0.0.40
codegen_flags: <defaults>
</compile_context>

<pallas_src>
import functools

import jax
import jax.numpy as jnp
from jax import lax
from jax.experimental import pallas as pl
from jax.experimental.pallas import tpu as pltpu


# ----------------------------------------------------------------------------
# Fused ConvTranspose2d(k=4, s=2, p=1, bias=False) kernel
#   per image: 4 parities x 4 taps accumulating MXU dots, bf16 operands,
#   f32 accumulation, bf16 lane-dense store, optional fused ReLU / BN stats.
# ----------------------------------------------------------------------------
def _deconv_body(xp_ref, w_ref, o_ref, st_ref, *, H, W, Cin, Cout, B_t, apply_relu):
    HW = H * W
    collect_stats = st_ref is not None
    if collect_stats:
        s1 = jnp.zeros((1, Cout), jnp.float32)
        s2 = jnp.zeros((1, Cout), jnp.float32)

    for img in range(B_t):
        xb = xp_ref[img]                                   # (Cin, H+2, W+2) bf16
        # Nine distinct shifted windows, built once per image in bf16 and
        # reused by every parity (no (9*Cin, H*W) concat is ever formed).
        win = {}
        for ay in range(3):
            for ax in range(3):
                win[(ay, ax)] = xb[:, ay:ay + H, ax:ax + W].reshape(Cin, HW)

        accs = []
        for r in range(2):
            for s in range(2):
                p = 2 * r + s
                acc = jnp.zeros((Cout, HW), jnp.float32)
                for eh in range(2):
                    for ew in range(2):
                        t = 2 * eh + ew
                        acc = acc + jnp.dot(
                            w_ref[p, t], win[(r + eh, s + ew)],
                            preferred_element_type=jnp.float32)
                accs.append(acc)
                out_val = jnp.maximum(acc, 0.0) if apply_relu else acc
                o_ref[img, p] = out_val.astype(o_ref.dtype)   # lane-dense bf16 store

        if collect_stats:
            # Per-image channel sums / sums-of-squares from the f32 accumulators.
            tot = accs[0] + accs[1] + accs[2] + accs[3]
            tot_sq = (accs[0] * accs[0] + accs[1] * accs[1]
                      + accs[2] * accs[2] + accs[3] * accs[3])
            s1 = s1 + jnp.sum(tot, axis=1)[None, :]
            s2 = s2 + jnp.sum(tot_sq, axis=1)[None, :]

    if collect_stats:
        st_ref[0] = jnp.concatenate([s1, s2], axis=0)       # (2, Cout), tiny


def _deconv_relu_kernel(xp_ref, w_ref, o_ref, **kw):
    _deconv_body(xp_ref, w_ref, o_ref, None, apply_relu=True, **kw)


def _deconv_stats_kernel(xp_ref, w_ref, o_ref, st_ref, **kw):
    _deconv_body(xp_ref, w_ref, o_ref, st_ref, apply_relu=False, **kw)


def _vmem_limit_bytes(B_t, Cin, Cout, H, W):
    HW = H * W
    in_blk = B_t * Cin * (H + 2) * (W + 2) * 2           # bf16 input block
    out_blk = B_t * 4 * Cout * HW * 2                    # bf16 output block
    weights = 16 * Cout * Cin * 2
    windows = 9 * Cin * HW * 2                           # live windows per image
    accs = 4 * Cout * HW * 4
    need = 2 * (in_blk + out_blk) + weights + windows + accs + (1 << 20)
    # Raise v5e's 16 MiB scoped default; cap well below v7x's 64 MiB physical.
    return int(min(112 * (1 << 20), max(32 * (1 << 20), 2 * need)))


def _conv_transpose_2x(xp, w4, H, W, Cin, Cout, B_t, with_stats):
    N = xp.shape[0]
    steps = N // B_t
    HW = H * W
    in_specs = [
        pl.BlockSpec((B_t, Cin, H + 2, W + 2), lambda n: (n, 0, 0, 0)),
        pl.BlockSpec((4, 4, Cout, Cin), lambda n: (0, 0, 0, 0)),
    ]
    sub_spec = pl.BlockSpec((B_t, 4, Cout, HW), lambda n: (n, 0, 0, 0))
    kw = dict(H=H, W=W, Cin=Cin, Cout=Cout, B_t=B_t)
    cp = pltpu.CompilerParams(
        dimension_semantics=("parallel",),
        vmem_limit_bytes=_vmem_limit_bytes(B_t, Cin, Cout, H, W))
    if with_stats:
        kern = functools.partial(_deconv_stats_kernel, **kw)
        out_shape = (jax.ShapeDtypeStruct((N, 4, Cout, HW), jnp.bfloat16),
                     jax.ShapeDtypeStruct((steps, 2, Cout), jnp.float32))
        out_specs = (sub_spec, pl.BlockSpec((1, 2, Cout), lambda n: (n, 0, 0)))
    else:
        kern = functools.partial(_deconv_relu_kernel, **kw)
        out_shape = jax.ShapeDtypeStruct((N, 4, Cout, HW), jnp.bfloat16)
        out_specs = sub_spec
    return pl.pallas_call(
        kern,
        out_shape=out_shape,
        grid=(steps,),
        in_specs=in_specs,
        out_specs=out_specs,
        compiler_params=cp,
    )(xp, w4)


# ----------------------------------------------------------------------------
# Weight prep: PyTorch (Cin, Cout, 4, 4) -> (parity, tap, Cout, Cin) bf16
#   (only the 2x2 live taps of each sub-pixel parity; no zero padding)
# ----------------------------------------------------------------------------
def _split_weight(w_pt):
    Cin, Cout = w_pt.shape[0], w_pt.shape[1]
    mats = []
    for r in range(2):
        for s in range(2):
            for eh in range(2):
                for ew in range(2):
                    kh, kw = 3 - 2 * eh - r, 3 - 2 * ew - s
                    mats.append(w_pt[:, :, kh, kw].T)        # (Cout, Cin)
    return jnp.stack(mats, 0).reshape(4, 4, Cout, Cin).astype(jnp.bfloat16)


def _pick_batch_tile(N, max_bt=4):
    bt = 1
    for c in range(1, min(N, max_bt) + 1):
        if N % c == 0:
            bt = c
    return bt


# ----------------------------------------------------------------------------
# Public wrapper == UpsampleBlock.forward
# ----------------------------------------------------------------------------
def upsample_block(x_nchw, w_pt, gamma, beta, *, use_normalizer):
    # x_nchw: (N, Cin, H, W); w_pt: (Cin, Cout, 4, 4) PyTorch ConvTranspose2d weight.
    N, Cin, H, W = x_nchw.shape
    Cout = w_pt.shape[1]
    B_t = _pick_batch_tile(N)

    # bf16 cast fused into the zero-pad pass: pad write + kernel read are half width.
    xp = jnp.pad(x_nchw.astype(jnp.bfloat16), ((0, 0), (0, 0), (1, 1), (1, 1)))
    w4 = _split_weight(w_pt)

    if use_normalizer:
        sub, stats = _conv_transpose_2x(xp, w4, H, W, Cin, Cout, B_t, with_stats=True)
        cnt = jnp.float32(N * 4 * H * W)                    # N * 2H * 2W elems / channel
        s1 = jnp.sum(stats[:, 0, :], axis=0)                # (Cout,)
        s2 = jnp.sum(stats[:, 1, :], axis=0)                # (Cout,)
        mean = s1 / cnt
        var = jnp.maximum(s2 / cnt - mean * mean, 0.0)      # clamp cancellation noise
        scale = gamma * lax.rsqrt(var + 1e-5)
        shift = beta - mean * scale
    else:
        sub = _conv_transpose_2x(xp, w4, H, W, Cin, Cout, B_t, with_stats=False)

    # Single fused epilogue pass over the bf16 slab: (optional BN scale/shift +
    # ReLU) + f32 upcast + sub-pixel interleave (N,4,Cout,H*W) -> (N,Cout,2H,2W).
    y = sub.astype(jnp.float32).reshape(N, 2, 2, Cout, H, W)
    if use_normalizer:
        y = y * scale[None, None, None, :, None, None] \
            + shift[None, None, None, :, None, None]
        y = jnp.maximum(y, 0.0)
    out = y.transpose(0, 3, 4, 1, 5, 2)                     # (N, Cout, H, 2, W, 2)
    return out.reshape(N, Cout, 2 * H, 2 * W)


# ----------------------------------------------------------------------------
# Pure-JAX reference (correctness check only)
# ----------------------------------------------------------------------------
def _reference(x_nchw, w_pt, gamma, beta, use_normalizer):
    # conv_transpose == conv(dilate(x, 2), flip(W^T), pad = k-1-p = 2)
    w_conv = jnp.transpose(w_pt, (1, 0, 2, 3))[:, :, ::-1, ::-1]   # (Cout, Cin, 4, 4)
    y = lax.conv_general_dilated(
        x_nchw, w_conv, window_strides=(1, 1),
        padding=((2, 2), (2, 2)), lhs_dilation=(2, 2),
        dimension_numbers=("NCHW", "OIHW", "NCHW"),
        precision=lax.Precision.HIGHEST)
    if use_normalizer:
        mean = jnp.mean(y, axis=(0, 2, 3), keepdims=True)
        var = jnp.mean(jnp.square(y - mean), axis=(0, 2, 3), keepdims=True)
        y = (y - mean) / jnp.sqrt(var + 1e-5)
        y = y * gamma[None, :, None, None] + beta[None, :, None, None]
    return jnp.maximum(y, 0.0)


if __name__ == "__main__":
    key = jax.random.PRNGKey(0)
    k1, k2, k3, k4 = jax.random.split(key, 4)

    N, Cin, Cout, H, W = 2, 4, 8, 16, 16
    x = jax.random.normal(k1, (N, Cin, H, W), jnp.float32)
    w_pt = 0.05 * jax.random.normal(k2, (Cin, Cout, 4, 4), jnp.float32)
    gamma = 1.0 + 0.1 * jax.random.normal(k3, (Cout,), jnp.float32)
    beta = 0.1 * jax.random.normal(k4, (Cout,), jnp.float32)

    # use_normalizer=True path (ConvT -> BatchNorm -> ReLU).
    out = jax.block_until_ready(
        upsample_block(x, w_pt, gamma, beta, use_normalizer=True))
    ref = _reference(x, w_pt, gamma, beta, True)
    assert out.shape == (N, Cout, 2 * H, 2 * W), out.shape
    err = float(jnp.max(jnp.abs(out - ref)))
    # bf16 MXU operands + bf16 intermediate slab, then per-channel normalization
    # (scale ~ 1/sigma) vs f32 HIGHEST reference.
    assert err < 5e-2, err

    # use_normalizer=False path (ConvT -> ReLU, fused in-kernel).
    out2 = jax.block_until_ready(
        upsample_block(x, w_pt, gamma, beta, use_normalizer=False))
    ref2 = _reference(x, w_pt, gamma, beta, False)
    err2 = float(jnp.max(jnp.abs(out2 - ref2)))
    assert err2 < 3e-2, err2

    print("KERNEL_OK")
</pallas_src>

<mosaic_0001>
module attributes {stable_mosaic.version = 11 : i64} {
  func.func @_deconv_stats_kernel(%arg0: i32, %arg1: memref<2x4x18x18xbf16, #tpu.memory_space<vmem>>, %arg2: memref<4x4x8x4xbf16, #tpu.memory_space<vmem>>, %arg3: memref<2x4x8x256xbf16, #tpu.memory_space<vmem>>, %arg4: memref<1x2x8xf32, #tpu.memory_space<vmem>>) attributes {dimension_semantics = [#tpu.dimension_semantics<parallel>], iteration_bounds = array<i64: 1>, scalar_prefetch = 0 : i64, scratch_operands = 0 : i64, tpu.core_type = #tpu.core_type<tc>, window_params = [{transform_indices = @transform_0, window_bounds = array<i64: 2, 4, 18, 18>}, {pipeline_mode = #tpu.pipeline_mode<synchronous>, transform_indices = @transform_1, window_bounds = array<i64: 4, 4, 8, 4>}, {transform_indices = @transform_2, window_bounds = array<i64: 2, 4, 8, 256>}, {transform_indices = @transform_3, window_bounds = array<i64: 1, 2, 8>}]} {
    %cst = arith.constant 0.000000e+00 : f32
    %0 = vector.broadcast %cst : f32 to vector<1x8xf32>
    %cst_0 = arith.constant 0.000000e+00 : f32
    %1 = vector.broadcast %cst_0 : f32 to vector<1x8xf32>
    %c0 = arith.constant 0 : index
    %c0_1 = arith.constant 0 : index
    %c0_2 = arith.constant 0 : index
    %c0_3 = arith.constant 0 : index
    %2 = vector.load %arg1[%c0, %c0_1, %c0_2, %c0_3] : memref<2x4x18x18xbf16, #tpu.memory_space<vmem>>, vector<1x4x18x18xbf16>
    %3 = vector.shape_cast %2 : vector<1x4x18x18xbf16> to vector<4x18x18xbf16>
    %4 = vector.extract_strided_slice %3 {offsets = [0, 0, 0], sizes = [4, 16, 16], strides = [1, 1, 1]} : vector<4x18x18xbf16> to vector<4x16x16xbf16>
    %5 = vector.shape_cast %4 : vector<4x16x16xbf16> to vector<4x256xbf16>
    %6 = vector.extract_strided_slice %3 {offsets = [0, 0, 1], sizes = [4, 16, 16], strides = [1, 1, 1]} : vector<4x18x18xbf16> to vector<4x16x16xbf16>
    %7 = vector.shape_cast %6 : vector<4x16x16xbf16> to vector<4x256xbf16>
    %8 = vector.extract_strided_slice %3 {offsets = [0, 0, 2], sizes = [4, 16, 16], strides = [1, 1, 1]} : vector<4x18x18xbf16> to vector<4x16x16xbf16>
    %9 = vector.shape_cast %8 : vector<4x16x16xbf16> to vector<4x256xbf16>
    %10 = vector.extract_strided_slice %3 {offsets = [0, 1, 0], sizes = [4, 16, 16], strides = [1, 1, 1]} : vector<4x18x18xbf16> to vector<4x16x16xbf16>
    %11 = vector.shape_cast %10 : vector<4x16x16xbf16> to vector<4x256xbf16>
    %12 = vector.extract_strided_slice %3 {offsets = [0, 1, 1], sizes = [4, 16, 16], strides = [1, 1, 1]} : vector<4x18x18xbf16> to vector<4x16x16xbf16>
    %13 = vector.shape_cast %12 : vector<4x16x16xbf16> to vector<4x256xbf16>
    %14 = vector.extract_strided_slice %3 {offsets = [0, 1, 2], sizes = [4, 16, 16], strides = [1, 1, 1]} : vector<4x18x18xbf16> to vector<4x16x16xbf16>
    %15 = vector.shape_cast %14 : vector<4x16x16xbf16> to vector<4x256xbf16>
    %16 = vector.extract_strided_slice %3 {offsets = [0, 2, 0], sizes = [4, 16, 16], strides = [1, 1, 1]} : vector<4x18x18xbf16> to vector<4x16x16xbf16>
    %17 = vector.shape_cast %16 : vector<4x16x16xbf16> to vector<4x256xbf16>
    %18 = vector.extract_strided_slice %3 {offsets = [0, 2, 1], sizes = [4, 16, 16], strides = [1, 1, 1]} : vector<4x18x18xbf16> to vector<4x16x16xbf16>
    %19 = vector.shape_cast %18 : vector<4x16x16xbf16> to vector<4x256xbf16>
    %20 = vector.extract_strided_slice %3 {offsets = [0, 2, 2], sizes = [4, 16, 16], strides = [1, 1, 1]} : vector<4x18x18xbf16> to vector<4x16x16xbf16>
    %21 = vector.shape_cast %20 : vector<4x16x16xbf16> to vector<4x256xbf16>
    %cst_4 = arith.constant 0.000000e+00 : f32
    %22 = vector.broadcast %cst_4 : f32 to vector<8x256xf32>
    %c0_5 = arith.constant 0 : index
    %c0_6 = arith.constant 0 : index
    %c0_7 = arith.constant 0 : index
    %c0_8 = arith.constant 0 : index
    %23 = vector.load %arg2[%c0_5, %c0_6, %c0_7, %c0_8] : memref<4x4x8x4xbf16, #tpu.memory_space<vmem>>, vector<1x1x8x4xbf16>
    %24 = vector.shape_cast %23 : vector<1x1x8x4xbf16> to vector<8x4xbf16>
    %cst_9 = arith.constant dense<0.000000e+00> : vector<8x256xf32>
    %25 = tpu.matmul %24, %5, %cst_9 {dimension_numbers = #tpu.dot_dimension_numbers<[1], [0], [0], [1], [0, 0, 1, 1], [], []>} : vector<8x4xbf16>, vector<4x256xbf16>, vector<8x256xf32> -> vector<8x256xf32>
    %26 = arith.addf %22, %25 : vector<8x256xf32>
    %c0_10 = arith.constant 0 : index
    %c1 = arith.constant 1 : index
    %c0_11 = arith.constant 0 : index
    %c0_12 = arith.constant 0 : index
    %27 = vector.load %arg2[%c0_10, %c1, %c0_11, %c0_12] : memref<4x4x8x4xbf16, #tpu.memory_space<vmem>>, vector<1x1x8x4xbf16>
    %28 = vector.shape_cast %27 : vector<1x1x8x4xbf16> to vector<8x4xbf16>
    %cst_13 = arith.constant dense<0.000000e+00> : vector<8x256xf32>
    %29 = tpu.matmul %28, %7, %cst_13 {dimension_numbers = #tpu.dot_dimension_numbers<[1], [0], [0], [1], [0, 0, 1, 1], [], []>} : vector<8x4xbf16>, vector<4x256xbf16>, vector<8x256xf32> -> vector<8x256xf32>
    %30 = arith.addf %26, %29 : vector<8x256xf32>
    %c0_14 = arith.constant 0 : index
    %c2 = arith.constant 2 : index
    %c0_15 = arith.constant 0 : index
    %c0_16 = arith.constant 0 : index
    %31 = vector.load %arg2[%c0_14, %c2, %c0_15, %c0_16] : memref<4x4x8x4xbf16, #tpu.memory_space<vmem>>, vector<1x1x8x4xbf16>
    %32 = vector.shape_cast %31 : vector<1x1x8x4xbf16> to vector<8x4xbf16>
    %cst_17 = arith.constant dense<0.000000e+00> : vector<8x256xf32>
    %33 = tpu.matmul %32, %11, %cst_17 {dimension_numbers = #tpu.dot_dimension_numbers<[1], [0], [0], [1], [0, 0, 1, 1], [], []>} : vector<8x4xbf16>, vector<4x256xbf16>, vector<8x256xf32> -> vector<8x256xf32>
    %34 = arith.addf %30, %33 : vector<8x256xf32>
    %c0_18 = arith.constant 0 : index
    %c3 = arith.constant 3 : index
    %c0_19 = arith.constant 0 : index
    %c0_20 = arith.constant 0 : index
    %35 = vector.load %arg2[%c0_18, %c3, %c0_19, %c0_20] : memref<4x4x8x4xbf16, #tpu.memory_space<vmem>>, vector<1x1x8x4xbf16>
    %36 = vector.shape_cast %35 : vector<1x1x8x4xbf16> to vector<8x4xbf16>
    %cst_21 = arith.constant dense<0.000000e+00> : vector<8x256xf32>
    %37 = tpu.matmul %36, %13, %cst_21 {dimension_numbers = #tpu.dot_dimension_numbers<[1], [0], [0], [1], [0, 0, 1, 1], [], []>} : vector<8x4xbf16>, vector<4x256xbf16>, vector<8x256xf32> -> vector<8x256xf32>
    %38 = arith.addf %34, %37 : vector<8x256xf32>
    %39 = arith.truncf %38 : vector<8x256xf32> to vector<8x256xbf16>
    %c0_22 = arith.constant 0 : index
    %c0_23 = arith.constant 0 : index
    %c0_24 = arith.constant 0 : index
    %c0_25 = arith.constant 0 : index
    %40 = vector.load %arg3[%c0_22, %c0_23, %c0_24, %c0_25] : memref<2x4x8x256xbf16, #tpu.memory_space<vmem>>, vector<1x1x8x256xbf16>
    %41 = vector.shape_cast %40 : vector<1x1x8x256xbf16> to vector<8x256xbf16>
    %42 = vector.shape_cast %39 : vector<8x256xbf16> to vector<1x1x8x256xbf16>
    tpu.vector_store %arg3[%c0_22, %c0_23, %c0_24, %c0_25], %42 {strides = array<i32>} : memref<2x4x8x256xbf16, #tpu.memory_space<vmem>>, vector<1x1x8x256xbf16>,
    %cst_26 = arith.constant 0.000000e+00 : f32
    %43 = vector.broadcast %cst_26 : f32 to vector<8x256xf32>
    %c1_27 = arith.constant 1 : index
    %c0_28 = arith.constant 0 : index
    %c0_29 = arith.constant 0 : index
    %c0_30 = arith.constant 0 : index
    %44 = vector.load %arg2[%c1_27, %c0_28, %c0_29, %c0_30] : memref<4x4x8x4xbf16, #tpu.memory_space<vmem>>, vector<1x1x8x4xbf16>
    %45 = vector.shape_cast %44 : vector<1x1x8x4xbf16> to vector<8x4xbf16>
    %cst_31 = arith.constant dense<0.000000e+00> : vector<8x256xf32>
    %46 = tpu.matmul %45, %7, %cst_31 {dimension_numbers = #tpu.dot_dimension_numbers<[1], [0], [0], [1], [0, 0, 1, 1], [], []>} : vector<8x4xbf16>, vector<4x256xbf16>, vector<8x256xf32> -> vector<8x256xf32>
    %47 = arith.addf %43, %46 : vector<8x256xf32>
    %c1_32 = arith.constant 1 : index
    %c1_33 = arith.constant 1 : index
    %c0_34 = arith.constant 0 : index
    %c0_35 = arith.constant 0 : index
    %48 = vector.load %arg2[%c1_32, %c1_33, %c0_34, %c0_35] : memref<4x4x8x4xbf16, #tpu.memory_space<vmem>>, vector<1x1x8x4xbf16>
    %49 = vector.shape_cast %48 : vector<1x1x8x4xbf16> to vector<8x4xbf16>
    %cst_36 = arith.constant dense<0.000000e+00> : vector<8x256xf32>
    %50 = tpu.matmul %49, %9, %cst_36 {dimension_numbers = #tpu.dot_dimension_numbers<[1], [0], [0], [1], [0, 0, 1, 1], [], []>} : vector<8x4xbf16>, vector<4x256xbf16>, vector<8x256xf32> -> vector<8x256xf32>
    %51 = arith.addf %47, %50 : vector<8x256xf32>
    %c1_37 = arith.constant 1 : index
    %c2_38 = arith.constant 2 : index
    %c0_39 = arith.constant 0 : index
    %c0_40 = arith.constant 0 : index
    %52 = vector.load %arg2[%c1_37, %c2_38, %c0_39, %c0_40] : memref<4x4x8x4xbf16, #tpu.memory_space<vmem>>, vector<1x1x8x4xbf16>
    %53 = vector.shape_cast %52 : vector<1x1x8x4xbf16> to vector<8x4xbf16>
    %cst_41 = arith.constant dense<0.000000e+00> : vector<8x256xf32>
    %54 = tpu.matmul %53, %13, %cst_41 {dimension_numbers = #tpu.dot_dimension_numbers<[1], [0], [0], [1], [0, 0, 1, 1], [], []>} : vector<8x4xbf16>, vector<4x256xbf16>, vector<8x256xf32> -> vector<8x256xf32>
    %55 = arith.addf %51, %54 : vector<8x256xf32>
    %c1_42 = arith.constant 1 : index
    %c3_43 = arith.constant 3 : index
    %c0_44 = arith.constant 0 : index
    %c0_45 = arith.constant 0 : index
    %56 = vector.load %arg2[%c1_42, %c3_43, %c0_44, %c0_45] : memref<4x4x8x4xbf16, #tpu.memory_space<vmem>>, vector<1x1x8x4xbf16>
    %57 = vector.shape_cast %56 : vector<1x1x8x4xbf16> to vector<8x4xbf16>
    %cst_46 = arith.constant dense<0.000000e+00> : vector<8x256xf32>
    %58 = tpu.matmul %57, %15, %cst_46 {dimension_numbers = #tpu.dot_dimension_numbers<[1], [0], [0], [1], [0, 0, 1, 1], [], []>} : vector<8x4xbf16>, vector<4x256xbf16>, vector<8x256xf32> -> vector<8x256xf32>
    %59 = arith.addf %55, %58 : vector<8x256xf32>
    %60 = arith.truncf %59 : vector<8x256xf32> to vector<8x256xbf16>
    %c0_47 = arith.constant 0 : index
    %c1_48 = arith.constant 1 : index
    %c0_49 = arith.constant 0 : index
    %c0_50 = arith.constant 0 : index
    %61 = vector.load %arg3[%c0_47, %c1_48, %c0_49, %c0_50] : memref<2x4x8x256xbf16, #tpu.memory_space<vmem>>, vector<1x1x8x256xbf16>
    %62 = vector.shape_cast %61 : vector<1x1x8x256xbf16> to vector<8x256xbf16>
    %63 = vector.shape_cast %60 : vector<8x256xbf16> to vector<1x1x8x256xbf16>
    tpu.vector_store %arg3[%c0_47, %c1_48, %c0_49, %c0_50], %63 {strides = array<i32>} : memref<2x4x8x256xbf16, #tpu.memory_space<vmem>>, vector<1x1x8x256xbf16>,
    %cst_51 = arith.constant 0.000000e+00 : f32
    %64 = vector.broadcast %cst_51 : f32 to vector<8x256xf32>
    %c2_52 = arith.constant 2 : index
    %c0_53 = arith.constant 0 : index
    %c0_54 = arith.constant 0 : index
    %c0_55 = arith.constant 0 : index
    %65 = vector.load %arg2[%c2_52, %c0_53, %c0_54, %c0_55] : memref<4x4x8x4xbf16, #tpu.memory_space<vmem>>, vector<1x1x8x4xbf16>
    %66 = vector.shape_cast %65 : vector<1x1x8x4xbf16> to vector<8x4xbf16>
    %cst_56 = arith.constant dense<0.000000e+00> : vector<8x256xf32>
    %67 = tpu.matmul %66, %11, %cst_56 {dimension_numbers = #tpu.dot_dimension_numbers<[1], [0], [0], [1], [0, 0, 1, 1], [], []>} : vector<8x4xbf16>, vector<4x256xbf16>, vector<8x256xf32> -> vector<8x256xf32>
    %68 = arith.addf %64, %67 : vector<8x256xf32>
    %c2_57 = arith.constant 2 : index
    %c1_58 = arith.constant 1 : index
    %c0_59 = arith.constant 0 : index
    %c0_60 = arith.constant 0 : index
    %69 = vector.load %arg2[%c2_57, %c1_58, %c0_59, %c0_60] : memref<4x4x8x4xbf16, #tpu.memory_space<vmem>>, vector<1x1x8x4xbf16>
    %70 = vector.shape_cast %69 : vector<1x1x8x4xbf16> to vector<8x4xbf16>
    %cst_61 = arith.constant dense<0.000000e+00> : vector<8x256xf32>
    %71 = tpu.matmul %70, %13, %cst_61 {dimension_numbers = #tpu.dot_dimension_numbers<[1], [0], [0], [1], [0, 0, 1, 1], [], []>} : vector<8x4xbf16>, vector<4x256xbf16>, vector<8x256xf32> -> vector<8x256xf32>
    %72 = arith.addf %68, %71 : vector<8x256xf32>
    %c2_62 = arith.constant 2 : index
    %c2_63 = arith.constant 2 : index
    %c0_64 = arith.constant 0 : index
    %c0_65 = arith.constant 0 : index
    %73 = vector.load %arg2[%c2_62, %c2_63, %c0_64, %c0_65] : memref<4x4x8x4xbf16, #tpu.memory_space<vmem>>, vector<1x1x8x4xbf16>
    %74 = vector.shape_cast %73 : vector<1x1x8x4xbf16> to vector<8x4xbf16>
    %cst_66 = arith.constant dense<0.000000e+00> : vector<8x256xf32>
    %75 = tpu.matmul %74, %17, %cst_66 {dimension_numbers = #tpu.dot_dimension_numbers<[1], [0], [0], [1], [0, 0, 1, 1], [], []>} : vector<8x4xbf16>, vector<4x256xbf16>, vector<8x256xf32> -> vector<8x256xf32>
    %76 = arith.addf %72, %75 : vector<8x256xf32>
    %c2_67 = arith.constant 2 : index
    %c3_68 = arith.constant 3 : index
    %c0_69 = arith.constant 0 : index
    %c0_70 = arith.constant 0 : index
    %77 = vector.load %arg2[%c2_67, %c3_68, %c0_69, %c0_70] : memref<4x4x8x4xbf16, #tpu.memory_space<vmem>>, vector<1x1x8x4xbf16>
    %78 = vector.shape_cast %77 : vector<1x1x8x4xbf16> to vector<8x4xbf16>
    %cst_71 = arith.constant dense<0.000000e+00> : vector<8x256xf32>
    %79 = tpu.matmul %78, %19, %cst_71 {dimension_numbers = #tpu.dot_dimension_numbers<[1], [0], [0], [1], [0, 0, 1, 1], [], []>} : vector<8x4xbf16>, vector<4x256xbf16>, vector<8x256xf32> -> vector<8x256xf32>
    %80 = arith.addf %76, %79 : vector<8x256xf32>
    %81 = arith.truncf %80 : vector<8x256xf32> to vector<8x256xbf16>
    %c0_72 = arith.constant 0 : index
    %c2_73 = arith.constant 2 : index
    %c0_74 = arith.constant 0 : index
    %c0_75 = arith.constant 0 : index
    %82 = vector.load %arg3[%c0_72, %c2_73, %c0_74, %c0_75] : memref<2x4x8x256xbf16, #tpu.memory_space<vmem>>, vector<1x1x8x256xbf16>
    %83 = vector.shape_cast %82 : vector<1x1x8x256xbf16> to vector<8x256xbf16>
    %84 = vector.shape_cast %81 : vector<8x256xbf16> to vector<1x1x8x256xbf16>
    tpu.vector_store %arg3[%c0_72, %c2_73, %c0_74, %c0_75], %84 {strides = array<i32>} : memref<2x4x8x256xbf16, #tpu.memory_space<vmem>>, vector<1x1x8x256xbf16>,
    %cst_76 = arith.constant 0.000000e+00 : f32
    %85 = vector.broadcast %cst_76 : f32 to vector<8x256xf32>
    %c3_77 = arith.constant 3 : index
    %c0_78 = arith.constant 0 : index
    %c0_79 = arith.constant 0 : index
    %c0_80 = arith.constant 0 : index
    %86 = vector.load %arg2[%c3_77, %c0_78, %c0_79, %c0_80] : memref<4x4x8x4xbf16, #tpu.memory_space<vmem>>, vector<1x1x8x4xbf16>
    %87 = vector.shape_cast %86 : vector<1x1x8x4xbf16> to vector<8x4xbf16>
    %cst_81 = arith.constant dense<0.000000e+00> : vector<8x256xf32>
    %88 = tpu.matmul %87, %13, %cst_81 {dimension_numbers = #tpu.dot_dimension_numbers<[1], [0], [0], [1], [0, 0, 1, 1], [], []>} : vector<8x4xbf16>, vector<4x256xbf16>, vector<8x256xf32> -> vector<8x256xf32>
    %89 = arith.addf %85, %88 : vector<8x256xf32>
    %c3_82 = arith.constant 3 : index
    %c1_83 = arith.constant 1 : index
    %c0_84 = arith.constant 0 : index
    %c0_85 = arith.constant 0 : index
    %90 = vector.load %arg2[%c3_82, %c1_83, %c0_84, %c0_85] : memref<4x4x8x4xbf16, #tpu.memory_space<vmem>>, vector<1x1x8x4xbf16>
    %91 = vector.shape_cast %90 : vector<1x1x8x4xbf16> to vector<8x4xbf16>
    %cst_86 = arith.constant dense<0.000000e+00> : vector<8x256xf32>
    %92 = tpu.matmul %91, %15, %cst_86 {dimension_numbers = #tpu.dot_dimension_numbers<[1], [0], [0], [1], [0, 0, 1, 1], [], []>} : vector<8x4xbf16>, vector<4x256xbf16>, vector<8x256xf32> -> vector<8x256xf32>
    %93 = arith.addf %89, %92 : vector<8x256xf32>
    %c3_87 = arith.constant 3 : index
    %c2_88 = arith.constant 2 : index
    %c0_89 = arith.constant 0 : index
    %c0_90 = arith.constant 0 : index
    %94 = vector.load %arg2[%c3_87, %c2_88, %c0_89, %c0_90] : memref<4x4x8x4xbf16, #tpu.memory_space<vmem>>, vector<1x1x8x4xbf16>
    %95 = vector.shape_cast %94 : vector<1x1x8x4xbf16> to vector<8x4xbf16>
    %cst_91 = arith.constant dense<0.000000e+00> : vector<8x256xf32>
    %96 = tpu.matmul %95, %19, %cst_91 {dimension_numbers = #tpu.dot_dimension_numbers<[1], [0], [0], [1], [0, 0, 1, 1], [], []>} : vector<8x4xbf16>, vector<4x256xbf16>, vector<8x256xf32> -> vector<8x256xf32>
    %97 = arith.addf %93, %96 : vector<8x256xf32>
    %c3_92 = arith.constant 3 : index
    %c3_93 = arith.constant 3 : index
    %c0_94 = arith.constant 0 : index
    %c0_95 = arith.constant 0 : index
    %98 = vector.load %arg2[%c3_92, %c3_93, %c0_94, %c0_95] : memref<4x4x8x4xbf16, #tpu.memory_space<vmem>>, vector<1x1x8x4xbf16>
    %99 = vector.shape_cast %98 : vector<1x1x8x4xbf16> to vector<8x4xbf16>
    %cst_96 = arith.constant dense<0.000000e+00> : vector<8x256xf32>
    %100 = tpu.matmul %99, %21, %cst_96 {dimension_numbers = #tpu.dot_dimension_numbers<[1], [0], [0], [1], [0, 0, 1, 1], [], []>} : vector<8x4xbf16>, vector<4x256xbf16>, vector<8x256xf32> -> vector<8x256xf32>
    %101 = arith.addf %97, %100 : vector<8x256xf32>
    %102 = arith.truncf %101 : vector<8x256xf32> to vector<8x256xbf16>
    %c0_97 = arith.constant 0 : index
    %c3_98 = arith.constant 3 : index
    %c0_99 = arith.constant 0 : index
    %c0_100 = arith.constant 0 : index
    %103 = vector.load %arg3[%c0_97, %c3_98, %c0_99, %c0_100] : memref<2x4x8x256xbf16, #tpu.memory_space<vmem>>, vector<1x1x8x256xbf16>
    %104 = vector.shape_cast %103 : vector<1x1x8x256xbf16> to vector<8x256xbf16>
    %105 = vector.shape_cast %102 : vector<8x256xbf16> to vector<1x1x8x256xbf16>
    tpu.vector_store %arg3[%c0_97, %c3_98, %c0_99, %c0_100], %105 {strides = array<i32>} : memref<2x4x8x256xbf16, #tpu.memory_space<vmem>>, vector<1x1x8x256xbf16>,
    %106 = arith.addf %38, %59 : vector<8x256xf32>
    %107 = arith.addf %106, %80 : vector<8x256xf32>
    %108 = arith.addf %107, %101 : vector<8x256xf32>
    %109 = arith.mulf %38, %38 : vector<8x256xf32>
    %110 = arith.mulf %59, %59 : vector<8x256xf32>
    %111 = arith.addf %109, %110 : vector<8x256xf32>
    %112 = arith.mulf %80, %80 : vector<8x256xf32>
    %113 = arith.addf %111, %112 : vector<8x256xf32>
    %114 = arith.mulf %101, %101 : vector<8x256xf32>
    %115 = arith.addf %113, %114 : vector<8x256xf32>
    %cst_101 = arith.constant dense<0.000000e+00> : vector<8xf32>
    %116 = vector.multi_reduction <add>, %108, %cst_101 [1] : vector<8x256xf32> to vector<8xf32>
    %117 = vector.shape_cast %116 : vector<8xf32> to vector<1x8xf32>
    %118 = arith.addf %0, %117 : vector<1x8xf32>
    %cst_102 = arith.constant dense<0.000000e+00> : vector<8xf32>
    %119 = vector.multi_reduction <add>, %115, %cst_102 [1] : vector<8x256xf32> to vector<8xf32>
    %120 = vector.shape_cast %119 : vector<8xf32> to vector<1x8xf32>
    %121 = arith.addf %1, %120 : vector<1x8xf32>
    %c1_103 = arith.constant 1 : index
    %c0_104 = arith.constant 0 : index
    %c0_105 = arith.constant 0 : index
    %c0_106 = arith.constant 0 : index
    %122 = vector.load %arg1[%c1_103, %c0_104, %c0_105, %c0_106] : memref<2x4x18x18xbf16, #tpu.memory_space<vmem>>, vector<1x4x18x18xbf16>
    %123 = vector.shape_cast %122 : vector<1x4x18x18xbf16> to vector<4x18x18xbf16>
    %124 = vector.extract_strided_slice %123 {offsets = [0, 0, 0], sizes = [4, 16, 16], strides = [1, 1, 1]} : vector<4x18x18xbf16> to vector<4x16x16xbf16>
    %125 = vector.shape_cast %124 : vector<4x16x16xbf16> to vector<4x256xbf16>
    %126 = vector.extract_strided_slice %123 {offsets = [0, 0, 1], sizes = [4, 16, 16], strides = [1, 1, 1]} : vector<4x18x18xbf16> to vector<4x16x16xbf16>
    %127 = vector.shape_cast %126 : vector<4x16x16xbf16> to vector<4x256xbf16>
    %128 = vector.extract_strided_slice %123 {offsets = [0, 0, 2], sizes = [4, 16, 16], strides = [1, 1, 1]} : vector<4x18x18xbf16> to vector<4x16x16xbf16>
    %129 = vector.shape_cast %128 : vector<4x16x16xbf16> to vector<4x256xbf16>
    %130 = vector.extract_strided_slice %123 {offsets = [0, 1, 0], sizes = [4, 16, 16], strides = [1, 1, 1]} : vector<4x18x18xbf16> to vector<4x16x16xbf16>
    %131 = vector.shape_cast %130 : vector<4x16x16xbf16> to vector<4x256xbf16>
    %132 = vector.extract_strided_slice %123 {offsets = [0, 1, 1], sizes = [4, 16, 16], strides = [1, 1, 1]} : vector<4x18x18xbf16> to vector<4x16x16xbf16>
    %133 = vector.shape_cast %132 : vector<4x16x16xbf16> to vector<4x256xbf16>
    %134 = vector.extract_strided_slice %123 {offsets = [0, 1, 2], sizes = [4, 16, 16], strides = [1, 1, 1]} : vector<4x18x18xbf16> to vector<4x16x16xbf16>
    %135 = vector.shape_cast %134 : vector<4x16x16xbf16> to vector<4x256xbf16>
    %136 = vector.extract_strided_slice %123 {offsets = [0, 2, 0], sizes = [4, 16, 16], strides = [1, 1, 1]} : vector<4x18x18xbf16> to vector<4x16x16xbf16>
    %137 = vector.shape_cast %136 : vector<4x16x16xbf16> to vector<4x256xbf16>
    %138 = vector.extract_strided_slice %123 {offsets = [0, 2, 1], sizes = [4, 16, 16], strides = [1, 1, 1]} : vector<4x18x18xbf16> to vector<4x16x16xbf16>
    %139 = vector.shape_cast %138 : vector<4x16x16xbf16> to vector<4x256xbf16>
    %140 = vector.extract_strided_slice %123 {offsets = [0, 2, 2], sizes = [4, 16, 16], strides = [1, 1, 1]} : vector<4x18x18xbf16> to vector<4x16x16xbf16>
    %141 = vector.shape_cast %140 : vector<4x16x16xbf16> to vector<4x256xbf16>
    %cst_107 = arith.constant 0.000000e+00 : f32
    %142 = vector.broadcast %cst_107 : f32 to vector<8x256xf32>
    %c0_108 = arith.constant 0 : index
    %c0_109 = arith.constant 0 : index
    %c0_110 = arith.constant 0 : index
    %c0_111 = arith.constant 0 : index
    %143 = vector.load %arg2[%c0_108, %c0_109, %c0_110, %c0_111] : memref<4x4x8x4xbf16, #tpu.memory_space<vmem>>, vector<1x1x8x4xbf16>
    %144 = vector.shape_cast %143 : vector<1x1x8x4xbf16> to vector<8x4xbf16>
    %cst_112 = arith.constant dense<0.000000e+00> : vector<8x256xf32>
    %145 = tpu.matmul %144, %125, %cst_112 {dimension_numbers = #tpu.dot_dimension_numbers<[1], [0], [0], [1], [0, 0, 1, 1], [], []>} : vector<8x4xbf16>, vector<4x256xbf16>, vector<8x256xf32> -> vector<8x256xf32>
    %146 = arith.addf %142, %145 : vector<8x256xf32>
    %c0_113 = arith.constant 0 : index
    %c1_114 = arith.constant 1 : index
    %c0_115 = arith.constant 0 : index
    %c0_116 = arith.constant 0 : index
    %147 = vector.load %arg2[%c0_113, %c1_114, %c0_115, %c0_116] : memref<4x4x8x4xbf16, #tpu.memory_space<vmem>>, vector<1x1x8x4xbf16>
    %148 = vector.shape_cast %147 : vector<1x1x8x4xbf16> to vector<8x4xbf16>
    %cst_117 = arith.constant dense<0.000000e+00> : vector<8x256xf32>
    %149 = tpu.matmul %148, %127, %cst_117 {dimension_numbers = #tpu.dot_dimension_numbers<[1], [0], [0], [1], [0, 0, 1, 1], [], []>} : vector<8x4xbf16>, vector<4x256xbf16>, vector<8x256xf32> -> vector<8x256xf32>
    %150 = arith.addf %146, %149 : vector<8x256xf32>
    %c0_118 = arith.constant 0 : index
    %c2_119 = arith.constant 2 : index
    %c0_120 = arith.constant 0 : index
    %c0_121 = arith.constant 0 : index
    %151 = vector.load %arg2[%c0_118, %c2_119, %c0_120, %c0_121] : memref<4x4x8x4xbf16, #tpu.memory_space<vmem>>, vector<1x1x8x4xbf16>
    %152 = vector.shape_cast %151 : vector<1x1x8x4xbf16> to vector<8x4xbf16>
    %cst_122 = arith.constant dense<0.000000e+00> : vector<8x256xf32>
    %153 = tpu.matmul %152, %131, %cst_122 {dimension_numbers = #tpu.dot_dimension_numbers<[1], [0], [0], [1], [0, 0, 1, 1], [], []>} : vector<8x4xbf16>, vector<4x256xbf16>, vector<8x256xf32> -> vector<8x256xf32>
    %154 = arith.addf %150, %153 : vector<8x256xf32>
    %c0_123 = arith.constant 0 : index
    %c3_124 = arith.constant 3 : index
    %c0_125 = arith.constant 0 : index
    %c0_126 = arith.constant 0 : index
    %155 = vector.load %arg2[%c0_123, %c3_124, %c0_125, %c0_126] : memref<4x4x8x4xbf16, #tpu.memory_space<vmem>>, vector<1x1x8x4xbf16>
    %156 = vector.shape_cast %155 : vector<1x1x8x4xbf16> to vector<8x4xbf16>
    %cst_127 = arith.constant dense<0.000000e+00> : vector<8x256xf32>
    %157 = tpu.matmul %156, %133, %cst_127 {dimension_numbers = #tpu.dot_dimension_numbers<[1], [0], [0], [1], [0, 0, 1, 1], [], []>} : vector<8x4xbf16>, vector<4x256xbf16>, vector<8x256xf32> -> vector<8x256xf32>
    %158 = arith.addf %154, %157 : vector<8x256xf32>
    %159 = arith.truncf %158 : vector<8x256xf32> to vector<8x256xbf16>
    %c1_128 = arith.constant 1 : index
    %c0_129 = arith.constant 0 : index
    %c0_130 = arith.constant 0 : index
    %c0_131 = arith.constant 0 : index
    %160 = vector.load %arg3[%c1_128, %c0_129, %c0_130, %c0_131] : memref<2x4x8x256xbf16, #tpu.memory_space<vmem>>, vector<1x1x8x256xbf16>
    %161 = vector.shape_cast %160 : vector<1x1x8x256xbf16> to vector<8x256xbf16>
    %162 = vector.shape_cast %159 : vector<8x256xbf16> to vector<1x1x8x256xbf16>
    tpu.vector_store %arg3[%c1_128, %c0_129, %c0_130, %c0_131], %162 {strides = array<i32>} : memref<2x4x8x256xbf16, #tpu.memory_space<vmem>>, vector<1x1x8x256xbf16>,
    %cst_132 = arith.constant 0.000000e+00 : f32
    %163 = vector.broadcast %cst_132 : f32 to vector<8x256xf32>
    %c1_133 = arith.constant 1 : index
    %c0_134 = arith.constant 0 : index
    %c0_135 = arith.constant 0 : index
    %c0_136 = arith.constant 0 : index
    %164 = vector.load %arg2[%c1_133, %c0_134, %c0_135, %c0_136] : memref<4x4x8x4xbf16, #tpu.memory_space<vmem>>, vector<1x1x8x4xbf16>
    %165 = vector.shape_cast %164 : vector<1x1x8x4xbf16> to vector<8x4xbf16>
    %cst_137 = arith.constant dense<0.000000e+00> : vector<8x256xf32>
    %166 = tpu.matmul %165, %127, %cst_137 {dimension_numbers = #tpu.dot_dimension_numbers<[1], [0], [0], [1], [0, 0, 1, 1], [], []>} : vector<8x4xbf16>, vector<4x256xbf16>, vector<8x256xf32> -> vector<8x256xf32>
    %167 = arith.addf %163, %166 : vector<8x256xf32>
    %c1_138 = arith.constant 1 : index
    %c1_139 = arith.constant 1 : index
    %c0_140 = arith.constant 0 : index
    %c0_141 = arith.constant 0 : index
    %168 = vector.load %arg2[%c1_138, %c1_139, %c0_140, %c0_141] : memref<4x4x8x4xbf16, #tpu.memory_space<vmem>>, vector<1x1x8x4xbf16>
    %169 = vector.shape_cast %168 : vector<1x1x8x4xbf16> to vector<8x4xbf16>
    %cst_142 = arith.constant dense<0.000000e+00> : vector<8x256xf32>
    %170 = tpu.matmul %169, %129, %cst_142 {dimension_numbers = #tpu.dot_dimension_numbers<[1], [0], [0], [1], [0, 0, 1, 1], [], []>} : vector<8x4xbf16>, vector<4x256xbf16>, vector<8x256xf32> -> vector<8x256xf32>
    %171 = arith.addf %167, %170 : vector<8x256xf32>
    %c1_143 = arith.constant 1 : index
    %c2_144 = arith.constant 2 : index
    %c0_145 = arith.constant 0 : index
    %c0_146 = arith.constant 0 : index
    %172 = vector.load %arg2[%c1_143, %c2_144, %c0_145, %c0_146] : memref<4x4x8x4xbf16, #tpu.memory_space<vmem>>, vector<1x1x8x4xbf16>
    %173 = vector.shape_cast %172 : vector<1x1x8x4xbf16> to vector<8x4xbf16>
    %cst_147 = arith.constant dense<0.000000e+00> : vector<8x256xf32>
    %174 = tpu.matmul %173, %133, %cst_147 {dimension_numbers = #tpu.dot_dimension_numbers<[1], [0], [0], [1], [0, 0, 1, 1], [], []>} : vector<8x4xbf16>, vector<4x256xbf16>, vector<8x256xf32> -> vector<8x256xf32>
    %175 = arith.addf %171, %174 : vector<8x256xf32>
    %c1_148 = arith.constant 1 : index
    %c3_149 = arith.constant 3 : index
    %c0_150 = arith.constant 0 : index
    %c0_151 = arith.constant 0 : index
    %176 = vector.load %arg2[%c1_148, %c3_149, %c0_150, %c0_151] : memref<4x4x8x4xbf16, #tpu.memory_space<vmem>>, vector<1x1x8x4xbf16>
    %177 = vector.shape_cast %176 : vector<1x1x8x4xbf16> to vector<8x4xbf16>
    %cst_152 = arith.constant dense<0.000000e+00> : vector<8x256xf32>
    %178 = tpu.matmul %177, %135, %cst_152 {dimension_numbers = #tpu.dot_dimension_numbers<[1], [0], [0], [1], [0, 0, 1, 1], [], []>} : vector<8x4xbf16>, vector<4x256xbf16>, vector<8x256xf32> -> vector<8x256xf32>
    %179 = arith.addf %175, %178 : vector<8x256xf32>
    %180 = arith.truncf %179 : vector<8x256xf32> to vector<8x256xbf16>
    %c1_153 = arith.constant 1 : index
    %c1_154 = arith.constant 1 : index
    %c0_155 = arith.constant 0 : index
    %c0_156 = arith.constant 0 : index
    %181 = vector.load %arg3[%c1_153, %c1_154, %c0_155, %c0_156] : memref<2x4x8x256xbf16, #tpu.memory_space<vmem>>, vector<1x1x8x256xbf16>
    %182 = vector.shape_cast %181 : vector<1x1x8x256xbf16> to vector<8x256xbf16>
    %183 = vector.shape_cast %180 : vector<8x256xbf16> to vector<1x1x8x256xbf16>
    tpu.vector_store %arg3[%c1_153, %c1_154, %c0_155, %c0_156], %183 {strides = array<i32>} : memref<2x4x8x256xbf16, #tpu.memory_space<vmem>>, vector<1x1x8x256xbf16>,
    %cst_157 = arith.constant 0.000000e+00 : f32
    %184 = vector.broadcast %cst_157 : f32 to vector<8x256xf32>
    %c2_158 = arith.constant 2 : index
    %c0_159 = arith.constant 0 : index
    %c0_160 = arith.constant 0 : index
    %c0_161 = arith.constant 0 : index
    %185 = vector.load %arg2[%c2_158, %c0_159, %c0_160, %c0_161] : memref<4x4x8x4xbf16, #tpu.memory_space<vmem>>, vector<1x1x8x4xbf16>
    %186 = vector.shape_cast %185 : vector<1x1x8x4xbf16> to vector<8x4xbf16>
    %cst_162 = arith.constant dense<0.000000e+00> : vector<8x256xf32>
    %187 = tpu.matmul %186, %131, %cst_162 {dimension_numbers = #tpu.dot_dimension_numbers<[1], [0], [0], [1], [0, 0, 1, 1], [], []>} : vector<8x4xbf16>, vector<4x256xbf16>, vector<8x256xf32> -> vector<8x256xf32>
    %188 = arith.addf %184, %187 : vector<8x256xf32>
    %c2_163 = arith.constant 2 : index
    %c1_164 = arith.constant 1 : index
    %c0_165 = arith.constant 0 : index
    %c0_166 = arith.constant 0 : index
    %189 = vector.load %arg2[%c2_163, %c1_164, %c0_165, %c0_166] : memref<4x4x8x4xbf16, #tpu.memory_space<vmem>>, vector<1x1x8x4xbf16>
    %190 = vector.shape_cast %189 : vector<1x1x8x4xbf16> to vector<8x4xbf16>
    %cst_167 = arith.constant dense<0.000000e+00> : vector<8x256xf32>
    %191 = tpu.matmul %190, %133, %cst_167 {dimension_numbers = #tpu.dot_dimension_numbers<[1], [0], [0], [1], [0, 0, 1, 1], [], []>} : vector<8x4xbf16>, vector<4x256xbf16>, vector<8x256xf32> -> vector<8x256xf32>
    %192 = arith.addf %188, %191 : vector<8x256xf32>
    %c2_168 = arith.constant 2 : index
    %c2_169 = arith.constant 2 : index
    %c0_170 = arith.constant 0 : index
    %c0_171 = arith.constant 0 : index
    %193 = vector.load %arg2[%c2_168, %c2_169, %c0_170, %c0_171] : memref<4x4x8x4xbf16, #tpu.memory_space<vmem>>, vector<1x1x8x4xbf16>
    %194 = vector.shape_cast %193 : vector<1x1x8x4xbf16> to vector<8x4xbf16>
    %cst_172 = arith.constant dense<0.000000e+00> : vector<8x256xf32>
    %195 = tpu.matmul %194, %137, %cst_172 {dimension_numbers = #tpu.dot_dimension_numbers<[1], [0], [0], [1], [0, 0, 1, 1], [], []>} : vector<8x4xbf16>, vector<4x256xbf16>, vector<8x256xf32> -> vector<8x256xf32>
    %196 = arith.addf %192, %195 : vector<8x256xf32>
    %c2_173 = arith.constant 2 : index
    %c3_174 = arith.constant 3 : index
    %c0_175 = arith.constant 0 : index
    %c0_176 = arith.constant 0 : index
    %197 = vector.load %arg2[%c2_173, %c3_174, %c0_175, %c0_176] : memref<4x4x8x4xbf16, #tpu.memory_space<vmem>>, vector<1x1x8x4xbf16>
    %198 = vector.shape_cast %197 : vector<1x1x8x4xbf16> to vector<8x4xbf16>
    %cst_177 = arith.constant dense<0.000000e+00> : vector<8x256xf32>
    %199 = tpu.matmul %198, %139, %cst_177 {dimension_numbers = #tpu.dot_dimension_numbers<[1], [0], [0], [1], [0, 0, 1, 1], [], []>} : vector<8x4xbf16>, vector<4x256xbf16>, vector<8x256xf32> -> vector<8x256xf32>
    %200 = arith.addf %196, %199 : vector<8x256xf32>
    %201 = arith.truncf %200 : vector<8x256xf32> to vector<8x256xbf16>
    %c1_178 = arith.constant 1 : index
    %c2_179 = arith.constant 2 : index
    %c0_180 = arith.constant 0 : index
    %c0_181 = arith.constant 0 : index
    %202 = vector.load %arg3[%c1_178, %c2_179, %c0_180, %c0_181] : memref<2x4x8x256xbf16, #tpu.memory_space<vmem>>, vector<1x1x8x256xbf16>
    %203 = vector.shape_cast %202 : vector<1x1x8x256xbf16> to vector<8x256xbf16>
    %204 = vector.shape_cast %201 : vector<8x256xbf16> to vector<1x1x8x256xbf16>
    tpu.vector_store %arg3[%c1_178, %c2_179, %c0_180, %c0_181], %204 {strides = array<i32>} : memref<2x4x8x256xbf16, #tpu.memory_space<vmem>>, vector<1x1x8x256xbf16>,
    %cst_182 = arith.constant 0.000000e+00 : f32
    %205 = vector.broadcast %cst_182 : f32 to vector<8x256xf32>
    %c3_183 = arith.constant 3 : index
    %c0_184 = arith.constant 0 : index
    %c0_185 = arith.constant 0 : index
    %c0_186 = arith.constant 0 : index
    %206 = vector.load %arg2[%c3_183, %c0_184, %c0_185, %c0_186] : memref<4x4x8x4xbf16, #tpu.memory_space<vmem>>, vector<1x1x8x4xbf16>
    %207 = vector.shape_cast %206 : vector<1x1x8x4xbf16> to vector<8x4xbf16>
    %cst_187 = arith.constant dense<0.000000e+00> : vector<8x256xf32>
    %208 = tpu.matmul %207, %133, %cst_187 {dimension_numbers = #tpu.dot_dimension_numbers<[1], [0], [0], [1], [0, 0, 1, 1], [], []>} : vector<8x4xbf16>, vector<4x256xbf16>, vector<8x256xf32> -> vector<8x256xf32>
    %209 = arith.addf %205, %208 : vector<8x256xf32>
    %c3_188 = arith.constant 3 : index
    %c1_189 = arith.constant 1 : index
    %c0_190 = arith.constant 0 : index
    %c0_191 = arith.constant 0 : index
    %210 = vector.load %arg2[%c3_188, %c1_189, %c0_190, %c0_191] : memref<4x4x8x4xbf16, #tpu.memory_space<vmem>>, vector<1x1x8x4xbf16>
    %211 = vector.shape_cast %210 : vector<1x1x8x4xbf16> to vector<8x4xbf16>
    %cst_192 = arith.constant dense<0.000000e+00> : vector<8x256xf32>
    %212 = tpu.matmul %211, %135, %cst_192 {dimension_numbers = #tpu.dot_dimension_numbers<[1], [0], [0], [1], [0, 0, 1, 1], [], []>} : vector<8x4xbf16>, vector<4x256xbf16>, vector<8x256xf32> -> vector<8x256xf32>
    %213 = arith.addf %209, %212 : vector<8x256xf32>
    %c3_193 = arith.constant 3 : index
    %c2_194 = arith.constant 2 : index
    %c0_195 = arith.constant 0 : index
    %c0_196 = arith.constant 0 : index
    %214 = vector.load %arg2[%c3_193, %c2_194, %c0_195, %c0_196] : memref<4x4x8x4xbf16, #tpu.memory_space<vmem>>, vector<1x1x8x4xbf16>
    %215 = vector.shape_cast %214 : vector<1x1x8x4xbf16> to vector<8x4xbf16>
    %cst_197 = arith.constant dense<0.000000e+00> : vector<8x256xf32>
    %216 = tpu.matmul %215, %139, %cst_197 {dimension_numbers = #tpu.dot_dimension_numbers<[1], [0], [0], [1], [0, 0, 1, 1], [], []>} : vector<8x4xbf16>, vector<4x256xbf16>, vector<8x256xf32> -> vector<8x256xf32>
    %217 = arith.addf %213, %216 : vector<8x256xf32>
    %c3_198 = arith.constant 3 : index
    %c3_199 = arith.constant 3 : index
    %c0_200 = arith.constant 0 : index
    %c0_201 = arith.constant 0 : index
    %218 = vector.load %arg2[%c3_198, %c3_199, %c0_200, %c0_201] : memref<4x4x8x4xbf16, #tpu.memory_space<vmem>>, vector<1x1x8x4xbf16>
    %219 = vector.shape_cast %218 : vector<1x1x8x4xbf16> to vector<8x4xbf16>
    %cst_202 = arith.constant dense<0.000000e+00> : vector<8x256xf32>
    %220 = tpu.matmul %219, %141, %cst_202 {dimension_numbers = #tpu.dot_dimension_numbers<[1], [0], [0], [1], [0, 0, 1, 1], [], []>} : vector<8x4xbf16>, vector<4x256xbf16>, vector<8x256xf32> -> vector<8x256xf32>
    %221 = arith.addf %217, %220 : vector<8x256xf32>
    %222 = arith.truncf %221 : vector<8x256xf32> to vector<8x256xbf16>
    %c1_203 = arith.constant 1 : index
    %c3_204 = arith.constant 3 : index
    %c0_205 = arith.constant 0 : index
    %c0_206 = arith.constant 0 : index
    %223 = vector.load %arg3[%c1_203, %c3_204, %c0_205, %c0_206] : memref<2x4x8x256xbf16, #tpu.memory_space<vmem>>, vector<1x1x8x256xbf16>
    %224 = vector.shape_cast %223 : vector<1x1x8x256xbf16> to vector<8x256xbf16>
    %225 = vector.shape_cast %222 : vector<8x256xbf16> to vector<1x1x8x256xbf16>
    tpu.vector_store %arg3[%c1_203, %c3_204, %c0_205, %c0_206], %225 {strides = array<i32>} : memref<2x4x8x256xbf16, #tpu.memory_space<vmem>>, vector<1x1x8x256xbf16>,
    %226 = arith.addf %158, %179 : vector<8x256xf32>
    %227 = arith.addf %226, %200 : vector<8x256xf32>
    %228 = arith.addf %227, %221 : vector<8x256xf32>
    %229 = arith.mulf %158, %158 : vector<8x256xf32>
    %230 = arith.mulf %179, %179 : vector<8x256xf32>
    %231 = arith.addf %229, %230 : vector<8x256xf32>
    %232 = arith.mulf %200, %200 : vector<8x256xf32>
    %233 = arith.addf %231, %232 : vector<8x256xf32>
    %234 = arith.mulf %221, %221 : vector<8x256xf32>
    %235 = arith.addf %233, %234 : vector<8x256xf32>
    %cst_207 = arith.constant dense<0.000000e+00> : vector<8xf32>
    %236 = vector.multi_reduction <add>, %228, %cst_207 [1] : vector<8x256xf32> to vector<8xf32>
    %237 = vector.shape_cast %236 : vector<8xf32> to vector<1x8xf32>
    %238 = arith.addf %118, %237 : vector<1x8xf32>
    %cst_208 = arith.constant dense<0.000000e+00> : vector<8xf32>
    %239 = vector.multi_reduction <add>, %235, %cst_208 [1] : vector<8x256xf32> to vector<8xf32>
    %240 = vector.shape_cast %239 : vector<8xf32> to vector<1x8xf32>
    %241 = arith.addf %121, %240 : vector<1x8xf32>
    %242 = tpu.concatenate %238, %241 in 0 : vector<1x8xf32>, vector<1x8xf32> -> vector<2x8xf32>
    %c0_209 = arith.constant 0 : index
    %c0_210 = arith.constant 0 : index
    %c0_211 = arith.constant 0 : index
    %243 = vector.load %arg4[%c0_209, %c0_210, %c0_211] : memref<1x2x8xf32, #tpu.memory_space<vmem>>, vector<1x2x8xf32>
    %244 = vector.shape_cast %243 : vector<1x2x8xf32> to vector<2x8xf32>
    %245 = vector.shape_cast %242 : vector<2x8xf32> to vector<1x2x8xf32>
    tpu.vector_store %arg4[%c0_209, %c0_210, %c0_211], %245 {strides = array<i32>} : memref<1x2x8xf32, #tpu.memory_space<vmem>>, vector<1x2x8xf32>,
    return
  }
  func.func @transform_0(%arg0: i32) -> (i32, i32, i32, i32) {
    %c0_i32 = arith.constant 0 : i32
    %c0_i32_0 = arith.constant 0 : i32
    %c0_i32_1 = arith.constant 0 : i32
    %c0_i32_2 = arith.constant 0 : i32
    return %arg0, %c0_i32, %c0_i32_0, %c0_i32_1 : i32, i32, i32, i32
  }
  func.func @transform_1(%arg0: i32) -> (i32, i32, i32, i32) {
    %c0_i32 = arith.constant 0 : i32
    %c0_i32_0 = arith.constant 0 : i32
    %c0_i32_1 = arith.constant 0 : i32
    %c0_i32_2 = arith.constant 0 : i32
    %c0_i32_3 = arith.constant 0 : i32
    return %c0_i32, %c0_i32_0, %c0_i32_1, %c0_i32_2 : i32, i32, i32, i32
  }
  func.func @transform_2(%arg0: i32) -> (i32, i32, i32, i32) {
    %c0_i32 = arith.constant 0 : i32
    %c0_i32_0 = arith.constant 0 : i32
    %c0_i32_1 = arith.constant 0 : i32
    %c0_i32_2 = arith.constant 0 : i32
    return %arg0, %c0_i32, %c0_i32_0, %c0_i32_1 : i32, i32, i32, i32
  }
  func.func @transform_3(%arg0: i32) -> (i32, i32, i32) {
    %c0_i32 = arith.constant 0 : i32
    %c0_i32_0 = arith.constant 0 : i32
    %c0_i32_1 = arith.constant 0 : i32
    return %arg0, %c0_i32, %c0_i32_0 : i32, i32, i32
  }
}

</mosaic_0001>

<llo_original>
// kernel: tpu_custom_call.1
$region0: #{tpu_custom_call.1}
  #allocation0 [shape = 'u32[]', space=smem, size = 0x4, offset = 0x4, fixed_abs, tag = 'smem constant byte address 0x4 - core index']
  #allocation1 [shape = 'u32[72,128]{1,0:T(1,128)}', space=vmem, size = 0x9000, scoped, tag = 'internal scratch']
  %s0 = inlined_call_operand.vmem [shape: bf16[2,4,18,18], index: 0, kind: input, shape index: {}]
  %s1 = inlined_call_operand.vmem [shape: bf16[4,4,8,4], index: 1, kind: input, shape index: {}]
  %s2 = inlined_call_operand.hbm [shape: bf16[2,4,8,256], index: 2, kind: output, shape index: {0}]
  %s3 = inlined_call_operand.hbm [shape: f32[1,2,8], index: 3, kind: output, shape index: {1}]
  %4 = xla_tuple %s2, %s3
  %s5 = sld [smem:[#allocation0]]
  $region26: #{tpu_custom_call.1} parent=0
    _
  %s7 = ssub.s32 1, %s5
  %s8 = scalar_select 0, %s7, %s5
  $region1: #{tpu_custom_call.1} parent=0
    #allocation2 [shape = 'u8[32768]{0}', space=vmem, size = 0x8000, scoped, tag = 'output window, operand 0, single buffered']
    #allocation3 [shape = 's32[1]{0}', space=sflag, size = 0x4, scoped, tag = 'scoped memory for tpu_custom_call.1']
    #allocation4 [shape = 'u8[1024]{0}', space=vmem, size = 0x400, scoped, tag = 'output window, operand 1, single buffered']
    #allocation5 [shape = 's32[1]{0}', space=sflag, size = 0x4, scoped, tag = 'scoped memory for tpu_custom_call.1']
    %9 = vsyncpa [#allocation3], 0
    %10 = vsyncpa [#allocation5], 0
    // Predicated region
    $region2: #{tpu_custom_call.1} parent=1 // pred_check
      _
    $region3: #{tpu_custom_call.1} parent=1 // pred_check_branch
      %12 = sbr.rel (0) target = $region5
    $region4: #{tpu_custom_call.1} parent=1 // pred_region
      _
    $region5: #{tpu_custom_call.1} parent=1 // pred_fallthru
      _
    // Predicated region
    $region6: #{tpu_custom_call.1} parent=1 // pred_check
      _
    $region7: #{tpu_custom_call.1} parent=1 // pred_check_branch
      %14 = sbr.rel (0) target = $region9
    $region8: #{tpu_custom_call.1} parent=1 // pred_region
      _
    $region9: #{tpu_custom_call.1} parent=1 // pred_fallthru
      _
    %v16 = vld [vmem:[%s0] sm:$0xf]
    %v17 = vld [vmem:[%s0 + $0x4] sm:$0xf]
    %v18 = vld [vmem:[%s0 + $0x8] sm:$0x1]
    %v19 = vld [vmem:[%s0 + $0xc] sm:$0xf]
    %v20 = vld [vmem:[%s0 + $0x10] sm:$0xf]
    %v21 = vld [vmem:[%s0 + $0x14] sm:$0x1]
    %v22 = vld [vmem:[%s0 + $0x18] sm:$0xf]
    %v23 = vld [vmem:[%s0 + $0x1c] sm:$0xf]
    %v24 = vld [vmem:[%s0 + $0x20] sm:$0x1]
    %v25 = vld [vmem:[%s0 + $0x24] sm:$0xf]
    %v26 = vld [vmem:[%s0 + $0x28] sm:$0xf]
    %v27 = vld [vmem:[%s0 + $0x2c] sm:$0x1]
    %v30 = vpack.i.b16 %v19, %v16
    %v31 = vshrl.u32 %v16, 16
    %v32 = vshrl.u32 %v19, 16
    %v33 = vpack.i.b16 %v32, %v31
    %v36 = vpack.i.b16 %v25, %v22
    %v37 = vshrl.u32 %v22, 16
    %v38 = vshrl.u32 %v25, 16
    %v39 = vpack.i.b16 %v38, %v37
    %v42 = vpack.i.b16 %v20, %v17
    %v43 = vshrl.u32 %v17, 16
    %v44 = vshrl.u32 %v20, 16
    %v45 = vpack.i.b16 %v44, %v43
    %v48 = vpack.i.b16 %v26, %v23
    %v49 = vshrl.u32 %v23, 16
    %v50 = vshrl.u32 %v26, 16
    %v51 = vpack.i.b16 %v50, %v49
    %v54 = vunpack.c.l.s4 1983009808
    %v55 = vunpack.c.0.s8 %v54
    %v56 = vperm.slane %v30, %v55
    %v59 = vunpack.c.l.s4 1983009808
    %v60 = vunpack.c.0.s8 %v59
    %v61 = vperm.slane %v36, %v60
    %v62 = vrot.slane %v61, 4
    %vm63 = vcmask 1047556
    %v64 = vsel %vm63, %v62, %v56
    %v65 = vrot.slane %v56, 4
    %v66 = vsel %vm63, %v61, %v65
    %v68 = vunpack.c.l.s4 1934713408
    %v69 = vunpack.c.0.s8 %v68
    %v70 = vperm.slane %v64, %v69
    %v72 = vunpack.c.l.s4 1934713408
    %v73 = vunpack.c.0.s8 %v72
    %v74 = vperm.slane %v66, %v73
    %v75 = vrot.slane %v70, 4
    %v76 = vsel %vm63, 0, %v75
    %v77 = vrot.slane %v74, 4
    %v78 = vsel %vm63, 0, %v77
    %v81 = vunpack.c.l.s4 1983009808
    %v82 = vunpack.c.0.s8 %v81
    %v83 = vperm.slane %v33, %v82
    %v86 = vunpack.c.l.s4 1983009808
    %v87 = vunpack.c.0.s8 %v86
    %v88 = vperm.slane %v39, %v87
    %v89 = vrot.slane %v88, 4
    %v90 = vsel %vm63, %v89, %v83
    %v91 = vrot.slane %v83, 4
    %v92 = vsel %vm63, %v88, %v91
    %v94 = vunpack.c.l.s4 1934713408
    %v95 = vunpack.c.0.s8 %v94
    %v96 = vperm.slane %v90, %v95
    %v98 = vunpack.c.l.s4 1934713408
    %v99 = vunpack.c.0.s8 %v98
    %v100 = vperm.slane %v92, %v99
    %v101 = vrot.slane %v96, 4
    %v102 = vsel %vm63, 0, %v101
    %v103 = vrot.slane %v100, 4
    %v104 = vsel %vm63, 0, %v103
    %v107 = vunpack.c.l.s4 1983009808
    %v108 = vunpack.c.0.s8 %v107
    %v109 = vperm.slane %v42, %v108
    %v112 = vunpack.c.l.s4 1983009808
    %v113 = vunpack.c.0.s8 %v112
    %v114 = vperm.slane %v48, %v113
    %v115 = vrot.slane %v114, 4
    %v116 = vsel %vm63, %v115, %v109
    %v117 = vrot.slane %v109, 4
    %v118 = vsel %vm63, %v114, %v117
    %v120 = vunpack.c.l.s4 1934713408
    %v121 = vunpack.c.0.s8 %v120
    %v122 = vperm.slane %v116, %v121
    %v124 = vunpack.c.l.s4 1934713408
    %v125 = vunpack.c.0.s8 %v124
    %v126 = vperm.slane %v118, %v125
    %v127 = vrot.slane %v122, 4
    %v128 = vsel %vm63, 0, %v127
    %v129 = vrot.slane %v126, 4
    %v130 = vsel %vm63, 0, %v129
    %v133 = vunpack.c.l.s4 1983009808
    %v134 = vunpack.c.0.s8 %v133
    %v135 = vperm.slane %v45, %v134
    %v138 = vunpack.c.l.s4 1983009808
    %v139 = vunpack.c.0.s8 %v138
    %v140 = vperm.slane %v51, %v139
    %v141 = vrot.slane %v140, 4
    %v142 = vsel %vm63, %v141, %v135
    %v143 = vrot.slane %v135, 4
    %v144 = vsel %vm63, %v140, %v143
    %v146 = vunpack.c.l.s4 1934713408
    %v147 = vunpack.c.0.s8 %v146
    %v148 = vperm.slane %v142, %v147
    %v150 = vunpack.c.l.s4 1934713408
    %v151 = vunpack.c.0.s8 %v150
    %v152 = vperm.slane %v144, %v151
    %v153 = vrot.slane %v148, 4
    %v154 = vsel %vm63, 0, %v153
    %v155 = vrot.slane %v152, 4
    %v156 = vsel %vm63, 0, %v155
    %v158 = vunpack.c.l.b16 %v96
    %v159 = vpack.c.b16 %v158, %v158
    %160 = vrot.lane.b32.xlu0 %v159, 16
    %v161 = vpop.permute.xlu0 %160
    %v163 = vunpack.c.l.b16 %v76
    %v164 = vpack.c.b16 %v163, %v163
    %165 = vrot.lane.b32.xlu0 %v164, 32
    %v166 = vpop.permute.xlu0 %165
    %v168 = vunpack.c.l.b16 %v102
    %v169 = vpack.c.b16 %v168, %v168
    %170 = vrot.lane.b32.xlu0 %v169, 48
    %v171 = vpop.permute.xlu0 %170
    %v173 = vunpack.c.l.b16 %v74
    %v174 = vpack.c.b16 %v173, %v173
    %175 = vrot.lane.b32.xlu0 %v174, 64
    %v176 = vpop.permute.xlu0 %175
    %v178 = vunpack.c.l.b16 %v100
    %v179 = vpack.c.b16 %v178, %v178
    %180 = vrot.lane.b32.xlu0 %v179, 80
    %v181 = vpop.permute.xlu0 %180
    %v183 = vunpack.c.l.b16 %v78
    %v184 = vpack.c.b16 %v183, %v183
    %185 = vrot.lane.b32.xlu0 %v184, 96
    %v186 = vpop.permute.xlu0 %185
    %v188 = vunpack.c.l.b16 %v104
    %v189 = vpack.c.b16 %v188, %v188
    %190 = vrot.lane.b32.xlu0 %v189, 112
    %v191 = vpop.permute.xlu0 %190
    %v193 = vunpack.c.l.b16 %v148
    %v194 = vpack.c.b16 %v193, %v193
    %195 = vrot.lane.b32.xlu0 %v194, 16
    %v196 = vpop.permute.xlu0 %195
    %v198 = vunpack.c.l.b16 %v128
    %v199 = vpack.c.b16 %v198, %v198
    %200 = vrot.lane.b32.xlu0 %v199, 32
    %v201 = vpop.permute.xlu0 %200
    %v203 = vunpack.c.l.b16 %v154
    %v204 = vpack.c.b16 %v203, %v203
    %205 = vrot.lane.b32.xlu0 %v204, 48
    %v206 = vpop.permute.xlu0 %205
    %v208 = vunpack.c.l.b16 %v126
    %v209 = vpack.c.b16 %v208, %v208
    %210 = vrot.lane.b32.xlu0 %v209, 64
    %v211 = vpop.permute.xlu0 %210
    %v213 = vunpack.c.l.b16 %v152
    %v214 = vpack.c.b16 %v213, %v213
    %215 = vrot.lane.b32.xlu0 %v214, 80
    %v216 = vpop.permute.xlu0 %215
    %v218 = vunpack.c.l.b16 %v130
    %v219 = vpack.c.b16 %v218, %v218
    %220 = vrot.lane.b32.xlu0 %v219, 96
    %v221 = vpop.permute.xlu0 %220
    %v223 = vunpack.c.l.b16 %v156
    %v224 = vpack.c.b16 %v223, %v223
    %225 = vrot.lane.b32.xlu0 %v224, 112
    %v226 = vpop.permute.xlu0 %225
    %vm227 = vcmask 130048
    %v230 = vsel %vm227, %v70, %v161
    %vm231 = vcmask 261120
    %v233 = vsel %vm231, %v230, %v166
    %vm234 = vcmask 392192
    %v236 = vsel %vm234, %v233, %v171
    %vm237 = vcmask 523264
    %v239 = vsel %vm237, %v236, %v176
    %vm240 = vcmask 654336
    %v242 = vsel %vm240, %v239, %v181
    %vm243 = vcmask 785408
    %v245 = vsel %vm243, %v242, %v186
    %vm246 = vcmask 916480
    %v248 = vsel %vm246, %v245, %v191
    %v251 = vsel %vm227, %v122, %v196
    %v253 = vsel %vm231, %v251, %v201
    %v255 = vsel %vm234, %v253, %v206
    %v257 = vsel %vm237, %v255, %v211
    %v259 = vsel %vm240, %v257, %v216
    %v261 = vsel %vm243, %v259, %v221
    %v263 = vsel %vm246, %v261, %v226
    %272 = vrot.lane.b32.xlu0 %v16, 127
    %v273 = vpop.permute.xlu0 %272
    %274 = vrot.lane.b32.xlu0 %v17, 127
    %v275 = vpop.permute.xlu0 %274
    %276 = vrot.lane.b32.xlu0 %v19, 127
    %v277 = vpop.permute.xlu0 %276
    %278 = vrot.lane.b32.xlu0 %v20, 127
    %v279 = vpop.permute.xlu0 %278
    %280 = vrot.lane.b32.xlu0 %v22, 127
    %v281 = vpop.permute.xlu0 %280
    %282 = vrot.lane.b32.xlu0 %v23, 127
    %v283 = vpop.permute.xlu0 %282
    %284 = vrot.lane.b32.xlu0 %v25, 127
    %v285 = vpop.permute.xlu0 %284
    %286 = vrot.lane.b32.xlu0 %v26, 127
    %v287 = vpop.permute.xlu0 %286
    %v290 = vpack.i.b16 %v277, %v273
    %v291 = vshrl.u32 %v273, 16
    %v292 = vshrl.u32 %v277, 16
    %v293 = vpack.i.b16 %v292, %v291
    %v296 = vpack.i.b16 %v285, %v281
    %v297 = vshrl.u32 %v281, 16
    %v298 = vshrl.u32 %v285, 16
    %v299 = vpack.i.b16 %v298, %v297
    %v302 = vpack.i.b16 %v279, %v275
    %v303 = vshrl.u32 %v275, 16
    %v304 = vshrl.u32 %v279, 16
    %v305 = vpack.i.b16 %v304, %v303
    %v308 = vpack.i.b16 %v287, %v283
    %v309 = vshrl.u32 %v283, 16
    %v310 = vshrl.u32 %v287, 16
    %v311 = vpack.i.b16 %v310, %v309
    %v314 = vunpack.c.l.s4 1983009808
    %v315 = vunpack.c.0.s8 %v314
    %v316 = vperm.slane %v290, %v315
    %v319 = vunpack.c.l.s4 1983009808
    %v320 = vunpack.c.0.s8 %v319
    %v321 = vperm.slane %v296, %v320
    %v322 = vrot.slane %v321, 4
    %v323 = vsel %vm63, %v322, %v316
    %v324 = vrot.slane %v316, 4
    %v325 = vsel %vm63, %v321, %v324
    %v327 = vunpack.c.l.s4 1934713408
    %v328 = vunpack.c.0.s8 %v327
    %v329 = vperm.slane %v323, %v328
    %v331 = vunpack.c.l.s4 1934713408
    %v332 = vunpack.c.0.s8 %v331
    %v333 = vperm.slane %v325, %v332
    %v334 = vrot.slane %v329, 4
    %v335 = vsel %vm63, 0, %v334
    %v336 = vrot.slane %v333, 4
    %v337 = vsel %vm63, 0, %v336
    %v340 = vunpack.c.l.s4 1983009808
    %v341 = vunpack.c.0.s8 %v340
    %v342 = vperm.slane %v293, %v341
    %v345 = vunpack.c.l.s4 1983009808
    %v346 = vunpack.c.0.s8 %v345
    %v347 = vperm.slane %v299, %v346
    %v348 = vrot.slane %v347, 4
    %v349 = vsel %vm63, %v348, %v342
    %v350 = vrot.slane %v342, 4
    %v351 = vsel %vm63, %v347, %v350
    %v353 = vunpack.c.l.s4 1934713408
    %v354 = vunpack.c.0.s8 %v353
    %v355 = vperm.slane %v349, %v354
    %v357 = vunpack.c.l.s4 1934713408
    %v358 = vunpack.c.0.s8 %v357
    %v359 = vperm.slane %v351, %v358
    %v360 = vrot.slane %v355, 4
    %v361 = vsel %vm63, 0, %v360
    %v362 = vrot.slane %v359, 4
    %v363 = vsel %vm63, 0, %v362
    %v366 = vunpack.c.l.s4 1983009808
    %v367 = vunpack.c.0.s8 %v366
    %v368 = vperm.slane %v302, %v367
    %v371 = vunpack.c.l.s4 1983009808
    %v372 = vunpack.c.0.s8 %v371
    %v373 = vperm.slane %v308, %v372
    %v374 = vrot.slane %v373, 4
    %v375 = vsel %vm63, %v374, %v368
    %v376 = vrot.slane %v368, 4
    %v377 = vsel %vm63, %v373, %v376
    %v379 = vunpack.c.l.s4 1934713408
    %v380 = vunpack.c.0.s8 %v379
    %v381 = vperm.slane %v375, %v380
    %v383 = vunpack.c.l.s4 1934713408
    %v384 = vunpack.c.0.s8 %v383
    %v385 = vperm.slane %v377, %v384
    %v386 = vrot.slane %v381, 4
    %v387 = vsel %vm63, 0, %v386
    %v388 = vrot.slane %v385, 4
    %v389 = vsel %vm63, 0, %v388
    %v392 = vunpack.c.l.s4 1983009808
    %v393 = vunpack.c.0.s8 %v392
    %v394 = vperm.slane %v305, %v393
    %v397 = vunpack.c.l.s4 1983009808
    %v398 = vunpack.c.0.s8 %v397
    %v399 = vperm.slane %v311, %v398
    %v400 = vrot.slane %v399, 4
    %v401 = vsel %vm63, %v400, %v394
    %v402 = vrot.slane %v394, 4
    %v403 = vsel %vm63, %v399, %v402
    %v405 = vunpack.c.l.s4 1934713408
    %v406 = vunpack.c.0.s8 %v405
    %v407 = vperm.slane %v401, %v406
    %v409 = vunpack.c.l.s4 1934713408
    %v410 = vunpack.c.0.s8 %v409
    %v411 = vperm.slane %v403, %v410
    %v412 = vrot.slane %v407, 4
    %v413 = vsel %vm63, 0, %v412
    %v414 = vrot.slane %v411, 4
    %v415 = vsel %vm63, 0, %v414
    %v417 = vunpack.c.l.b16 %v355
    %v418 = vpack.c.b16 %v417, %v417
    %419 = vrot.lane.b32.xlu0 %v418, 16
    %v420 = vpop.permute.xlu0 %419
    %v422 = vunpack.c.l.b16 %v335
    %v423 = vpack.c.b16 %v422, %v422
    %424 = vrot.lane.b32.xlu0 %v423, 32
    %v425 = vpop.permute.xlu0 %424
    %v427 = vunpack.c.l.b16 %v361
    %v428 = vpack.c.b16 %v427, %v427
    %429 = vrot.lane.b32.xlu0 %v428, 48
    %v430 = vpop.permute.xlu0 %429
    %v432 = vunpack.c.l.b16 %v333
    %v433 = vpack.c.b16 %v432, %v432
    %434 = vrot.lane.b32.xlu0 %v433, 64
    %v435 = vpop.permute.xlu0 %434
    %v437 = vunpack.c.l.b16 %v359
    %v438 = vpack.c.b16 %v437, %v437
    %439 = vrot.lane.b32.xlu0 %v438, 80
    %v440 = vpop.permute.xlu0 %439
    %v442 = vunpack.c.l.b16 %v337
    %v443 = vpack.c.b16 %v442, %v442
    %444 = vrot.lane.b32.xlu0 %v443, 96
    %v445 = vpop.permute.xlu0 %444
    %v447 = vunpack.c.l.b16 %v363
    %v448 = vpack.c.b16 %v447, %v447
    %449 = vrot.lane.b32.xlu0 %v448, 112
    %v450 = vpop.permute.xlu0 %449
    %v452 = vunpack.c.l.b16 %v407
    %v453 = vpack.c.b16 %v452, %v452
    %454 = vrot.lane.b32.xlu0 %v453, 16
    %v455 = vpop.permute.xlu0 %454
    %v457 = vunpack.c.l.b16 %v387
    %v458 = vpack.c.b16 %v457, %v457
    %459 = vrot.lane.b32.xlu0 %v458, 32
    %v460 = vpop.permute.xlu0 %459
    %v462 = vunpack.c.l.b16 %v413
    %v463 = vpack.c.b16 %v462, %v462
    %464 = vrot.lane.b32.xlu0 %v463, 48
    %v465 = vpop.permute.xlu0 %464
    %v467 = vunpack.c.l.b16 %v385
    %v468 = vpack.c.b16 %v467, %v467
    %469 = vrot.lane.b32.xlu0 %v468, 64
    %v470 = vpop.permute.xlu0 %469
    %v472 = vunpack.c.l.b16 %v411
    %v473 = vpack.c.b16 %v472, %v472
    %474 = vrot.lane.b32.xlu0 %v473, 80
    %v475 = vpop.permute.xlu0 %474
    %v477 = vunpack.c.l.b16 %v389
    %v478 = vpack.c.b16 %v477, %v477
    %479 = vrot.lane.b32.xlu0 %v478, 96
    %v480 = vpop.permute.xlu0 %479
    %v482 = vunpack.c.l.b16 %v415
    %v483 = vpack.c.b16 %v482, %v482
    %484 = vrot.lane.b32.xlu0 %v483, 112
    %v485 = vpop.permute.xlu0 %484
    %v488 = vsel %vm227, %v329, %v420
    %v490 = vsel %vm231, %v488, %v425
    %v492 = vsel %vm234, %v490, %v430
    %v494 = vsel %vm237, %v492, %v435
    %v496 = vsel %vm240, %v494, %v440
    %v498 = vsel %vm243, %v496, %v445
    %v500 = vsel %vm246, %v498, %v450
    %v503 = vsel %vm227, %v381, %v455
    %v505 = vsel %vm231, %v503, %v460
    %v507 = vsel %vm234, %v505, %v465
    %v509 = vsel %vm237, %v507, %v470
    %v511 = vsel %vm240, %v509, %v475
    %v513 = vsel %vm243, %v511, %v480
    %v515 = vsel %vm246, %v513, %v485
    %516 = vrot.lane.b32.xlu0 %v16, 126
    %v517 = vpop.permute.xlu0 %516
    %518 = vrot.lane.b32.xlu0 %v17, 126
    %v519 = vpop.permute.xlu0 %518
    %520 = vrot.lane.b32.xlu0 %v19, 126
    %v521 = vpop.permute.xlu0 %520
    %522 = vrot.lane.b32.xlu0 %v20, 126
    %v523 = vpop.permute.xlu0 %522
    %524 = vrot.lane.b32.xlu0 %v22, 126
    %v525 = vpop.permute.xlu0 %524
    %526 = vrot.lane.b32.xlu0 %v23, 126
    %v527 = vpop.permute.xlu0 %526
    %528 = vrot.lane.b32.xlu0 %v25, 126
    %v529 = vpop.permute.xlu0 %528
    %530 = vrot.lane.b32.xlu0 %v26, 126
    %v531 = vpop.permute.xlu0 %530
    %v534 = vpack.i.b16 %v521, %v517
    %v535 = vshrl.u32 %v517, 16
    %v536 = vshrl.u32 %v521, 16
    %v537 = vpack.i.b16 %v536, %v535
    %v540 = vpack.i.b16 %v529, %v525
    %v541 = vshrl.u32 %v525, 16
    %v542 = vshrl.u32 %v529, 16
    %v543 = vpack.i.b16 %v542, %v541
    %v546 = vpack.i.b16 %v523, %v519
    %v547 = vshrl.u32 %v519, 16
    %v548 = vshrl.u32 %v523, 16
    %v549 = vpack.i.b16 %v548, %v547
    %v552 = vpack.i.b16 %v531, %v527
    %v553 = vshrl.u32 %v527, 16
    %v554 = vshrl.u32 %v531, 16
    %v555 = vpack.i.b16 %v554, %v553
    %v558 = vunpack.c.l.s4 1983009808
    %v559 = vunpack.c.0.s8 %v558
    %v560 = vperm.slane %v534, %v559
    %v563 = vunpack.c.l.s4 1983009808
    %v564 = vunpack.c.0.s8 %v563
    %v565 = vperm.slane %v540, %v564
    %v566 = vrot.slane %v565, 4
    %v567 = vsel %vm63, %v566, %v560
    %v568 = vrot.slane %v560, 4
    %v569 = vsel %vm63, %v565, %v568
    %v571 = vunpack.c.l.s4 1934713408
    %v572 = vunpack.c.0.s8 %v571
    %v573 = vperm.slane %v567, %v572
    %v575 = vunpack.c.l.s4 1934713408
    %v576 = vunpack.c.0.s8 %v575
    %v577 = vperm.slane %v569, %v576
    %v578 = vrot.slane %v573, 4
    %v579 = vsel %vm63, 0, %v578
    %v580 = vrot.slane %v577, 4
    %v581 = vsel %vm63, 0, %v580
    %v584 = vunpack.c.l.s4 1983009808
    %v585 = vunpack.c.0.s8 %v584
    %v586 = vperm.slane %v537, %v585
    %v589 = vunpack.c.l.s4 1983009808
    %v590 = vunpack.c.0.s8 %v589
    %v591 = vperm.slane %v543, %v590
    %v592 = vrot.slane %v591, 4
    %v593 = vsel %vm63, %v592, %v586
    %v594 = vrot.slane %v586, 4
    %v595 = vsel %vm63, %v591, %v594
    %v597 = vunpack.c.l.s4 1934713408
    %v598 = vunpack.c.0.s8 %v597
    %v599 = vperm.slane %v593, %v598
    %v601 = vunpack.c.l.s4 1934713408
    %v602 = vunpack.c.0.s8 %v601
    %v603 = vperm.slane %v595, %v602
    %v604 = vrot.slane %v599, 4
    %v605 = vsel %vm63, 0, %v604
    %v606 = vrot.slane %v603, 4
    %v607 = vsel %vm63, 0, %v606
    %v610 = vunpack.c.l.s4 1983009808
    %v611 = vunpack.c.0.s8 %v610
    %v612 = vperm.slane %v546, %v611
    %v615 = vunpack.c.l.s4 1983009808
    %v616 = vunpack.c.0.s8 %v615
    %v617 = vperm.slane %v552, %v616
    %v618 = vrot.slane %v617, 4
    %v619 = vsel %vm63, %v618, %v612
    %v620 = vrot.slane %v612, 4
    %v621 = vsel %vm63, %v617, %v620
    %v623 = vunpack.c.l.s4 1934713408
    %v624 = vunpack.c.0.s8 %v623
    %v625 = vperm.slane %v619, %v624
    %v627 = vunpack.c.l.s4 1934713408
    %v628 = vunpack.c.0.s8 %v627
    %v629 = vperm.slane %v621, %v628
    %v630 = vrot.slane %v625, 4
    %v631 = vsel %vm63, 0, %v630
    %v632 = vrot.slane %v629, 4
    %v633 = vsel %vm63, 0, %v632
    %v636 = vunpack.c.l.s4 1983009808
    %v637 = vunpack.c.0.s8 %v636
    %v638 = vperm.slane %v549, %v637
    %v641 = vunpack.c.l.s4 1983009808
    %v642 = vunpack.c.0.s8 %v641
    %v643 = vperm.slane %v555, %v642
    %v644 = vrot.slane %v643, 4
    %v645 = vsel %vm63, %v644, %v638
    %v646 = vrot.slane %v638, 4
    %v647 = vsel %vm63, %v643, %v646
    %v649 = vunpack.c.l.s4 1934713408
    %v650 = vunpack.c.0.s8 %v649
    %v651 = vperm.slane %v645, %v650
    %v653 = vunpack.c.l.s4 1934713408
    %v654 = vunpack.c.0.s8 %v653
    %v655 = vperm.slane %v647, %v654
    %v656 = vrot.slane %v651, 4
    %v657 = vsel %vm63, 0, %v656
    %v658 = vrot.slane %v655, 4
    %v659 = vsel %vm63, 0, %v658
    %v661 = vunpack.c.l.b16 %v599
    %v662 = vpack.c.b16 %v661, %v661
    %663 = vrot.lane.b32.xlu0 %v662, 16
    %v664 = vpop.permute.xlu0 %663
    %v666 = vunpack.c.l.b16 %v579
    %v667 = vpack.c.b16 %v666, %v666
    %668 = vrot.lane.b32.xlu0 %v667, 32
    %v669 = vpop.permute.xlu0 %668
    %v671 = vunpack.c.l.b16 %v605
    %v672 = vpack.c.b16 %v671, %v671
    %673 = vrot.lane.b32.xlu0 %v672, 48
    %v674 = vpop.permute.xlu0 %673
    %v676 = vunpack.c.l.b16 %v577
    %v677 = vpack.c.b16 %v676, %v676
    %678 = vrot.lane.b32.xlu0 %v677, 64
    %v679 = vpop.permute.xlu0 %678
    %v681 = vunpack.c.l.b16 %v603
    %v682 = vpack.c.b16 %v681, %v681
    %683 = vrot.lane.b32.xlu0 %v682, 80
    %v684 = vpop.permute.xlu0 %683
    %v686 = vunpack.c.l.b16 %v581
    %v687 = vpack.c.b16 %v686, %v686
    %688 = vrot.lane.b32.xlu0 %v687, 96
    %v689 = vpop.permute.xlu0 %688
    %v691 = vunpack.c.l.b16 %v607
    %v692 = vpack.c.b16 %v691, %v691
    %693 = vrot.lane.b32.xlu0 %v692, 112
    %v694 = vpop.permute.xlu0 %693
    %v696 = vunpack.c.l.b16 %v651
    %v697 = vpack.c.b16 %v696, %v696
    %698 = vrot.lane.b32.xlu0 %v697, 16
    %v699 = vpop.permute.xlu0 %698
    %v701 = vunpack.c.l.b16 %v631
    %v702 = vpack.c.b16 %v701, %v701
    %703 = vrot.lane.b32.xlu0 %v702, 32
    %v704 = vpop.permute.xlu0 %703
    %v706 = vunpack.c.l.b16 %v657
    %v707 = vpack.c.b16 %v706, %v706
    %708 = vrot.lane.b32.xlu0 %v707, 48
    %v709 = vpop.permute.xlu0 %708
    %v711 = vunpack.c.l.b16 %v629
    %v712 = vpack.c.b16 %v711, %v711
    %713 = vrot.lane.b32.xlu0 %v712, 64
    %v714 = vpop.permute.xlu0 %713
    %v716 = vunpack.c.l.b16 %v655
    %v717 = vpack.c.b16 %v716, %v716
    %718 = vrot.lane.b32.xlu0 %v717, 80
    %v719 = vpop.permute.xlu0 %718
    %v721 = vunpack.c.l.b16 %v633
    %v722 = vpack.c.b16 %v721, %v721
    %723 = vrot.lane.b32.xlu0 %v722, 96
    %v724 = vpop.permute.xlu0 %723
    %v726 = vunpack.c.l.b16 %v659
    %v727 = vpack.c.b16 %v726, %v726
    %728 = vrot.lane.b32.xlu0 %v727, 112
    %v729 = vpop.permute.xlu0 %728
    %v732 = vsel %vm227, %v573, %v664
    %v734 = vsel %vm231, %v732, %v669
    %v736 = vsel %vm234, %v734, %v674
    %v738 = vsel %vm237, %v736, %v679
    %v740 = vsel %vm240, %v738, %v684
    %v742 = vsel %vm243, %v740, %v689
    %v744 = vsel %vm246, %v742, %v694
    %v747 = vsel %vm227, %v625, %v699
    %v749 = vsel %vm231, %v747, %v704
    %v751 = vsel %vm234, %v749, %v709
    %v753 = vsel %vm237, %v751, %v714
    %v755 = vsel %vm240, %v753, %v719
    %v757 = vsel %vm243, %v755, %v724
    %v759 = vsel %vm246, %v757, %v729
    %vm760 = vsmask.f32 3328
    %vm761 = vsmask.f32 7440
    %vm762 = vmor %vm760, %vm761
    %v764 = vrot.slane %v31, 4
    %v765 = vshll.u32 %v16, 16
    %v767 = vrot.slane %v765, 5
    %v768 = vor.u32 %v764, %v767
    %v769 = vrot.slane %v768, 4
    %v770 = vshll.u32 %v17, 16
    %v772 = vrot.slane %v770, 5
    %v773 = vsel %vm762, %v769, %v772
    %v775 = vrot.slane %v43, 4
    %v776 = vor.u32 %v775, %v772
    %v777 = vrot.slane %v776, 4
    %v779 = vshll.u32 %v18, 16
    %v781 = vrot.slane %v779, 5
    %v782 = vsel %vm762, %v777, %v781
    %v784 = vrot.slane %v32, 4
    %v785 = vshll.u32 %v19, 16
    %v787 = vrot.slane %v785, 5
    %v788 = vor.u32 %v784, %v787
    %v789 = vrot.slane %v788, 4
    %v790 = vshll.u32 %v20, 16
    %v792 = vrot.slane %v790, 5
    %v793 = vsel %vm762, %v789, %v792
    %v795 = vrot.slane %v44, 4
    %v796 = vor.u32 %v795, %v792
    %v797 = vrot.slane %v796, 4
    %v799 = vshll.u32 %v21, 16
    %v801 = vrot.slane %v799, 5
    %v802 = vsel %vm762, %v797, %v801
    %v804 = vrot.slane %v37, 4
    %v805 = vshll.u32 %v22, 16
    %v807 = vrot.slane %v805, 5
    %v808 = vor.u32 %v804, %v807
    %v809 = vrot.slane %v808, 4
    %v810 = vshll.u32 %v23, 16
    %v812 = vrot.slane %v810, 5
    %v813 = vsel %vm762, %v809, %v812
    %v815 = vrot.slane %v49, 4
    %v816 = vor.u32 %v815, %v812
    %v817 = vrot.slane %v816, 4
    %v819 = vshll.u32 %v24, 16
    %v821 = vrot.slane %v819, 5
    %v822 = vsel %vm762, %v817, %v821
    %v824 = vrot.slane %v38, 4
    %v825 = vshll.u32 %v25, 16
    %v827 = vrot.slane %v825, 5
    %v828 = vor.u32 %v824, %v827
    %v829 = vrot.slane %v828, 4
    %v830 = vshll.u32 %v26, 16
    %v832 = vrot.slane %v830, 5
    %v833 = vsel %vm762, %v829, %v832
    %v835 = vrot.slane %v50, 4
    %v836 = vor.u32 %v835, %v832
    %v837 = vrot.slane %v836, 4
    %v839 = vshll.u32 %v27, 16
    %v841 = vrot.slane %v839, 5
    %v842 = vsel %vm762, %v837, %v841
    %v845 = vpack.i.b16 %v793, %v773
    %v846 = vshrl.u32 %v773, 16
    %v847 = vshrl.u32 %v793, 16
    %v848 = vpack.i.b16 %v847, %v846
    %v851 = vpack.i.b16 %v833, %v813
    %v852 = vshrl.u32 %v813, 16
    %v853 = vshrl.u32 %v833, 16
    %v854 = vpack.i.b16 %v853, %v852
    %v857 = vpack.i.b16 %v802, %v782
    %v858 = vshrl.u32 %v782, 16
    %v859 = vshrl.u32 %v802, 16
    %v860 = vpack.i.b16 %v859, %v858
    %v863 = vpack.i.b16 %v842, %v822
    %v864 = vshrl.u32 %v822, 16
    %v865 = vshrl.u32 %v842, 16
    %v866 = vpack.i.b16 %v865, %v864
    %v869 = vunpack.c.l.s4 1983009808
    %v870 = vunpack.c.0.s8 %v869
    %v871 = vperm.slane %v845, %v870
    %v874 = vunpack.c.l.s4 1983009808
    %v875 = vunpack.c.0.s8 %v874
    %v876 = vperm.slane %v851, %v875
    %v877 = vrot.slane %v876, 4
    %v878 = vsel %vm63, %v877, %v871
    %v879 = vrot.slane %v871, 4
    %v880 = vsel %vm63, %v876, %v879
    %v882 = vunpack.c.l.s4 1934713408
    %v883 = vunpack.c.0.s8 %v882
    %v884 = vperm.slane %v878, %v883
    %v886 = vunpack.c.l.s4 1934713408
    %v887 = vunpack.c.0.s8 %v886
    %v888 = vperm.slane %v880, %v887
    %v889 = vrot.slane %v884, 4
    %v890 = vsel %vm63, 0, %v889
    %v891 = vrot.slane %v888, 4
    %v892 = vsel %vm63, 0, %v891
    %v895 = vunpack.c.l.s4 1983009808
    %v896 = vunpack.c.0.s8 %v895
    %v897 = vperm.slane %v848, %v896
    %v900 = vunpack.c.l.s4 1983009808
    %v901 = vunpack.c.0.s8 %v900
    %v902 = vperm.slane %v854, %v901
    %v903 = vrot.slane %v902, 4
    %v904 = vsel %vm63, %v903, %v897
    %v905 = vrot.slane %v897, 4
    %v906 = vsel %vm63, %v902, %v905
    %v908 = vunpack.c.l.s4 1934713408
    %v909 = vunpack.c.0.s8 %v908
    %v910 = vperm.slane %v904, %v909
    %v912 = vunpack.c.l.s4 1934713408
    %v913 = vunpack.c.0.s8 %v912
    %v914 = vperm.slane %v906, %v913
    %v915 = vrot.slane %v910, 4
    %v916 = vsel %vm63, 0, %v915
    %v917 = vrot.slane %v914, 4
    %v918 = vsel %vm63, 0, %v917
    %v921 = vunpack.c.l.s4 1983009808
    %v922 = vunpack.c.0.s8 %v921
    %v923 = vperm.slane %v857, %v922
    %v926 = vunpack.c.l.s4 1983009808
    %v927 = vunpack.c.0.s8 %v926
    %v928 = vperm.slane %v863, %v927
    %v929 = vrot.slane %v928, 4
    %v930 = vsel %vm63, %v929, %v923
    %v931 = vrot.slane %v923, 4
    %v932 = vsel %vm63, %v928, %v931
    %v934 = vunpack.c.l.s4 1934713408
    %v935 = vunpack.c.0.s8 %v934
    %v936 = vperm.slane %v930, %v935
    %v938 = vunpack.c.l.s4 1934713408
    %v939 = vunpack.c.0.s8 %v938
    %v940 = vperm.slane %v932, %v939
    %v941 = vrot.slane %v936, 4
    %v942 = vsel %vm63, 0, %v941
    %v943 = vrot.slane %v940, 4
    %v944 = vsel %vm63, 0, %v943
    %v947 = vunpack.c.l.s4 1983009808
    %v948 = vunpack.c.0.s8 %v947
    %v949 = vperm.slane %v860, %v948
    %v952 = vunpack.c.l.s4 1983009808
    %v953 = vunpack.c.0.s8 %v952
    %v954 = vperm.slane %v866, %v953
    %v955 = vrot.slane %v954, 4
    %v956 = vsel %vm63, %v955, %v949
    %v957 = vrot.slane %v949, 4
    %v958 = vsel %vm63, %v954, %v957
    %v960 = vunpack.c.l.s4 1934713408
    %v961 = vunpack.c.0.s8 %v960
    %v962 = vperm.slane %v956, %v961
    %v964 = vunpack.c.l.s4 1934713408
    %v965 = vunpack.c.0.s8 %v964
    %v966 = vperm.slane %v958, %v965
    %v967 = vrot.slane %v962, 4
    %v968 = vsel %vm63, 0, %v967
    %v969 = vrot.slane %v966, 4
    %v970 = vsel %vm63, 0, %v969
    %v972 = vunpack.c.l.b16 %v910
    %v973 = vpack.c.b16 %v972, %v972
    %974 = vrot.lane.b32.xlu0 %v973, 16
    %v975 = vpop.permute.xlu0 %974
    %v977 = vunpack.c.l.b16 %v890
    %v978 = vpack.c.b16 %v977, %v977
    %979 = vrot.lane.b32.xlu0 %v978, 32
    %v980 = vpop.permute.xlu0 %979
    %v982 = vunpack.c.l.b16 %v916
    %v983 = vpack.c.b16 %v982, %v982
    %984 = vrot.lane.b32.xlu0 %v983, 48
    %v985 = vpop.permute.xlu0 %984
    %v987 = vunpack.c.l.b16 %v888
    %v988 = vpack.c.b16 %v987, %v987
    %989 = vrot.lane.b32.xlu0 %v988, 64
    %v990 = vpop.permute.xlu0 %989
    %v992 = vunpack.c.l.b16 %v914
    %v993 = vpack.c.b16 %v992, %v992
    %994 = vrot.lane.b32.xlu0 %v993, 80
    %v995 = vpop.permute.xlu0 %994
    %v997 = vunpack.c.l.b16 %v892
    %v998 = vpack.c.b16 %v997, %v997
    %999 = vrot.lane.b32.xlu0 %v998, 96
    %v1000 = vpop.permute.xlu0 %999
    %v1002 = vunpack.c.l.b16 %v918
    %v1003 = vpack.c.b16 %v1002, %v1002
    %1004 = vrot.lane.b32.xlu0 %v1003, 112
    %v1005 = vpop.permute.xlu0 %1004
    %v1007 = vunpack.c.l.b16 %v962
    %v1008 = vpack.c.b16 %v1007, %v1007
    %1009 = vrot.lane.b32.xlu0 %v1008, 16
    %v1010 = vpop.permute.xlu0 %1009
    %v1012 = vunpack.c.l.b16 %v942
    %v1013 = vpack.c.b16 %v1012, %v1012
    %1014 = vrot.lane.b32.xlu0 %v1013, 32
    %v1015 = vpop.permute.xlu0 %1014
    %v1017 = vunpack.c.l.b16 %v968
    %v1018 = vpack.c.b16 %v1017, %v1017
    %1019 = vrot.lane.b32.xlu0 %v1018, 48
    %v1020 = vpop.permute.xlu0 %1019
    %v1022 = vunpack.c.l.b16 %v940
    %v1023 = vpack.c.b16 %v1022, %v1022
    %1024 = vrot.lane.b32.xlu0 %v1023, 64
    %v1025 = vpop.permute.xlu0 %1024
    %v1027 = vunpack.c.l.b16 %v966
    %v1028 = vpack.c.b16 %v1027, %v1027
    %1029 = vrot.lane.b32.xlu0 %v1028, 80
    %v1030 = vpop.permute.xlu0 %1029
    %v1032 = vunpack.c.l.b16 %v944
    %v1033 = vpack.c.b16 %v1032, %v1032
    %1034 = vrot.lane.b32.xlu0 %v1033, 96
    %v1035 = vpop.permute.xlu0 %1034
    %v1037 = vunpack.c.l.b16 %v970
    %v1038 = vpack.c.b16 %v1037, %v1037
    %1039 = vrot.lane.b32.xlu0 %v1038, 112
    %v1040 = vpop.permute.xlu0 %1039
    %v1043 = vsel %vm227, %v884, %v975
    %v1045 = vsel %vm231, %v1043, %v980
    %v1047 = vsel %vm234, %v1045, %v985
    %v1049 = vsel %vm237, %v1047, %v990
    %v1051 = vsel %vm240, %v1049, %v995
    %v1053 = vsel %vm243, %v1051, %v1000
    %v1055 = vsel %vm246, %v1053, %v1005
    %v1058 = vsel %vm227, %v936, %v1010
    %v1060 = vsel %vm231, %v1058, %v1015
    %v1062 = vsel %vm234, %v1060, %v1020
    %v1064 = vsel %vm237, %v1062, %v1025
    %v1066 = vsel %vm240, %v1064, %v1030
    %v1068 = vsel %vm243, %v1066, %v1035
    %v1070 = vsel %vm246, %v1068, %v1040
    %1071 = vrot.lane.b32.xlu0 %v773, 127
    %v1072 = vpop.permute.xlu0 %1071
    %1073 = vrot.lane.b32.xlu0 %v782, 127
    %v1074 = vpop.permute.xlu0 %1073
    %1075 = vrot.lane.b32.xlu0 %v793, 127
    %v1076 = vpop.permute.xlu0 %1075
    %1077 = vrot.lane.b32.xlu0 %v802, 127
    %v1078 = vpop.permute.xlu0 %1077
    %1079 = vrot.lane.b32.xlu0 %v813, 127
    %v1080 = vpop.permute.xlu0 %1079
    %1081 = vrot.lane.b32.xlu0 %v822, 127
    %v1082 = vpop.permute.xlu0 %1081
    %1083 = vrot.lane.b32.xlu0 %v833, 127
    %v1084 = vpop.permute.xlu0 %1083
    %1085 = vrot.lane.b32.xlu0 %v842, 127
    %v1086 = vpop.permute.xlu0 %1085
    %v1089 = vpack.i.b16 %v1076, %v1072
    %v1090 = vshrl.u32 %v1072, 16
    %v1091 = vshrl.u32 %v1076, 16
    %v1092 = vpack.i.b16 %v1091, %v1090
    %v1095 = vpack.i.b16 %v1084, %v1080
    %v1096 = vshrl.u32 %v1080, 16
    %v1097 = vshrl.u32 %v1084, 16
    %v1098 = vpack.i.b16 %v1097, %v1096
    %v1101 = vpack.i.b16 %v1078, %v1074
    %v1102 = vshrl.u32 %v1074, 16
    %v1103 = vshrl.u32 %v1078, 16
    %v1104 = vpack.i.b16 %v1103, %v1102
    %v1107 = vpack.i.b16 %v1086, %v1082
    %v1108 = vshrl.u32 %v1082, 16
    %v1109 = vshrl.u32 %v1086, 16
    %v1110 = vpack.i.b16 %v1109, %v1108
    %v1113 = vunpack.c.l.s4 1983009808
    %v1114 = vunpack.c.0.s8 %v1113
    %v1115 = vperm.slane %v1089, %v1114
    %v1118 = vunpack.c.l.s4 1983009808
    %v1119 = vunpack.c.0.s8 %v1118
    %v1120 = vperm.slane %v1095, %v1119
    %v1121 = vrot.slane %v1120, 4
    %v1122 = vsel %vm63, %v1121, %v1115
    %v1123 = vrot.slane %v1115, 4
    %v1124 = vsel %vm63, %v1120, %v1123
    %v1126 = vunpack.c.l.s4 1934713408
    %v1127 = vunpack.c.0.s8 %v1126
    %v1128 = vperm.slane %v1122, %v1127
    %v1130 = vunpack.c.l.s4 1934713408
    %v1131 = vunpack.c.0.s8 %v1130
    %v1132 = vperm.slane %v1124, %v1131
    %v1133 = vrot.slane %v1128, 4
    %v1134 = vsel %vm63, 0, %v1133
    %v1135 = vrot.slane %v1132, 4
    %v1136 = vsel %vm63, 0, %v1135
    %v1139 = vunpack.c.l.s4 1983009808
    %v1140 = vunpack.c.0.s8 %v1139
    %v1141 = vperm.slane %v1092, %v1140
    %v1144 = vunpack.c.l.s4 1983009808
    %v1145 = vunpack.c.0.s8 %v1144
    %v1146 = vperm.slane %v1098, %v1145
    %v1147 = vrot.slane %v1146, 4
    %v1148 = vsel %vm63, %v1147, %v1141
    %v1149 = vrot.slane %v1141, 4
    %v1150 = vsel %vm63, %v1146, %v1149
    %v1152 = vunpack.c.l.s4 1934713408
    %v1153 = vunpack.c.0.s8 %v1152
    %v1154 = vperm.slane %v1148, %v1153
    %v1156 = vunpack.c.l.s4 1934713408
    %v1157 = vunpack.c.0.s8 %v1156
    %v1158 = vperm.slane %v1150, %v1157
    %v1159 = vrot.slane %v1154, 4
    %v1160 = vsel %vm63, 0, %v1159
    %v1161 = vrot.slane %v1158, 4
    %v1162 = vsel %vm63, 0, %v1161
    %v1165 = vunpack.c.l.s4 1983009808
    %v1166 = vunpack.c.0.s8 %v1165
    %v1167 = vperm.slane %v1101, %v1166
    %v1170 = vunpack.c.l.s4 1983009808
    %v1171 = vunpack.c.0.s8 %v1170
    %v1172 = vperm.slane %v1107, %v1171
    %v1173 = vrot.slane %v1172, 4
    %v1174 = vsel %vm63, %v1173, %v1167
    %v1175 = vrot.slane %v1167, 4
    %v1176 = vsel %vm63, %v1172, %v1175
    %v1178 = vunpack.c.l.s4 1934713408
    %v1179 = vunpack.c.0.s8 %v1178
    %v1180 = vperm.slane %v1174, %v1179
    %v1182 = vunpack.c.l.s4 1934713408
    %v1183 = vunpack.c.0.s8 %v1182
    %v1184 = vperm.slane %v1176, %v1183
    %v1185 = vrot.slane %v1180, 4
    %v1186 = vsel %vm63, 0, %v1185
    %v1187 = vrot.slane %v1184, 4
    %v1188 = vsel %vm63, 0, %v1187
    %v1191 = vunpack.c.l.s4 1983009808
    %v1192 = vunpack.c.0.s8 %v1191
    %v1193 = vperm.slane %v1104, %v1192
    %v1196 = vunpack.c.l.s4 1983009808
    %v1197 = vunpack.c.0.s8 %v1196
    %v1198 = vperm.slane %v1110, %v1197
    %v1199 = vrot.slane %v1198, 4
    %v1200 = vsel %vm63, %v1199, %v1193
    %v1201 = vrot.slane %v1193, 4
    %v1202 = vsel %vm63, %v1198, %v1201
    %v1204 = vunpack.c.l.s4 1934713408
    %v1205 = vunpack.c.0.s8 %v1204
    %v1206 = vperm.slane %v1200, %v1205
    %v1208 = vunpack.c.l.s4 1934713408
    %v1209 = vunpack.c.0.s8 %v1208
    %v1210 = vperm.slane %v1202, %v1209
    %v1211 = vrot.slane %v1206, 4
    %v1212 = vsel %vm63, 0, %v1211
    %v1213 = vrot.slane %v1210, 4
    %v1214 = vsel %vm63, 0, %v1213
    %v1216 = vunpack.c.l.b16 %v1154
    %v1217 = vpack.c.b16 %v1216, %v1216
    %1218 = vrot.lane.b32.xlu0 %v1217, 16
    %v1219 = vpop.permute.xlu0 %1218
    %v1221 = vunpack.c.l.b16 %v1134
    %v1222 = vpack.c.b16 %v1221, %v1221
    %1223 = vrot.lane.b32.xlu0 %v1222, 32
    %v1224 = vpop.permute.xlu0 %1223
    %v1226 = vunpack.c.l.b16 %v1160
    %v1227 = vpack.c.b16 %v1226, %v1226
    %1228 = vrot.lane.b32.xlu0 %v1227, 48
    %v1229 = vpop.permute.xlu0 %1228
    %v1231 = vunpack.c.l.b16 %v1132
    %v1232 = vpack.c.b16 %v1231, %v1231
    %1233 = vrot.lane.b32.xlu0 %v1232, 64
    %v1234 = vpop.permute.xlu0 %1233
    %v1236 = vunpack.c.l.b16 %v1158
    %v1237 = vpack.c.b16 %v1236, %v1236
    %1238 = vrot.lane.b32.xlu0 %v1237, 80
    %v1239 = vpop.permute.xlu0 %1238
    %v1241 = vunpack.c.l.b16 %v1136
    %v1242 = vpack.c.b16 %v1241, %v1241
    %1243 = vrot.lane.b32.xlu0 %v1242, 96
    %v1244 = vpop.permute.xlu0 %1243
    %v1246 = vunpack.c.l.b16 %v1162
    %v1247 = vpack.c.b16 %v1246, %v1246
    %1248 = vrot.lane.b32.xlu0 %v1247, 112
    %v1249 = vpop.permute.xlu0 %1248
    %v1251 = vunpack.c.l.b16 %v1206
    %v1252 = vpack.c.b16 %v1251, %v1251
    %1253 = vrot.lane.b32.xlu0 %v1252, 16
    %v1254 = vpop.permute.xlu0 %1253
    %v1256 = vunpack.c.l.b16 %v1186
    %v1257 = vpack.c.b16 %v1256, %v1256
    %1258 = vrot.lane.b32.xlu0 %v1257, 32
    %v1259 = vpop.permute.xlu0 %1258
    %v1261 = vunpack.c.l.b16 %v1212
    %v1262 = vpack.c.b16 %v1261, %v1261
    %1263 = vrot.lane.b32.xlu0 %v1262, 48
    %v1264 = vpop.permute.xlu0 %1263
    %v1266 = vunpack.c.l.b16 %v1184
    %v1267 = vpack.c.b16 %v1266, %v1266
    %1268 = vrot.lane.b32.xlu0 %v1267, 64
    %v1269 = vpop.permute.xlu0 %1268
    %v1271 = vunpack.c.l.b16 %v1210
    %v1272 = vpack.c.b16 %v1271, %v1271
    %1273 = vrot.lane.b32.xlu0 %v1272, 80
    %v1274 = vpop.permute.xlu0 %1273
    %v1276 = vunpack.c.l.b16 %v1188
    %v1277 = vpack.c.b16 %v1276, %v1276
    %1278 = vrot.lane.b32.xlu0 %v1277, 96
    %v1279 = vpop.permute.xlu0 %1278
    %v1281 = vunpack.c.l.b16 %v1214
    %v1282 = vpack.c.b16 %v1281, %v1281
    %1283 = vrot.lane.b32.xlu0 %v1282, 112
    %v1284 = vpop.permute.xlu0 %1283
    %v1287 = vsel %vm227, %v1128, %v1219
    %v1289 = vsel %vm231, %v1287, %v1224
    %v1291 = vsel %vm234, %v1289, %v1229
    %v1293 = vsel %vm237, %v1291, %v1234
    %v1295 = vsel %vm240, %v1293, %v1239
    %v1297 = vsel %vm243, %v1295, %v1244
    %v1299 = vsel %vm246, %v1297, %v1249
    %v1302 = vsel %vm227, %v1180, %v1254
    %v1304 = vsel %vm231, %v1302, %v1259
    %v1306 = vsel %vm234, %v1304, %v1264
    %v1308 = vsel %vm237, %v1306, %v1269
    %v1310 = vsel %vm240, %v1308, %v1274
    %v1312 = vsel %vm243, %v1310, %v1279
    %v1314 = vsel %vm246, %v1312, %v1284
    %1315 = vrot.lane.b32.xlu0 %v773, 126
    %v1316 = vpop.permute.xlu0 %1315
    %1317 = vrot.lane.b32.xlu0 %v782, 126
    %v1318 = vpop.permute.xlu0 %1317
    %1319 = vrot.lane.b32.xlu0 %v793, 126
    %v1320 = vpop.permute.xlu0 %1319
    %1321 = vrot.lane.b32.xlu0 %v802, 126
    %v1322 = vpop.permute.xlu0 %1321
    %1323 = vrot.lane.b32.xlu0 %v813, 126
    %v1324 = vpop.permute.xlu0 %1323
    %1325 = vrot.lane.b32.xlu0 %v822, 126
    %v1326 = vpop.permute.xlu0 %1325
    %1327 = vrot.lane.b32.xlu0 %v833, 126
    %v1328 = vpop.permute.xlu0 %1327
    %1329 = vrot.lane.b32.xlu0 %v842, 126
    %v1330 = vpop.permute.xlu0 %1329
    %v1333 = vpack.i.b16 %v1320, %v1316
    %v1334 = vshrl.u32 %v1316, 16
    %v1335 = vshrl.u32 %v1320, 16
    %v1336 = vpack.i.b16 %v1335, %v1334
    %v1339 = vpack.i.b16 %v1328, %v1324
    %v1340 = vshrl.u32 %v1324, 16
    %v1341 = vshrl.u32 %v1328, 16
    %v1342 = vpack.i.b16 %v1341, %v1340
    %v1345 = vpack.i.b16 %v1322, %v1318
    %v1346 = vshrl.u32 %v1318, 16
    %v1347 = vshrl.u32 %v1322, 16
    %v1348 = vpack.i.b16 %v1347, %v1346
    %v1351 = vpack.i.b16 %v1330, %v1326
    %v1352 = vshrl.u32 %v1326, 16
    %v1353 = vshrl.u32 %v1330, 16
    %v1354 = vpack.i.b16 %v1353, %v1352
    %v1357 = vunpack.c.l.s4 1983009808
    %v1358 = vunpack.c.0.s8 %v1357
    %v1359 = vperm.slane %v1333, %v1358
    %v1362 = vunpack.c.l.s4 1983009808
    %v1363 = vunpack.c.0.s8 %v1362
    %v1364 = vperm.slane %v1339, %v1363
    %v1365 = vrot.slane %v1364, 4
    %v1366 = vsel %vm63, %v1365, %v1359
    %v1367 = vrot.slane %v1359, 4
    %v1368 = vsel %vm63, %v1364, %v1367
    %v1370 = vunpack.c.l.s4 1934713408
    %v1371 = vunpack.c.0.s8 %v1370
    %v1372 = vperm.slane %v1366, %v1371
    %v1374 = vunpack.c.l.s4 1934713408
    %v1375 = vunpack.c.0.s8 %v1374
    %v1376 = vperm.slane %v1368, %v1375
    %v1377 = vrot.slane %v1372, 4
    %v1378 = vsel %vm63, 0, %v1377
    %v1379 = vrot.slane %v1376, 4
    %v1380 = vsel %vm63, 0, %v1379
    %v1383 = vunpack.c.l.s4 1983009808
    %v1384 = vunpack.c.0.s8 %v1383
    %v1385 = vperm.slane %v1336, %v1384
    %v1388 = vunpack.c.l.s4 1983009808
    %v1389 = vunpack.c.0.s8 %v1388
    %v1390 = vperm.slane %v1342, %v1389
    %v1391 = vrot.slane %v1390, 4
    %v1392 = vsel %vm63, %v1391, %v1385
    %v1393 = vrot.slane %v1385, 4
    %v1394 = vsel %vm63, %v1390, %v1393
    %v1396 = vunpack.c.l.s4 1934713408
    %v1397 = vunpack.c.0.s8 %v1396
    %v1398 = vperm.slane %v1392, %v1397
    %v1400 = vunpack.c.l.s4 1934713408
    %v1401 = vunpack.c.0.s8 %v1400
    %v1402 = vperm.slane %v1394, %v1401
    %v1403 = vrot.slane %v1398, 4
    %v1404 = vsel %vm63, 0, %v1403
    %v1405 = vrot.slane %v1402, 4
    %v1406 = vsel %vm63, 0, %v1405
    %v1409 = vunpack.c.l.s4 1983009808
    %v1410 = vunpack.c.0.s8 %v1409
    %v1411 = vperm.slane %v1345, %v1410
    %v1414 = vunpack.c.l.s4 1983009808
    %v1415 = vunpack.c.0.s8 %v1414
    %v1416 = vperm.slane %v1351, %v1415
    %v1417 = vrot.slane %v1416, 4
    %v1418 = vsel %vm63, %v1417, %v1411
    %v1419 = vrot.slane %v1411, 4
    %v1420 = vsel %vm63, %v1416, %v1419
    %v1422 = vunpack.c.l.s4 1934713408
    %v1423 = vunpack.c.0.s8 %v1422
    %v1424 = vperm.slane %v1418, %v1423
    %v1426 = vunpack.c.l.s4 1934713408
    %v1427 = vunpack.c.0.s8 %v1426
    %v1428 = vperm.slane %v1420, %v1427
    %v1429 = vrot.slane %v1424, 4
    %v1430 = vsel %vm63, 0, %v1429
    %v1431 = vrot.slane %v1428, 4
    %v1432 = vsel %vm63, 0, %v1431
    %v1435 = vunpack.c.l.s4 1983009808
    %v1436 = vunpack.c.0.s8 %v1435
    %v1437 = vperm.slane %v1348, %v1436
    %v1440 = vunpack.c.l.s4 1983009808
    %v1441 = vunpack.c.0.s8 %v1440
    %v1442 = vperm.slane %v1354, %v1441
    %v1443 = vrot.slane %v1442, 4
    %v1444 = vsel %vm63, %v1443, %v1437
    %v1445 = vrot.slane %v1437, 4
    %v1446 = vsel %vm63, %v1442, %v1445
    %v1448 = vunpack.c.l.s4 1934713408
    %v1449 = vunpack.c.0.s8 %v1448
    %v1450 = vperm.slane %v1444, %v1449
    %v1452 = vunpack.c.l.s4 1934713408
    %v1453 = vunpack.c.0.s8 %v1452
    %v1454 = vperm.slane %v1446, %v1453
    %v1455 = vrot.slane %v1450, 4
    %v1456 = vsel %vm63, 0, %v1455
    %v1457 = vrot.slane %v1454, 4
    %v1458 = vsel %vm63, 0, %v1457
    %v1460 = vunpack.c.l.b16 %v1398
    %v1461 = vpack.c.b16 %v1460, %v1460
    %1462 = vrot.lane.b32.xlu0 %v1461, 16
    %v1463 = vpop.permute.xlu0 %1462
    %v1465 = vunpack.c.l.b16 %v1378
    %v1466 = vpack.c.b16 %v1465, %v1465
    %1467 = vrot.lane.b32.xlu0 %v1466, 32
    %v1468 = vpop.permute.xlu0 %1467
    %v1470 = vunpack.c.l.b16 %v1404
    %v1471 = vpack.c.b16 %v1470, %v1470
    %1472 = vrot.lane.b32.xlu0 %v1471, 48
    %v1473 = vpop.permute.xlu0 %1472
    %v1475 = vunpack.c.l.b16 %v1376
    %v1476 = vpack.c.b16 %v1475, %v1475
    %1477 = vrot.lane.b32.xlu0 %v1476, 64
    %v1478 = vpop.permute.xlu0 %1477
    %v1480 = vunpack.c.l.b16 %v1402
    %v1481 = vpack.c.b16 %v1480, %v1480
    %1482 = vrot.lane.b32.xlu0 %v1481, 80
    %v1483 = vpop.permute.xlu0 %1482
    %v1485 = vunpack.c.l.b16 %v1380
    %v1486 = vpack.c.b16 %v1485, %v1485
    %1487 = vrot.lane.b32.xlu0 %v1486, 96
    %v1488 = vpop.permute.xlu0 %1487
    %v1490 = vunpack.c.l.b16 %v1406
    %v1491 = vpack.c.b16 %v1490, %v1490
    %1492 = vrot.lane.b32.xlu0 %v1491, 112
    %v1493 = vpop.permute.xlu0 %1492
    %v1495 = vunpack.c.l.b16 %v1450
    %v1496 = vpack.c.b16 %v1495, %v1495
    %1497 = vrot.lane.b32.xlu0 %v1496, 16
    %v1498 = vpop.permute.xlu0 %1497
    %v1500 = vunpack.c.l.b16 %v1430
    %v1501 = vpack.c.b16 %v1500, %v1500
    %1502 = vrot.lane.b32.xlu0 %v1501, 32
    %v1503 = vpop.permute.xlu0 %1502
    %v1505 = vunpack.c.l.b16 %v1456
    %v1506 = vpack.c.b16 %v1505, %v1505
    %1507 = vrot.lane.b32.xlu0 %v1506, 48
    %v1508 = vpop.permute.xlu0 %1507
    %v1510 = vunpack.c.l.b16 %v1428
    %v1511 = vpack.c.b16 %v1510, %v1510
    %1512 = vrot.lane.b32.xlu0 %v1511, 64
    %v1513 = vpop.permute.xlu0 %1512
    %v1515 = vunpack.c.l.b16 %v1454
    %v1516 = vpack.c.b16 %v1515, %v1515
    %1517 = vrot.lane.b32.xlu0 %v1516, 80
    %v1518 = vpop.permute.xlu0 %1517
    %v1520 = vunpack.c.l.b16 %v1432
    %v1521 = vpack.c.b16 %v1520, %v1520
    %1522 = vrot.lane.b32.xlu0 %v1521, 96
    %v1523 = vpop.permute.xlu0 %1522
    %v1525 = vunpack.c.l.b16 %v1458
    %v1526 = vpack.c.b16 %v1525, %v1525
    %1527 = vrot.lane.b32.xlu0 %v1526, 112
    %v1528 = vpop.permute.xlu0 %1527
    %v1531 = vsel %vm227, %v1372, %v1463
    %v1533 = vsel %vm231, %v1531, %v1468
    %v1535 = vsel %vm234, %v1533, %v1473
    %v1537 = vsel %vm237, %v1535, %v1478
    %v1539 = vsel %vm240, %v1537, %v1483
    %v1541 = vsel %vm243, %v1539, %v1488
    %v1543 = vsel %vm246, %v1541, %v1493
    %v1546 = vsel %vm227, %v1424, %v1498
    %v1548 = vsel %vm231, %v1546, %v1503
    %v1550 = vsel %vm234, %v1548, %v1508
    %v1552 = vsel %vm237, %v1550, %v1513
    %v1554 = vsel %vm240, %v1552, %v1518
    %v1556 = vsel %vm243, %v1554, %v1523
    %v1558 = vsel %vm246, %v1556, %v1528
    %vm1563 = vcmask 1042432
    %vm1564 = vcmask 1046532
    %vm1565 = vmor %vm1563, %vm1564
    %v1566 = vrot.slane %v16, 5
    %v1567 = vrot.slane %v1566, 4
    %v1568 = vrot.slane %v17, 5
    %v1569 = vsel %vm1565, %v1567, %v1568
    %v1570 = vrot.slane %v1568, 4
    %v1571 = vrot.slane %v18, 5
    %v1572 = vsel %vm1565, %v1570, %v1571
    %v1573 = vrot.slane %v19, 5
    %v1574 = vrot.slane %v1573, 4
    %v1575 = vrot.slane %v20, 5
    %v1576 = vsel %vm1565, %v1574, %v1575
    %v1577 = vrot.slane %v1575, 4
    %v1578 = vrot.slane %v21, 5
    %v1579 = vsel %vm1565, %v1577, %v1578
    %v1580 = vrot.slane %v22, 5
    %v1581 = vrot.slane %v1580, 4
    %v1582 = vrot.slane %v23, 5
    %v1583 = vsel %vm1565, %v1581, %v1582
    %v1584 = vrot.slane %v1582, 4
    %v1585 = vrot.slane %v24, 5
    %v1586 = vsel %vm1565, %v1584, %v1585
    %v1587 = vrot.slane %v25, 5
    %v1588 = vrot.slane %v1587, 4
    %v1589 = vrot.slane %v26, 5
    %v1590 = vsel %vm1565, %v1588, %v1589
    %v1591 = vrot.slane %v1589, 4
    %v1592 = vrot.slane %v27, 5
    %v1593 = vsel %vm1565, %v1591, %v1592
    %v1596 = vpack.i.b16 %v1576, %v1569
    %v1597 = vshrl.u32 %v1569, 16
    %v1598 = vshrl.u32 %v1576, 16
    %v1599 = vpack.i.b16 %v1598, %v1597
    %v1602 = vpack.i.b16 %v1590, %v1583
    %v1603 = vshrl.u32 %v1583, 16
    %v1604 = vshrl.u32 %v1590, 16
    %v1605 = vpack.i.b16 %v1604, %v1603
    %v1608 = vpack.i.b16 %v1579, %v1572
    %v1609 = vshrl.u32 %v1572, 16
    %v1610 = vshrl.u32 %v1579, 16
    %v1611 = vpack.i.b16 %v1610, %v1609
    %v1614 = vpack.i.b16 %v1593, %v1586
    %v1615 = vshrl.u32 %v1586, 16
    %v1616 = vshrl.u32 %v1593, 16
    %v1617 = vpack.i.b16 %v1616, %v1615
    %v1620 = vunpack.c.l.s4 1983009808
    %v1621 = vunpack.c.0.s8 %v1620
    %v1622 = vperm.slane %v1596, %v1621
    %v1625 = vunpack.c.l.s4 1983009808
    %v1626 = vunpack.c.0.s8 %v1625
    %v1627 = vperm.slane %v1602, %v1626
    %v1628 = vrot.slane %v1627, 4
    %v1629 = vsel %vm63, %v1628, %v1622
    %v1630 = vrot.slane %v1622, 4
    %v1631 = vsel %vm63, %v1627, %v1630
    %v1633 = vunpack.c.l.s4 1934713408
    %v1634 = vunpack.c.0.s8 %v1633
    %v1635 = vperm.slane %v1629, %v1634
    %v1637 = vunpack.c.l.s4 1934713408
    %v1638 = vunpack.c.0.s8 %v1637
    %v1639 = vperm.slane %v1631, %v1638
    %v1640 = vrot.slane %v1635, 4
    %v1641 = vsel %vm63, 0, %v1640
    %v1642 = vrot.slane %v1639, 4
    %v1643 = vsel %vm63, 0, %v1642
    %v1646 = vunpack.c.l.s4 1983009808
    %v1647 = vunpack.c.0.s8 %v1646
    %v1648 = vperm.slane %v1599, %v1647
    %v1651 = vunpack.c.l.s4 1983009808
    %v1652 = vunpack.c.0.s8 %v1651
    %v1653 = vperm.slane %v1605, %v1652
    %v1654 = vrot.slane %v1653, 4
    %v1655 = vsel %vm63, %v1654, %v1648
    %v1656 = vrot.slane %v1648, 4
    %v1657 = vsel %vm63, %v1653, %v1656
    %v1659 = vunpack.c.l.s4 1934713408
    %v1660 = vunpack.c.0.s8 %v1659
    %v1661 = vperm.slane %v1655, %v1660
    %v1663 = vunpack.c.l.s4 1934713408
    %v1664 = vunpack.c.0.s8 %v1663
    %v1665 = vperm.slane %v1657, %v1664
    %v1666 = vrot.slane %v1661, 4
    %v1667 = vsel %vm63, 0, %v1666
    %v1668 = vrot.slane %v1665, 4
    %v1669 = vsel %vm63, 0, %v1668
    %v1672 = vunpack.c.l.s4 1983009808
    %v1673 = vunpack.c.0.s8 %v1672
    %v1674 = vperm.slane %v1608, %v1673
    %v1677 = vunpack.c.l.s4 1983009808
    %v1678 = vunpack.c.0.s8 %v1677
    %v1679 = vperm.slane %v1614, %v1678
    %v1680 = vrot.slane %v1679, 4
    %v1681 = vsel %vm63, %v1680, %v1674
    %v1682 = vrot.slane %v1674, 4
    %v1683 = vsel %vm63, %v1679, %v1682
    %v1685 = vunpack.c.l.s4 1934713408
    %v1686 = vunpack.c.0.s8 %v1685
    %v1687 = vperm.slane %v1681, %v1686
    %v1689 = vunpack.c.l.s4 1934713408
    %v1690 = vunpack.c.0.s8 %v1689
    %v1691 = vperm.slane %v1683, %v1690
    %v1692 = vrot.slane %v1687, 4
    %v1693 = vsel %vm63, 0, %v1692
    %v1694 = vrot.slane %v1691, 4
    %v1695 = vsel %vm63, 0, %v1694
    %v1698 = vunpack.c.l.s4 1983009808
    %v1699 = vunpack.c.0.s8 %v1698
    %v1700 = vperm.slane %v1611, %v1699
    %v1703 = vunpack.c.l.s4 1983009808
    %v1704 = vunpack.c.0.s8 %v1703
    %v1705 = vperm.slane %v1617, %v1704
    %v1706 = vrot.slane %v1705, 4
    %v1707 = vsel %vm63, %v1706, %v1700
    %v1708 = vrot.slane %v1700, 4
    %v1709 = vsel %vm63, %v1705, %v1708
    %v1711 = vunpack.c.l.s4 1934713408
    %v1712 = vunpack.c.0.s8 %v1711
    %v1713 = vperm.slane %v1707, %v1712
    %v1715 = vunpack.c.l.s4 1934713408
    %v1716 = vunpack.c.0.s8 %v1715
    %v1717 = vperm.slane %v1709, %v1716
    %v1718 = vrot.slane %v1713, 4
    %v1719 = vsel %vm63, 0, %v1718
    %v1720 = vrot.slane %v1717, 4
    %v1721 = vsel %vm63, 0, %v1720
    %v1723 = vunpack.c.l.b16 %v1661
    %v1724 = vpack.c.b16 %v1723, %v1723
    %1725 = vrot.lane.b32.xlu0 %v1724, 16
    %v1726 = vpop.permute.xlu0 %1725
    %v1728 = vunpack.c.l.b16 %v1641
    %v1729 = vpack.c.b16 %v1728, %v1728
    %1730 = vrot.lane.b32.xlu0 %v1729, 32
    %v1731 = vpop.permute.xlu0 %1730
    %v1733 = vunpack.c.l.b16 %v1667
    %v1734 = vpack.c.b16 %v1733, %v1733
    %1735 = vrot.lane.b32.xlu0 %v1734, 48
    %v1736 = vpop.permute.xlu0 %1735
    %v1738 = vunpack.c.l.b16 %v1639
    %v1739 = vpack.c.b16 %v1738, %v1738
    %1740 = vrot.lane.b32.xlu0 %v1739, 64
    %v1741 = vpop.permute.xlu0 %1740
    %v1743 = vunpack.c.l.b16 %v1665
    %v1744 = vpack.c.b16 %v1743, %v1743
    %1745 = vrot.lane.b32.xlu0 %v1744, 80
    %v1746 = vpop.permute.xlu0 %1745
    %v1748 = vunpack.c.l.b16 %v1643
    %v1749 = vpack.c.b16 %v1748, %v1748
    %1750 = vrot.lane.b32.xlu0 %v1749, 96
    %v1751 = vpop.permute.xlu0 %1750
    %v1753 = vunpack.c.l.b16 %v1669
    %v1754 = vpack.c.b16 %v1753, %v1753
    %1755 = vrot.lane.b32.xlu0 %v1754, 112
    %v1756 = vpop.permute.xlu0 %1755
    %v1758 = vunpack.c.l.b16 %v1713
    %v1759 = vpack.c.b16 %v1758, %v1758
    %1760 = vrot.lane.b32.xlu0 %v1759, 16
    %v1761 = vpop.permute.xlu0 %1760
    %v1763 = vunpack.c.l.b16 %v1693
    %v1764 = vpack.c.b16 %v1763, %v1763
    %1765 = vrot.lane.b32.xlu0 %v1764, 32
    %v1766 = vpop.permute.xlu0 %1765
    %v1768 = vunpack.c.l.b16 %v1719
    %v1769 = vpack.c.b16 %v1768, %v1768
    %1770 = vrot.lane.b32.xlu0 %v1769, 48
    %v1771 = vpop.permute.xlu0 %1770
    %v1773 = vunpack.c.l.b16 %v1691
    %v1774 = vpack.c.b16 %v1773, %v1773
    %1775 = vrot.lane.b32.xlu0 %v1774, 64
    %v1776 = vpop.permute.xlu0 %1775
    %v1778 = vunpack.c.l.b16 %v1717
    %v1779 = vpack.c.b16 %v1778, %v1778
    %1780 = vrot.lane.b32.xlu0 %v1779, 80
    %v1781 = vpop.permute.xlu0 %1780
    %v1783 = vunpack.c.l.b16 %v1695
    %v1784 = vpack.c.b16 %v1783, %v1783
    %1785 = vrot.lane.b32.xlu0 %v1784, 96
    %v1786 = vpop.permute.xlu0 %1785
    %v1788 = vunpack.c.l.b16 %v1721
    %v1789 = vpack.c.b16 %v1788, %v1788
    %1790 = vrot.lane.b32.xlu0 %v1789, 112
    %v1791 = vpop.permute.xlu0 %1790
    %v1794 = vsel %vm227, %v1635, %v1726
    %v1796 = vsel %vm231, %v1794, %v1731
    %v1798 = vsel %vm234, %v1796, %v1736
    %v1800 = vsel %vm237, %v1798, %v1741
    %v1802 = vsel %vm240, %v1800, %v1746
    %v1804 = vsel %vm243, %v1802, %v1751
    %v1806 = vsel %vm246, %v1804, %v1756
    %v1809 = vsel %vm227, %v1687, %v1761
    %v1811 = vsel %vm231, %v1809, %v1766
    %v1813 = vsel %vm234, %v1811, %v1771
    %v1815 = vsel %vm237, %v1813, %v1776
    %v1817 = vsel %vm240, %v1815, %v1781
    %v1819 = vsel %vm243, %v1817, %v1786
    %v1821 = vsel %vm246, %v1819, %v1791
    %1822 = vrot.lane.b32.xlu0 %v1569, 127
    %v1823 = vpop.permute.xlu0 %1822
    %1824 = vrot.lane.b32.xlu0 %v1572, 127
    %v1825 = vpop.permute.xlu0 %1824
    %1826 = vrot.lane.b32.xlu0 %v1576, 127
    %v1827 = vpop.permute.xlu0 %1826
    %1828 = vrot.lane.b32.xlu0 %v1579, 127
    %v1829 = vpop.permute.xlu0 %1828
    %1830 = vrot.lane.b32.xlu0 %v1583, 127
    %v1831 = vpop.permute.xlu0 %1830
    %1832 = vrot.lane.b32.xlu0 %v1586, 127
    %v1833 = vpop.permute.xlu0 %1832
    %1834 = vrot.lane.b32.xlu0 %v1590, 127
    %v1835 = vpop.permute.xlu0 %1834
    %1836 = vrot.lane.b32.xlu0 %v1593, 127
    %v1837 = vpop.permute.xlu0 %1836
    %v1840 = vpack.i.b16 %v1827, %v1823
    %v1841 = vshrl.u32 %v1823, 16
    %v1842 = vshrl.u32 %v1827, 16
    %v1843 = vpack.i.b16 %v1842, %v1841
    %v1846 = vpack.i.b16 %v1835, %v1831
    %v1847 = vshrl.u32 %v1831, 16
    %v1848 = vshrl.u32 %v1835, 16
    %v1849 = vpack.i.b16 %v1848, %v1847
    %v1852 = vpack.i.b16 %v1829, %v1825
    %v1853 = vshrl.u32 %v1825, 16
    %v1854 = vshrl.u32 %v1829, 16
    %v1855 = vpack.i.b16 %v1854, %v1853
    %v1858 = vpack.i.b16 %v1837, %v1833
    %v1859 = vshrl.u32 %v1833, 16
    %v1860 = vshrl.u32 %v1837, 16
    %v1861 = vpack.i.b16 %v1860, %v1859
    %v1864 = vunpack.c.l.s4 1983009808
    %v1865 = vunpack.c.0.s8 %v1864
    %v1866 = vperm.slane %v1840, %v1865
    %v1869 = vunpack.c.l.s4 1983009808
    %v1870 = vunpack.c.0.s8 %v1869
    %v1871 = vperm.slane %v1846, %v1870
    %v1872 = vrot.slane %v1871, 4
    %v1873 = vsel %vm63, %v1872, %v1866
    %v1874 = vrot.slane %v1866, 4
    %v1875 = vsel %vm63, %v1871, %v1874
    %v1877 = vunpack.c.l.s4 1934713408
    %v1878 = vunpack.c.0.s8 %v1877
    %v1879 = vperm.slane %v1873, %v1878
    %v1881 = vunpack.c.l.s4 1934713408
    %v1882 = vunpack.c.0.s8 %v1881
    %v1883 = vperm.slane %v1875, %v1882
    %v1884 = vrot.slane %v1879, 4
    %v1885 = vsel %vm63, 0, %v1884
    %v1886 = vrot.slane %v1883, 4
    %v1887 = vsel %vm63, 0, %v1886
    %v1890 = vunpack.c.l.s4 1983009808
    %v1891 = vunpack.c.0.s8 %v1890
    %v1892 = vperm.slane %v1843, %v1891
    %v1895 = vunpack.c.l.s4 1983009808
    %v1896 = vunpack.c.0.s8 %v1895
    %v1897 = vperm.slane %v1849, %v1896
    %v1898 = vrot.slane %v1897, 4
    %v1899 = vsel %vm63, %v1898, %v1892
    %v1900 = vrot.slane %v1892, 4
    %v1901 = vsel %vm63, %v1897, %v1900
    %v1903 = vunpack.c.l.s4 1934713408
    %v1904 = vunpack.c.0.s8 %v1903
    %v1905 = vperm.slane %v1899, %v1904
    %v1907 = vunpack.c.l.s4 1934713408
    %v1908 = vunpack.c.0.s8 %v1907
    %v1909 = vperm.slane %v1901, %v1908
    %v1910 = vrot.slane %v1905, 4
    %v1911 = vsel %vm63, 0, %v1910
    %v1912 = vrot.slane %v1909, 4
    %v1913 = vsel %vm63, 0, %v1912
    %v1916 = vunpack.c.l.s4 1983009808
    %v1917 = vunpack.c.0.s8 %v1916
    %v1918 = vperm.slane %v1852, %v1917
    %v1921 = vunpack.c.l.s4 1983009808
    %v1922 = vunpack.c.0.s8 %v1921
    %v1923 = vperm.slane %v1858, %v1922
    %v1924 = vrot.slane %v1923, 4
    %v1925 = vsel %vm63, %v1924, %v1918
    %v1926 = vrot.slane %v1918, 4
    %v1927 = vsel %vm63, %v1923, %v1926
    %v1929 = vunpack.c.l.s4 1934713408
    %v1930 = vunpack.c.0.s8 %v1929
    %v1931 = vperm.slane %v1925, %v1930
    %v1933 = vunpack.c.l.s4 1934713408
    %v1934 = vunpack.c.0.s8 %v1933
    %v1935 = vperm.slane %v1927, %v1934
    %v1936 = vrot.slane %v1931, 4
    %v1937 = vsel %vm63, 0, %v1936
    %v1938 = vrot.slane %v1935, 4
    %v1939 = vsel %vm63, 0, %v1938
    %v1942 = vunpack.c.l.s4 1983009808
    %v1943 = vunpack.c.0.s8 %v1942
    %v1944 = vperm.slane %v1855, %v1943
    %v1947 = vunpack.c.l.s4 1983009808
    %v1948 = vunpack.c.0.s8 %v1947
    %v1949 = vperm.slane %v1861, %v1948
    %v1950 = vrot.slane %v1949, 4
    %v1951 = vsel %vm63, %v1950, %v1944
    %v1952 = vrot.slane %v1944, 4
    %v1953 = vsel %vm63, %v1949, %v1952
    %v1955 = vunpack.c.l.s4 1934713408
    %v1956 = vunpack.c.0.s8 %v1955
    %v1957 = vperm.slane %v1951, %v1956
    %v1959 = vunpack.c.l.s4 1934713408
    %v1960 = vunpack.c.0.s8 %v1959
    %v1961 = vperm.slane %v1953, %v1960
    %v1962 = vrot.slane %v1957, 4
    %v1963 = vsel %vm63, 0, %v1962
    %v1964 = vrot.slane %v1961, 4
    %v1965 = vsel %vm63, 0, %v1964
    %v1967 = vunpack.c.l.b16 %v1905
    %v1968 = vpack.c.b16 %v1967, %v1967
    %1969 = vrot.lane.b32.xlu0 %v1968, 16
    %v1970 = vpop.permute.xlu0 %1969
    %v1972 = vunpack.c.l.b16 %v1885
    %v1973 = vpack.c.b16 %v1972, %v1972
    %1974 = vrot.lane.b32.xlu0 %v1973, 32
    %v1975 = vpop.permute.xlu0 %1974
    %v1977 = vunpack.c.l.b16 %v1911
    %v1978 = vpack.c.b16 %v1977, %v1977
    %1979 = vrot.lane.b32.xlu0 %v1978, 48
    %v1980 = vpop.permute.xlu0 %1979
    %v1982 = vunpack.c.l.b16 %v1883
    %v1983 = vpack.c.b16 %v1982, %v1982
    %1984 = vrot.lane.b32.xlu0 %v1983, 64
    %v1985 = vpop.permute.xlu0 %1984
    %v1987 = vunpack.c.l.b16 %v1909
    %v1988 = vpack.c.b16 %v1987, %v1987
    %1989 = vrot.lane.b32.xlu0 %v1988, 80
    %v1990 = vpop.permute.xlu0 %1989
    %v1992 = vunpack.c.l.b16 %v1887
    %v1993 = vpack.c.b16 %v1992, %v1992
    %1994 = vrot.lane.b32.xlu0 %v1993, 96
    %v1995 = vpop.permute.xlu0 %1994
    %v1997 = vunpack.c.l.b16 %v1913
    %v1998 = vpack.c.b16 %v1997, %v1997
    %1999 = vrot.lane.b32.xlu0 %v1998, 112
    %v2000 = vpop.permute.xlu0 %1999
    %v2002 = vunpack.c.l.b16 %v1957
    %v2003 = vpack.c.b16 %v2002, %v2002
    %2004 = vrot.lane.b32.xlu0 %v2003, 16
    %v2005 = vpop.permute.xlu0 %2004
    %v2007 = vunpack.c.l.b16 %v1937
    %v2008 = vpack.c.b16 %v2007, %v2007
    %2009 = vrot.lane.b32.xlu0 %v2008, 32
    %v2010 = vpop.permute.xlu0 %2009
    %v2012 = vunpack.c.l.b16 %v1963
    %v2013 = vpack.c.b16 %v2012, %v2012
    %2014 = vrot.lane.b32.xlu0 %v2013, 48
    %v2015 = vpop.permute.xlu0 %2014
    %v2017 = vunpack.c.l.b16 %v1935
    %v2018 = vpack.c.b16 %v2017, %v2017
    %2019 = vrot.lane.b32.xlu0 %v2018, 64
    %v2020 = vpop.permute.xlu0 %2019
    %v2022 = vunpack.c.l.b16 %v1961
    %v2023 = vpack.c.b16 %v2022, %v2022
    %2024 = vrot.lane.b32.xlu0 %v2023, 80
    %v2025 = vpop.permute.xlu0 %2024
    %v2027 = vunpack.c.l.b16 %v1939
    %v2028 = vpack.c.b16 %v2027, %v2027
    %2029 = vrot.lane.b32.xlu0 %v2028, 96
    %v2030 = vpop.permute.xlu0 %2029
    %v2032 = vunpack.c.l.b16 %v1965
    %v2033 = vpack.c.b16 %v2032, %v2032
    %2034 = vrot.lane.b32.xlu0 %v2033, 112
    %v2035 = vpop.permute.xlu0 %2034
    %v2038 = vsel %vm227, %v1879, %v1970
    %v2040 = vsel %vm231, %v2038, %v1975
    %v2042 = vsel %vm234, %v2040, %v1980
    %v2044 = vsel %vm237, %v2042, %v1985
    %v2046 = vsel %vm240, %v2044, %v1990
    %v2048 = vsel %vm243, %v2046, %v1995
    %v2050 = vsel %vm246, %v2048, %v2000
    %v2053 = vsel %vm227, %v1931, %v2005
    %v2055 = vsel %vm231, %v2053, %v2010
    %v2057 = vsel %vm234, %v2055, %v2015
    %v2059 = vsel %vm237, %v2057, %v2020
    %v2061 = vsel %vm240, %v2059, %v2025
    %v2063 = vsel %vm243, %v2061, %v2030
    %v2065 = vsel %vm246, %v2063, %v2035
    %2066 = vrot.lane.b32.xlu0 %v1569, 126
    %v2067 = vpop.permute.xlu0 %2066
    %2068 = vrot.lane.b32.xlu0 %v1572, 126
    %v2069 = vpop.permute.xlu0 %2068
    %2070 = vrot.lane.b32.xlu0 %v1576, 126
    %v2071 = vpop.permute.xlu0 %2070
    %2072 = vrot.lane.b32.xlu0 %v1579, 126
    %v2073 = vpop.permute.xlu0 %2072
    %2074 = vrot.lane.b32.xlu0 %v1583, 126
    %v2075 = vpop.permute.xlu0 %2074
    %2076 = vrot.lane.b32.xlu0 %v1586, 126
    %v2077 = vpop.permute.xlu0 %2076
    %2078 = vrot.lane.b32.xlu0 %v1590, 126
    %v2079 = vpop.permute.xlu0 %2078
    %2080 = vrot.lane.b32.xlu0 %v1593, 126
    %v2081 = vpop.permute.xlu0 %2080
    %v2084 = vpack.i.b16 %v2071, %v2067
    %v2085 = vshrl.u32 %v2067, 16
    %v2086 = vshrl.u32 %v2071, 16
    %v2087 = vpack.i.b16 %v2086, %v2085
    %v2090 = vpack.i.b16 %v2079, %v2075
    %v2091 = vshrl.u32 %v2075, 16
    %v2092 = vshrl.u32 %v2079, 16
    %v2093 = vpack.i.b16 %v2092, %v2091
    %v2096 = vpack.i.b16 %v2073, %v2069
    %v2097 = vshrl.u32 %v2069, 16
    %v2098 = vshrl.u32 %v2073, 16
    %v2099 = vpack.i.b16 %v2098, %v2097
    %v2102 = vpack.i.b16 %v2081, %v2077
    %v2103 = vshrl.u32 %v2077, 16
    %v2104 = vshrl.u32 %v2081, 16
    %v2105 = vpack.i.b16 %v2104, %v2103
    %v2108 = vunpack.c.l.s4 1983009808
    %v2109 = vunpack.c.0.s8 %v2108
    %v2110 = vperm.slane %v2084, %v2109
    %v2113 = vunpack.c.l.s4 1983009808
    %v2114 = vunpack.c.0.s8 %v2113
    %v2115 = vperm.slane %v2090, %v2114
    %v2116 = vrot.slane %v2115, 4
    %v2117 = vsel %vm63, %v2116, %v2110
    %v2118 = vrot.slane %v2110, 4
    %v2119 = vsel %vm63, %v2115, %v2118
    %v2121 = vunpack.c.l.s4 1934713408
    %v2122 = vunpack.c.0.s8 %v2121
    %v2123 = vperm.slane %v2117, %v2122
    %v2125 = vunpack.c.l.s4 1934713408
    %v2126 = vunpack.c.0.s8 %v2125
    %v2127 = vperm.slane %v2119, %v2126
    %v2128 = vrot.slane %v2123, 4
    %v2129 = vsel %vm63, 0, %v2128
    %v2130 = vrot.slane %v2127, 4
    %v2131 = vsel %vm63, 0, %v2130
    %v2134 = vunpack.c.l.s4 1983009808
    %v2135 = vunpack.c.0.s8 %v2134
    %v2136 = vperm.slane %v2087, %v2135
    %v2139 = vunpack.c.l.s4 1983009808
    %v2140 = vunpack.c.0.s8 %v2139
    %v2141 = vperm.slane %v2093, %v2140
    %v2142 = vrot.slane %v2141, 4
    %v2143 = vsel %vm63, %v2142, %v2136
    %v2144 = vrot.slane %v2136, 4
    %v2145 = vsel %vm63, %v2141, %v2144
    %v2147 = vunpack.c.l.s4 1934713408
    %v2148 = vunpack.c.0.s8 %v2147
    %v2149 = vperm.slane %v2143, %v2148
    %v2151 = vunpack.c.l.s4 1934713408
    %v2152 = vunpack.c.0.s8 %v2151
    %v2153 = vperm.slane %v2145, %v2152
    %v2154 = vrot.slane %v2149, 4
    %v2155 = vsel %vm63, 0, %v2154
    %v2156 = vrot.slane %v2153, 4
    %v2157 = vsel %vm63, 0, %v2156
    %v2160 = vunpack.c.l.s4 1983009808
    %v2161 = vunpack.c.0.s8 %v2160
    %v2162 = vperm.slane %v2096, %v2161
    %v2165 = vunpack.c.l.s4 1983009808
    %v2166 = vunpack.c.0.s8 %v2165
    %v2167 = vperm.slane %v2102, %v2166
    %v2168 = vrot.slane %v2167, 4
    %v2169 = vsel %vm63, %v2168, %v2162
    %v2170 = vrot.slane %v2162, 4
    %v2171 = vsel %vm63, %v2167, %v2170
    %v2173 = vunpack.c.l.s4 1934713408
    %v2174 = vunpack.c.0.s8 %v2173
    %v2175 = vperm.slane %v2169, %v2174
    %v2177 = vunpack.c.l.s4 1934713408
    %v2178 = vunpack.c.0.s8 %v2177
    %v2179 = vperm.slane %v2171, %v2178
    %v2180 = vrot.slane %v2175, 4
    %v2181 = vsel %vm63, 0, %v2180
    %v2182 = vrot.slane %v2179, 4
    %v2183 = vsel %vm63, 0, %v2182
    %v2186 = vunpack.c.l.s4 1983009808
    %v2187 = vunpack.c.0.s8 %v2186
    %v2188 = vperm.slane %v2099, %v2187
    %v2191 = vunpack.c.l.s4 1983009808
    %v2192 = vunpack.c.0.s8 %v2191
    %v2193 = vperm.slane %v2105, %v2192
    %v2194 = vrot.slane %v2193, 4
    %v2195 = vsel %vm63, %v2194, %v2188
    %v2196 = vrot.slane %v2188, 4
    %v2197 = vsel %vm63, %v2193, %v2196
    %v2199 = vunpack.c.l.s4 1934713408
    %v2200 = vunpack.c.0.s8 %v2199
    %v2201 = vperm.slane %v2195, %v2200
    %v2203 = vunpack.c.l.s4 1934713408
    %v2204 = vunpack.c.0.s8 %v2203
    %v2205 = vperm.slane %v2197, %v2204
    %v2206 = vrot.slane %v2201, 4
    %v2207 = vsel %vm63, 0, %v2206
    %v2208 = vrot.slane %v2205, 4
    %v2209 = vsel %vm63, 0, %v2208
    %v2211 = vunpack.c.l.b16 %v2149
    %v2212 = vpack.c.b16 %v2211, %v2211
    %2213 = vrot.lane.b32.xlu0 %v2212, 16
    %v2214 = vpop.permute.xlu0 %2213
    %v2216 = vunpack.c.l.b16 %v2129
    %v2217 = vpack.c.b16 %v2216, %v2216
    %2218 = vrot.lane.b32.xlu0 %v2217, 32
    %v2219 = vpop.permute.xlu0 %2218
    %v2221 = vunpack.c.l.b16 %v2155
    %v2222 = vpack.c.b16 %v2221, %v2221
    %2223 = vrot.lane.b32.xlu0 %v2222, 48
    %v2224 = vpop.permute.xlu0 %2223
    %v2226 = vunpack.c.l.b16 %v2127
    %v2227 = vpack.c.b16 %v2226, %v2226
    %2228 = vrot.lane.b32.xlu0 %v2227, 64
    %v2229 = vpop.permute.xlu0 %2228
    %v2231 = vunpack.c.l.b16 %v2153
    %v2232 = vpack.c.b16 %v2231, %v2231
    %2233 = vrot.lane.b32.xlu0 %v2232, 80
    %v2234 = vpop.permute.xlu0 %2233
    %v2236 = vunpack.c.l.b16 %v2131
    %v2237 = vpack.c.b16 %v2236, %v2236
    %2238 = vrot.lane.b32.xlu0 %v2237, 96
    %v2239 = vpop.permute.xlu0 %2238
    %v2241 = vunpack.c.l.b16 %v2157
    %v2242 = vpack.c.b16 %v2241, %v2241
    %2243 = vrot.lane.b32.xlu0 %v2242, 112
    %v2244 = vpop.permute.xlu0 %2243
    %v2246 = vunpack.c.l.b16 %v2201
    %v2247 = vpack.c.b16 %v2246, %v2246
    %2248 = vrot.lane.b32.xlu0 %v2247, 16
    %v2249 = vpop.permute.xlu0 %2248
    %v2251 = vunpack.c.l.b16 %v2181
    %v2252 = vpack.c.b16 %v2251, %v2251
    %2253 = vrot.lane.b32.xlu0 %v2252, 32
    %v2254 = vpop.permute.xlu0 %2253
    %v2256 = vunpack.c.l.b16 %v2207
    %v2257 = vpack.c.b16 %v2256, %v2256
    %2258 = vrot.lane.b32.xlu0 %v2257, 48
    %v2259 = vpop.permute.xlu0 %2258
    %v2261 = vunpack.c.l.b16 %v2179
    %v2262 = vpack.c.b16 %v2261, %v2261
    %2263 = vrot.lane.b32.xlu0 %v2262, 64
    %v2264 = vpop.permute.xlu0 %2263
    %v2266 = vunpack.c.l.b16 %v2205
    %v2267 = vpack.c.b16 %v2266, %v2266
    %2268 = vrot.lane.b32.xlu0 %v2267, 80
    %v2269 = vpop.permute.xlu0 %2268
    %v2271 = vunpack.c.l.b16 %v2183
    %v2272 = vpack.c.b16 %v2271, %v2271
    %2273 = vrot.lane.b32.xlu0 %v2272, 96
    %v2274 = vpop.permute.xlu0 %2273
    %v2276 = vunpack.c.l.b16 %v2209
    %v2277 = vpack.c.b16 %v2276, %v2276
    %2278 = vrot.lane.b32.xlu0 %v2277, 112
    %v2279 = vpop.permute.xlu0 %2278
    %v2282 = vsel %vm227, %v2123, %v2214
    %v2284 = vsel %vm231, %v2282, %v2219
    %v2286 = vsel %vm234, %v2284, %v2224
    %v2288 = vsel %vm237, %v2286, %v2229
    %v2290 = vsel %vm240, %v2288, %v2234
    %v2292 = vsel %vm243, %v2290, %v2239
    %v2294 = vsel %vm246, %v2292, %v2244
    %v2297 = vsel %vm227, %v2175, %v2249
    %v2299 = vsel %vm231, %v2297, %v2254
    %v2301 = vsel %vm234, %v2299, %v2259
    %v2303 = vsel %vm237, %v2301, %v2264
    %v2305 = vsel %vm240, %v2303, %v2269
    %v2307 = vsel %vm243, %v2305, %v2274
    %v2309 = vsel %vm246, %v2307, %v2279
    %v2310 = vld [vmem:[%s1] sm:$0xf]
    %s2311 = scalar_lea.vmem %s1, 4
    %v2312 = vld [vmem:[%s2311] sm:$0xf]
    %vm2313 = vcmask 31744
    %v2315 = vsel %vm2313, %v2312, 0
    %vm2317 = vcmask 1041408
    %v2318 = vsel %vm2317, %v500, 0
    %v2320 = vsel %vm2317, %v515, 0
    %2322 = vmatpush.bf16.msra.mxu0 0
    %2323 = vmatpush.bf16.msra.mxu0 0
    %2324 = vmatpush.bf16.msra.mxu0 0
    %2325 = vmatpush.bf16.msra.mxu0 0
    %2326 = vmatpush.bf16.msra.mxu0 0
    %2327 = vmatpush.bf16.msra.mxu0 0
    %2328 = vmatpush.bf16.msra.mxu0 0
    %2329 = vmatpush.bf16.msra.mxu0 %v2318
    %2330 = vmatmul.bf16.gmra.mxu0 %v2315
    %v2331 = vpop.f32.mrf.mxu0
    %v2332 = vadd.f32 0.0, %v2331
    %v2333 = vpop.f32.mrf.mxu0
    %2334 = vdwg.mxu0
    %2335 = vmatpush.bf16.msra.mxu0 0
    %2336 = vmatpush.bf16.msra.mxu0 0
    %2337 = vmatpush.bf16.msra.mxu0 0
    %2338 = vmatpush.bf16.msra.mxu0 0
    %2339 = vmatpush.bf16.msra.mxu0 0
    %2340 = vmatpush.bf16.msra.mxu0 0
    %2341 = vmatpush.bf16.msra.mxu0 0
    %2342 = vmatpush.bf16.msra.mxu0 %v2320
    %2343 = vmatmul.bf16.gmra.mxu0 %v2315
    %v2344 = vpop.f32.mrf.mxu0
    %v2345 = vadd.f32 0.0, %v2344
    %v2346 = vpop.f32.mrf.mxu0
    %2347 = vdwg.mxu0
    %v2349 = vsel %vm2313, %v2310, 0
    %v2351 = vsel %vm2317, %v248, 0
    %v2353 = vsel %vm2317, %v263, 0
    %2355 = vmatpush.bf16.msra.mxu0 0
    %2356 = vmatpush.bf16.msra.mxu0 0
    %2357 = vmatpush.bf16.msra.mxu0 0
    %2358 = vmatpush.bf16.msra.mxu0 0
    %2359 = vmatpush.bf16.msra.mxu0 0
    %2360 = vmatpush.bf16.msra.mxu0 0
    %2361 = vmatpush.bf16.msra.mxu0 0
    %2362 = vmatpush.bf16.msra.mxu0 %v2351
    %2363 = vmatmul.bf16.gmra.mxu0 %v2349
    %v2364 = vpop.f32.mrf.mxu0
    %v2365 = vadd.f32 %v2332, %v2364
    %v2366 = vpop.f32.mrf.mxu0
    %2367 = vdwg.mxu0
    %2368 = vmatpush.bf16.msra.mxu0 0
    %2369 = vmatpush.bf16.msra.mxu0 0
    %2370 = vmatpush.bf16.msra.mxu0 0
    %2371 = vmatpush.bf16.msra.mxu0 0
    %2372 = vmatpush.bf16.msra.mxu0 0
    %2373 = vmatpush.bf16.msra.mxu0 0
    %2374 = vmatpush.bf16.msra.mxu0 0
    %2375 = vmatpush.bf16.msra.mxu0 %v2353
    %2376 = vmatmul.bf16.gmra.mxu0 %v2349
    %v2377 = vpop.f32.mrf.mxu0
    %v2378 = vadd.f32 %v2345, %v2377
    %v2379 = vpop.f32.mrf.mxu0
    %2380 = vdwg.mxu0
    %s2381 = scalar_lea.vmem %s1, 8
    %v2382 = vld [vmem:[%s2381] sm:$0xf]
    %v2384 = vsel %vm2313, %v2382, 0
    %v2386 = vsel %vm2317, %v1055, 0
    %v2388 = vsel %vm2317, %v1070, 0
    %2390 = vmatpush.bf16.msra.mxu0 0
    %2391 = vmatpush.bf16.msra.mxu0 0
    %2392 = vmatpush.bf16.msra.mxu0 0
    %2393 = vmatpush.bf16.msra.mxu0 0
    %2394 = vmatpush.bf16.msra.mxu0 0
    %2395 = vmatpush.bf16.msra.mxu0 0
    %2396 = vmatpush.bf16.msra.mxu0 0
    %2397 = vmatpush.bf16.msra.mxu0 %v2386
    %2398 = vmatmul.bf16.gmra.mxu0 %v2384
    %v2399 = vpop.f32.mrf.mxu0
    %v2400 = vadd.f32 0.0, %v2399
    %v2401 = vpop.f32.mrf.mxu0
    %2402 = vdwg.mxu0
    %2403 = vmatpush.bf16.msra.mxu0 0
    %2404 = vmatpush.bf16.msra.mxu0 0
    %2405 = vmatpush.bf16.msra.mxu0 0
    %2406 = vmatpush.bf16.msra.mxu0 0
    %2407 = vmatpush.bf16.msra.mxu0 0
    %2408 = vmatpush.bf16.msra.mxu0 0
    %2409 = vmatpush.bf16.msra.mxu0 0
    %2410 = vmatpush.bf16.msra.mxu0 %v2388
    %2411 = vmatmul.bf16.gmra.mxu0 %v2384
    %v2412 = vpop.f32.mrf.mxu0
    %v2413 = vadd.f32 0.0, %v2412
    %v2414 = vpop.f32.mrf.mxu0
    %2415 = vdwg.mxu0
    %v2416 = vadd.f32 %v2365, %v2400
    %v2417 = vadd.f32 %v2378, %v2413
    %s2418 = scalar_lea.vmem %s1, 12
    %v2419 = vld [vmem:[%s2418] sm:$0xf]
    %v2421 = vsel %vm2313, %v2419, 0
    %v2423 = vsel %vm2317, %v1299, 0
    %v2425 = vsel %vm2317, %v1314, 0
    %2427 = vmatpush.bf16.msra.mxu0 0
    %2428 = vmatpush.bf16.msra.mxu0 0
    %2429 = vmatpush.bf16.msra.mxu0 0
    %2430 = vmatpush.bf16.msra.mxu0 0
    %2431 = vmatpush.bf16.msra.mxu0 0
    %2432 = vmatpush.bf16.msra.mxu0 0
    %2433 = vmatpush.bf16.msra.mxu0 0
    %2434 = vmatpush.bf16.msra.mxu0 %v2423
    %2435 = vmatmul.bf16.gmra.mxu0 %v2421
    %v2436 = vpop.f32.mrf.mxu0
    %v2437 = vadd.f32 0.0, %v2436
    %v2438 = vpop.f32.mrf.mxu0
    %2439 = vdwg.mxu0
    %2440 = vmatpush.bf16.msra.mxu0 0
    %2441 = vmatpush.bf16.msra.mxu0 0
    %2442 = vmatpush.bf16.msra.mxu0 0
    %2443 = vmatpush.bf16.msra.mxu0 0
    %2444 = vmatpush.bf16.msra.mxu0 0
    %2445 = vmatpush.bf16.msra.mxu0 0
    %2446 = vmatpush.bf16.msra.mxu0 0
    %2447 = vmatpush.bf16.msra.mxu0 %v2425
    %2448 = vmatmul.bf16.gmra.mxu0 %v2421
    %v2449 = vpop.f32.mrf.mxu0
    %v2450 = vadd.f32 0.0, %v2449
    %v2451 = vpop.f32.mrf.mxu0
    %2452 = vdwg.mxu0
    %v2453 = vadd.f32 %v2416, %v2437
    %v2454 = vadd.f32 %v2417, %v2450
    %v2455 = vpack.c.bf16 %v2454, %v2453
    %2456 = vst [vmem:[#allocation2] sm:$0xff] %v2455
    %s2457 = scalar_lea.vmem %s1, 16
    %v2458 = vld [vmem:[%s2457] sm:$0xf]
    %s2459 = scalar_lea.vmem %s1, 20
    %v2460 = vld [vmem:[%s2459] sm:$0xf]
    %v2462 = vsel %vm2313, %v2460, 0
    %v2464 = vsel %vm2317, %v744, 0
    %v2466 = vsel %vm2317, %v759, 0
    %2468 = vmatpush.bf16.msra.mxu0 0
    %2469 = vmatpush.bf16.msra.mxu0 0
    %2470 = vmatpush.bf16.msra.mxu0 0
    %2471 = vmatpush.bf16.msra.mxu0 0
    %2472 = vmatpush.bf16.msra.mxu0 0
    %2473 = vmatpush.bf16.msra.mxu0 0
    %2474 = vmatpush.bf16.msra.mxu0 0
    %2475 = vmatpush.bf16.msra.mxu0 %v2464
    %2476 = vmatmul.bf16.gmra.mxu0 %v2462
    %v2477 = vpop.f32.mrf.mxu0
    %v2478 = vadd.f32 0.0, %v2477
    %v2479 = vpop.f32.mrf.mxu0
    %2480 = vdwg.mxu0
    %2481 = vmatpush.bf16.msra.mxu0 0
    %2482 = vmatpush.bf16.msra.mxu0 0
    %2483 = vmatpush.bf16.msra.mxu0 0
    %2484 = vmatpush.bf16.msra.mxu0 0
    %2485 = vmatpush.bf16.msra.mxu0 0
    %2486 = vmatpush.bf16.msra.mxu0 0
    %2487 = vmatpush.bf16.msra.mxu0 0
    %2488 = vmatpush.bf16.msra.mxu0 %v2466
    %2489 = vmatmul.bf16.gmra.mxu0 %v2462
    %v2490 = vpop.f32.mrf.mxu0
    %v2491 = vadd.f32 0.0, %v2490
    %v2492 = vpop.f32.mrf.mxu0
    %2493 = vdwg.mxu0
    %v2495 = vsel %vm2313, %v2458, 0
    %2497 = vmatpush.bf16.msra.mxu0 0
    %2498 = vmatpush.bf16.msra.mxu0 0
    %2499 = vmatpush.bf16.msra.mxu0 0
    %2500 = vmatpush.bf16.msra.mxu0 0
    %2501 = vmatpush.bf16.msra.mxu0 0
    %2502 = vmatpush.bf16.msra.mxu0 0
    %2503 = vmatpush.bf16.msra.mxu0 0
    %2504 = vmatpush.bf16.msra.mxu0 %v2318
    %2505 = vmatmul.bf16.gmra.mxu0 %v2495
    %v2506 = vpop.f32.mrf.mxu0
    %v2507 = vadd.f32 %v2478, %v2506
    %v2508 = vpop.f32.mrf.mxu0
    %2509 = vdwg.mxu0
    %2510 = vmatpush.bf16.msra.mxu0 0
    %2511 = vmatpush.bf16.msra.mxu0 0
    %2512 = vmatpush.bf16.msra.mxu0 0
    %2513 = vmatpush.bf16.msra.mxu0 0
    %2514 = vmatpush.bf16.msra.mxu0 0
    %2515 = vmatpush.bf16.msra.mxu0 0
    %2516 = vmatpush.bf16.msra.mxu0 0
    %2517 = vmatpush.bf16.msra.mxu0 %v2320
    %2518 = vmatmul.bf16.gmra.mxu0 %v2495
    %v2519 = vpop.f32.mrf.mxu0
    %v2520 = vadd.f32 %v2491, %v2519
    %v2521 = vpop.f32.mrf.mxu0
    %2522 = vdwg.mxu0
    %s2523 = scalar_lea.vmem %s1, 24
    %v2524 = vld [vmem:[%s2523] sm:$0xf]
    %v2526 = vsel %vm2313, %v2524, 0
    %2528 = vmatpush.bf16.msra.mxu0 0
    %2529 = vmatpush.bf16.msra.mxu0 0
    %2530 = vmatpush.bf16.msra.mxu0 0
    %2531 = vmatpush.bf16.msra.mxu0 0
    %2532 = vmatpush.bf16.msra.mxu0 0
    %2533 = vmatpush.bf16.msra.mxu0 0
    %2534 = vmatpush.bf16.msra.mxu0 0
    %2535 = vmatpush.bf16.msra.mxu0 %v2423
    %2536 = vmatmul.bf16.gmra.mxu0 %v2526
    %v2537 = vpop.f32.mrf.mxu0
    %v2538 = vadd.f32 0.0, %v2537
    %v2539 = vpop.f32.mrf.mxu0
    %2540 = vdwg.mxu0
    %2541 = vmatpush.bf16.msra.mxu0 0
    %2542 = vmatpush.bf16.msra.mxu0 0
    %2543 = vmatpush.bf16.msra.mxu0 0
    %2544 = vmatpush.bf16.msra.mxu0 0
    %2545 = vmatpush.bf16.msra.mxu0 0
    %2546 = vmatpush.bf16.msra.mxu0 0
    %2547 = vmatpush.bf16.msra.mxu0 0
    %2548 = vmatpush.bf16.msra.mxu0 %v2425
    %2549 = vmatmul.bf16.gmra.mxu0 %v2526
    %v2550 = vpop.f32.mrf.mxu0
    %v2551 = vadd.f32 0.0, %v2550
    %v2552 = vpop.f32.mrf.mxu0
    %2553 = vdwg.mxu0
    %v2554 = vadd.f32 %v2507, %v2538
    %v2555 = vadd.f32 %v2520, %v2551
    %s2556 = scalar_lea.vmem %s1, 28
    %v2557 = vld [vmem:[%s2556] sm:$0xf]
    %v2559 = vsel %vm2313, %v2557, 0
    %v2561 = vsel %vm2317, %v1543, 0
    %v2563 = vsel %vm2317, %v1558, 0
    %2565 = vmatpush.bf16.msra.mxu0 0
    %2566 = vmatpush.bf16.msra.mxu0 0
    %2567 = vmatpush.bf16.msra.mxu0 0
    %2568 = vmatpush.bf16.msra.mxu0 0
    %2569 = vmatpush.bf16.msra.mxu0 0
    %2570 = vmatpush.bf16.msra.mxu0 0
    %2571 = vmatpush.bf16.msra.mxu0 0
    %2572 = vmatpush.bf16.msra.mxu0 %v2561
    %2573 = vmatmul.bf16.gmra.mxu0 %v2559
    %v2574 = vpop.f32.mrf.mxu0
    %v2575 = vadd.f32 0.0, %v2574
    %v2576 = vpop.f32.mrf.mxu0
    %2577 = vdwg.mxu0
    %2578 = vmatpush.bf16.msra.mxu0 0
    %2579 = vmatpush.bf16.msra.mxu0 0
    %2580 = vmatpush.bf16.msra.mxu0 0
    %2581 = vmatpush.bf16.msra.mxu0 0
    %2582 = vmatpush.bf16.msra.mxu0 0
    %2583 = vmatpush.bf16.msra.mxu0 0
    %2584 = vmatpush.bf16.msra.mxu0 0
    %2585 = vmatpush.bf16.msra.mxu0 %v2563
    %2586 = vmatmul.bf16.gmra.mxu0 %v2559
    %v2587 = vpop.f32.mrf.mxu0
    %v2588 = vadd.f32 0.0, %v2587
    %v2589 = vpop.f32.mrf.mxu0
    %2590 = vdwg.mxu0
    %v2591 = vadd.f32 %v2554, %v2575
    %v2592 = vadd.f32 %v2555, %v2588
    %v2593 = vpack.c.bf16 %v2592, %v2591
    %s2594 = scalar_lea.vmem [#allocation2], 8
    %2595 = vst [vmem:[%s2594] sm:$0xff] %v2593
    %s2596 = scalar_lea.vmem %s1, 32
    %v2597 = vld [vmem:[%s2596] sm:$0xf]
    %s2598 = scalar_lea.vmem %s1, 36
    %v2599 = vld [vmem:[%s2598] sm:$0xf]
    %v2601 = vsel %vm2313, %v2599, 0
    %2603 = vmatpush.bf16.msra.mxu0 0
    %2604 = vmatpush.bf16.msra.mxu0 0
    %2605 = vmatpush.bf16.msra.mxu0 0
    %2606 = vmatpush.bf16.msra.mxu0 0
    %2607 = vmatpush.bf16.msra.mxu0 0
    %2608 = vmatpush.bf16.msra.mxu0 0
    %2609 = vmatpush.bf16.msra.mxu0 0
    %2610 = vmatpush.bf16.msra.mxu0 %v2423
    %2611 = vmatmul.bf16.gmra.mxu0 %v2601
    %v2612 = vpop.f32.mrf.mxu0
    %v2613 = vadd.f32 0.0, %v2612
    %v2614 = vpop.f32.mrf.mxu0
    %2615 = vdwg.mxu0
    %2616 = vmatpush.bf16.msra.mxu0 0
    %2617 = vmatpush.bf16.msra.mxu0 0
    %2618 = vmatpush.bf16.msra.mxu0 0
    %2619 = vmatpush.bf16.msra.mxu0 0
    %2620 = vmatpush.bf16.msra.mxu0 0
    %2621 = vmatpush.bf16.msra.mxu0 0
    %2622 = vmatpush.bf16.msra.mxu0 0
    %2623 = vmatpush.bf16.msra.mxu0 %v2425
    %2624 = vmatmul.bf16.gmra.mxu0 %v2601
    %v2625 = vpop.f32.mrf.mxu0
    %v2626 = vadd.f32 0.0, %v2625
    %v2627 = vpop.f32.mrf.mxu0
    %2628 = vdwg.mxu0
    %v2630 = vsel %vm2313, %v2597, 0
    %2632 = vmatpush.bf16.msra.mxu0 0
    %2633 = vmatpush.bf16.msra.mxu0 0
    %2634 = vmatpush.bf16.msra.mxu0 0
    %2635 = vmatpush.bf16.msra.mxu0 0
    %2636 = vmatpush.bf16.msra.mxu0 0
    %2637 = vmatpush.bf16.msra.mxu0 0
    %2638 = vmatpush.bf16.msra.mxu0 0
    %2639 = vmatpush.bf16.msra.mxu0 %v2386
    %2640 = vmatmul.bf16.gmra.mxu0 %v2630
    %v2641 = vpop.f32.mrf.mxu0
    %v2642 = vadd.f32 %v2613, %v2641
    %v2643 = vpop.f32.mrf.mxu0
    %2644 = vdwg.mxu0
    %2645 = vmatpush.bf16.msra.mxu0 0
    %2646 = vmatpush.bf16.msra.mxu0 0
    %2647 = vmatpush.bf16.msra.mxu0 0
    %2648 = vmatpush.bf16.msra.mxu0 0
    %2649 = vmatpush.bf16.msra.mxu0 0
    %2650 = vmatpush.bf16.msra.mxu0 0
    %2651 = vmatpush.bf16.msra.mxu0 0
    %2652 = vmatpush.bf16.msra.mxu0 %v2388
    %2653 = vmatmul.bf16.gmra.mxu0 %v2630
    %v2654 = vpop.f32.mrf.mxu0
    %v2655 = vadd.f32 %v2626, %v2654
    %v2656 = vpop.f32.mrf.mxu0
    %2657 = vdwg.mxu0
    %s2658 = scalar_lea.vmem %s1, 40
    %v2659 = vld [vmem:[%s2658] sm:$0xf]
    %v2661 = vsel %vm2313, %v2659, 0
    %v2663 = vsel %vm2317, %v1806, 0
    %v2665 = vsel %vm2317, %v1821, 0
    %2667 = vmatpush.bf16.msra.mxu0 0
    %2668 = vmatpush.bf16.msra.mxu0 0
    %2669 = vmatpush.bf16.msra.mxu0 0
    %2670 = vmatpush.bf16.msra.mxu0 0
    %2671 = vmatpush.bf16.msra.mxu0 0
    %2672 = vmatpush.bf16.msra.mxu0 0
    %2673 = vmatpush.bf16.msra.mxu0 0
    %2674 = vmatpush.bf16.msra.mxu0 %v2663
    %2675 = vmatmul.bf16.gmra.mxu0 %v2661
    %v2676 = vpop.f32.mrf.mxu0
    %v2677 = vadd.f32 0.0, %v2676
    %v2678 = vpop.f32.mrf.mxu0
    %2679 = vdwg.mxu0
    %2680 = vmatpush.bf16.msra.mxu0 0
    %2681 = vmatpush.bf16.msra.mxu0 0
    %2682 = vmatpush.bf16.msra.mxu0 0
    %2683 = vmatpush.bf16.msra.mxu0 0
    %2684 = vmatpush.bf16.msra.mxu0 0
    %2685 = vmatpush.bf16.msra.mxu0 0
    %2686 = vmatpush.bf16.msra.mxu0 0
    %2687 = vmatpush.bf16.msra.mxu0 %v2665
    %2688 = vmatmul.bf16.gmra.mxu0 %v2661
    %v2689 = vpop.f32.mrf.mxu0
    %v2690 = vadd.f32 0.0, %v2689
    %v2691 = vpop.f32.mrf.mxu0
    %2692 = vdwg.mxu0
    %v2693 = vadd.f32 %v2642, %v2677
    %v2694 = vadd.f32 %v2655, %v2690
    %s2695 = scalar_lea.vmem %s1, 44
    %v2696 = vld [vmem:[%s2695] sm:$0xf]
    %v2698 = vsel %vm2313, %v2696, 0
    %v2700 = vsel %vm2317, %v2050, 0
    %v2702 = vsel %vm2317, %v2065, 0
    %2704 = vmatpush.bf16.msra.mxu0 0
    %2705 = vmatpush.bf16.msra.mxu0 0
    %2706 = vmatpush.bf16.msra.mxu0 0
    %2707 = vmatpush.bf16.msra.mxu0 0
    %2708 = vmatpush.bf16.msra.mxu0 0
    %2709 = vmatpush.bf16.msra.mxu0 0
    %2710 = vmatpush.bf16.msra.mxu0 0
    %2711 = vmatpush.bf16.msra.mxu0 %v2700
    %2712 = vmatmul.bf16.gmra.mxu0 %v2698
    %v2713 = vpop.f32.mrf.mxu0
    %v2714 = vadd.f32 0.0, %v2713
    %v2715 = vpop.f32.mrf.mxu0
    %2716 = vdwg.mxu0
    %2717 = vmatpush.bf16.msra.mxu0 0
    %2718 = vmatpush.bf16.msra.mxu0 0
    %2719 = vmatpush.bf16.msra.mxu0 0
    %2720 = vmatpush.bf16.msra.mxu0 0
    %2721 = vmatpush.bf16.msra.mxu0 0
    %2722 = vmatpush.bf16.msra.mxu0 0
    %2723 = vmatpush.bf16.msra.mxu0 0
    %2724 = vmatpush.bf16.msra.mxu0 %v2702
    %2725 = vmatmul.bf16.gmra.mxu0 %v2698
    %v2726 = vpop.f32.mrf.mxu0
    %v2727 = vadd.f32 0.0, %v2726
    %v2728 = vpop.f32.mrf.mxu0
    %2729 = vdwg.mxu0
    %v2730 = vadd.f32 %v2693, %v2714
    %v2731 = vadd.f32 %v2694, %v2727
    %v2732 = vpack.c.bf16 %v2731, %v2730
    %s2733 = scalar_lea.vmem [#allocation2], 16
    %2734 = vst [vmem:[%s2733] sm:$0xff] %v2732
    %s2735 = scalar_lea.vmem %s1, 48
    %v2736 = vld [vmem:[%s2735] sm:$0xf]
    %s2737 = scalar_lea.vmem %s1, 52
    %v2738 = vld [vmem:[%s2737] sm:$0xf]
    %v2740 = vsel %vm2313, %v2738, 0
    %2742 = vmatpush.bf16.msra.mxu0 0
    %2743 = vmatpush.bf16.msra.mxu0 0
    %2744 = vmatpush.bf16.msra.mxu0 0
    %2745 = vmatpush.bf16.msra.mxu0 0
    %2746 = vmatpush.bf16.msra.mxu0 0
    %2747 = vmatpush.bf16.msra.mxu0 0
    %2748 = vmatpush.bf16.msra.mxu0 0
    %2749 = vmatpush.bf16.msra.mxu0 %v2561
    %2750 = vmatmul.bf16.gmra.mxu0 %v2740
    %v2751 = vpop.f32.mrf.mxu0
    %v2752 = vadd.f32 0.0, %v2751
    %v2753 = vpop.f32.mrf.mxu0
    %2754 = vdwg.mxu0
    %2755 = vmatpush.bf16.msra.mxu0 0
    %2756 = vmatpush.bf16.msra.mxu0 0
    %2757 = vmatpush.bf16.msra.mxu0 0
    %2758 = vmatpush.bf16.msra.mxu0 0
    %2759 = vmatpush.bf16.msra.mxu0 0
    %2760 = vmatpush.bf16.msra.mxu0 0
    %2761 = vmatpush.bf16.msra.mxu0 0
    %2762 = vmatpush.bf16.msra.mxu0 %v2563
    %2763 = vmatmul.bf16.gmra.mxu0 %v2740
    %v2764 = vpop.f32.mrf.mxu0
    %v2765 = vadd.f32 0.0, %v2764
    %v2766 = vpop.f32.mrf.mxu0
    %2767 = vdwg.mxu0
    %v2769 = vsel %vm2313, %v2736, 0
    %2771 = vmatpush.bf16.msra.mxu0 0
    %2772 = vmatpush.bf16.msra.mxu0 0
    %2773 = vmatpush.bf16.msra.mxu0 0
    %2774 = vmatpush.bf16.msra.mxu0 0
    %2775 = vmatpush.bf16.msra.mxu0 0
    %2776 = vmatpush.bf16.msra.mxu0 0
    %2777 = vmatpush.bf16.msra.mxu0 0
    %2778 = vmatpush.bf16.msra.mxu0 %v2423
    %2779 = vmatmul.bf16.gmra.mxu0 %v2769
    %v2780 = vpop.f32.mrf.mxu0
    %v2781 = vadd.f32 %v2752, %v2780
    %v2782 = vpop.f32.mrf.mxu0
    %2783 = vdwg.mxu0
    %2784 = vmatpush.bf16.msra.mxu0 0
    %2785 = vmatpush.bf16.msra.mxu0 0
    %2786 = vmatpush.bf16.msra.mxu0 0
    %2787 = vmatpush.bf16.msra.mxu0 0
    %2788 = vmatpush.bf16.msra.mxu0 0
    %2789 = vmatpush.bf16.msra.mxu0 0
    %2790 = vmatpush.bf16.msra.mxu0 0
    %2791 = vmatpush.bf16.msra.mxu0 %v2425
    %2792 = vmatmul.bf16.gmra.mxu0 %v2769
    %v2793 = vpop.f32.mrf.mxu0
    %v2794 = vadd.f32 %v2765, %v2793
    %v2795 = vpop.f32.mrf.mxu0
    %2796 = vdwg.mxu0
    %s2797 = scalar_lea.vmem %s1, 56
    %v2798 = vld [vmem:[%s2797] sm:$0xf]
    %v2800 = vsel %vm2313, %v2798, 0
    %2802 = vmatpush.bf16.msra.mxu0 0
    %2803 = vmatpush.bf16.msra.mxu0 0
    %2804 = vmatpush.bf16.msra.mxu0 0
    %2805 = vmatpush.bf16.msra.mxu0 0
    %2806 = vmatpush.bf16.msra.mxu0 0
    %2807 = vmatpush.bf16.msra.mxu0 0
    %2808 = vmatpush.bf16.msra.mxu0 0
    %2809 = vmatpush.bf16.msra.mxu0 %v2700
    %2810 = vmatmul.bf16.gmra.mxu0 %v2800
    %v2811 = vpop.f32.mrf.mxu0
    %v2812 = vadd.f32 0.0, %v2811
    %v2813 = vpop.f32.mrf.mxu0
    %2814 = vdwg.mxu0
    %2815 = vmatpush.bf16.msra.mxu0 0
    %2816 = vmatpush.bf16.msra.mxu0 0
    %2817 = vmatpush.bf16.msra.mxu0 0
    %2818 = vmatpush.bf16.msra.mxu0 0
    %2819 = vmatpush.bf16.msra.mxu0 0
    %2820 = vmatpush.bf16.msra.mxu0 0
    %2821 = vmatpush.bf16.msra.mxu0 0
    %2822 = vmatpush.bf16.msra.mxu0 %v2702
    %2823 = vmatmul.bf16.gmra.mxu0 %v2800
    %v2824 = vpop.f32.mrf.mxu0
    %v2825 = vadd.f32 0.0, %v2824
    %v2826 = vpop.f32.mrf.mxu0
    %2827 = vdwg.mxu0
    %v2828 = vadd.f32 %v2781, %v2812
    %v2829 = vadd.f32 %v2794, %v2825
    %s2830 = scalar_lea.vmem %s1, 60
    %v2831 = vld [vmem:[%s2830] sm:$0xf]
    %v2833 = vsel %vm2313, %v2831, 0
    %v2835 = vsel %vm2317, %v2294, 0
    %v2837 = vsel %vm2317, %v2309, 0
    %2839 = vmatpush.bf16.msra.mxu0 0
    %2840 = vmatpush.bf16.msra.mxu0 0
    %2841 = vmatpush.bf16.msra.mxu0 0
    %2842 = vmatpush.bf16.msra.mxu0 0
    %2843 = vmatpush.bf16.msra.mxu0 0
    %2844 = vmatpush.bf16.msra.mxu0 0
    %2845 = vmatpush.bf16.msra.mxu0 0
    %2846 = vmatpush.bf16.msra.mxu0 %v2835
    %2847 = vmatmul.bf16.gmra.mxu0 %v2833
    %v2848 = vpop.f32.mrf.mxu0
    %v2849 = vadd.f32 0.0, %v2848
    %v2850 = vpop.f32.mrf.mxu0
    %2851 = vdwg.mxu0
    %2852 = vmatpush.bf16.msra.mxu0 0
    %2853 = vmatpush.bf16.msra.mxu0 0
    %2854 = vmatpush.bf16.msra.mxu0 0
    %2855 = vmatpush.bf16.msra.mxu0 0
    %2856 = vmatpush.bf16.msra.mxu0 0
    %2857 = vmatpush.bf16.msra.mxu0 0
    %2858 = vmatpush.bf16.msra.mxu0 0
    %2859 = vmatpush.bf16.msra.mxu0 %v2837
    %2860 = vmatmul.bf16.gmra.mxu0 %v2833
    %v2861 = vpop.f32.mrf.mxu0
    %v2862 = vadd.f32 0.0, %v2861
    %v2863 = vpop.f32.mrf.mxu0
    %2864 = vdwg.mxu0
    %v2865 = vadd.f32 %v2828, %v2849
    %v2866 = vadd.f32 %v2829, %v2862
    %v2867 = vpack.c.bf16 %v2866, %v2865
    %s2868 = scalar_lea.vmem [#allocation2], 24
    %2869 = vst [vmem:[%s2868] sm:$0xff] %v2867
    %v2870 = vadd.f32 %v2453, %v2591
    %v2871 = vadd.f32 %v2454, %v2592
    %v2872 = vadd.f32 %v2870, %v2730
    %v2873 = vadd.f32 %v2871, %v2731
    %v2874 = vadd.f32 %v2872, %v2865
    %v2875 = vadd.f32 %v2873, %v2866
    %v2876 = vmul.f32 %v2453, %v2453
    %v2877 = vmul.f32 %v2454, %v2454
    %v2878 = vmul.f32 %v2591, %v2591
    %v2879 = vmul.f32 %v2592, %v2592
    %v2880 = vadd.f32 %v2876, %v2878
    %v2881 = vadd.f32 %v2877, %v2879
    %v2882 = vmul.f32 %v2730, %v2730
    %v2883 = vmul.f32 %v2731, %v2731
    %v2884 = vadd.f32 %v2880, %v2882
    %v2885 = vadd.f32 %v2881, %v2883
    %v2886 = vmul.f32 %v2865, %v2865
    %v2887 = vmul.f32 %v2866, %v2866
    %v2888 = vadd.f32 %v2884, %v2886
    %v2889 = vadd.f32 %v2885, %v2887
    %v2890 = vadd.f32 %v2874, %v2875
    %2891 = vadd.xlane.f32.xlu0 %v2890
    %v2892 = vpop.xlane.xlu0 %2891
    %v2893 = vadd.f32 %v2892, 0.0
    %v2894 = vadd.f32 %v2888, %v2889
    %2895 = vadd.xlane.f32.xlu0 %v2894
    %v2896 = vpop.xlane.xlu0 %2895
    %v2897 = vadd.f32 %v2896, 0.0
    %s2898 = scalar_lea.vmem %s0, 48
    %v2899 = vld [vmem:[%s2898] sm:$0xf]
    %v2900 = vld [vmem:[%s2898 + $0x4] sm:$0xf]
    %v2901 = vld [vmem:[%s2898 + $0x8] sm:$0x1]
    %v2902 = vld [vmem:[%s2898 + $0xc] sm:$0xf]
    %v2903 = vld [vmem:[%s2898 + $0x10] sm:$0xf]
    %v2904 = vld [vmem:[%s2898 + $0x14] sm:$0x1]
    %v2905 = vld [vmem:[%s2898 + $0x18] sm:$0xf]
    %v2906 = vld [vmem:[%s2898 + $0x1c] sm:$0xf]
    %v2907 = vld [vmem:[%s2898 + $0x20] sm:$0x1]
    %v2908 = vld [vmem:[%s2898 + $0x24] sm:$0xf]
    %v2909 = vld [vmem:[%s2898 + $0x28] sm:$0xf]
    %v2910 = vld [vmem:[%s2898 + $0x2c] sm:$0x1]
    %v2913 = vpack.i.b16 %v2902, %v2899
    %v2914 = vshrl.u32 %v2899, 16
    %v2915 = vshrl.u32 %v2902, 16
    %v2916 = vpack.i.b16 %v2915, %v2914
    %v2919 = vpack.i.b16 %v2908, %v2905
    %v2920 = vshrl.u32 %v2905, 16
    %v2921 = vshrl.u32 %v2908, 16
    %v2922 = vpack.i.b16 %v2921, %v2920
    %v2925 = vpack.i.b16 %v2903, %v2900
    %v2926 = vshrl.u32 %v2900, 16
    %v2927 = vshrl.u32 %v2903, 16
    %v2928 = vpack.i.b16 %v2927, %v2926
    %v2931 = vpack.i.b16 %v2909, %v2906
    %v2932 = vshrl.u32 %v2906, 16
    %v2933 = vshrl.u32 %v2909, 16
    %v2934 = vpack.i.b16 %v2933, %v2932
    %v2937 = vunpack.c.l.s4 1983009808
    %v2938 = vunpack.c.0.s8 %v2937
    %v2939 = vperm.slane %v2913, %v2938
    %v2942 = vunpack.c.l.s4 1983009808
    %v2943 = vunpack.c.0.s8 %v2942
    %v2944 = vperm.slane %v2919, %v2943
    %v2945 = vrot.slane %v2944, 4
    %v2946 = vsel %vm63, %v2945, %v2939
    %v2947 = vrot.slane %v2939, 4
    %v2948 = vsel %vm63, %v2944, %v2947
    %v2950 = vunpack.c.l.s4 1934713408
    %v2951 = vunpack.c.0.s8 %v2950
    %v2952 = vperm.slane %v2946, %v2951
    %v2954 = vunpack.c.l.s4 1934713408
    %v2955 = vunpack.c.0.s8 %v2954
    %v2956 = vperm.slane %v2948, %v2955
    %v2957 = vrot.slane %v2952, 4
    %v2958 = vsel %vm63, 0, %v2957
    %v2959 = vrot.slane %v2956, 4
    %v2960 = vsel %vm63, 0, %v2959
    %v2963 = vunpack.c.l.s4 1983009808
    %v2964 = vunpack.c.0.s8 %v2963
    %v2965 = vperm.slane %v2916, %v2964
    %v2968 = vunpack.c.l.s4 1983009808
    %v2969 = vunpack.c.0.s8 %v2968
    %v2970 = vperm.slane %v2922, %v2969
    %v2971 = vrot.slane %v2970, 4
    %v2972 = vsel %vm63, %v2971, %v2965
    %v2973 = vrot.slane %v2965, 4
    %v2974 = vsel %vm63, %v2970, %v2973
    %v2976 = vunpack.c.l.s4 1934713408
    %v2977 = vunpack.c.0.s8 %v2976
    %v2978 = vperm.slane %v2972, %v2977
    %v2980 = vunpack.c.l.s4 1934713408
    %v2981 = vunpack.c.0.s8 %v2980
    %v2982 = vperm.slane %v2974, %v2981
    %v2983 = vrot.slane %v2978, 4
    %v2984 = vsel %vm63, 0, %v2983
    %v2985 = vrot.slane %v2982, 4
    %v2986 = vsel %vm63, 0, %v2985
    %v2989 = vunpack.c.l.s4 1983009808
    %v2990 = vunpack.c.0.s8 %v2989
    %v2991 = vperm.slane %v2925, %v2990
    %v2994 = vunpack.c.l.s4 1983009808
    %v2995 = vunpack.c.0.s8 %v2994
    %v2996 = vperm.slane %v2931, %v2995
    %v2997 = vrot.slane %v2996, 4
    %v2998 = vsel %vm63, %v2997, %v2991
    %v2999 = vrot.slane %v2991, 4
    %v3000 = vsel %vm63, %v2996, %v2999
    %v3002 = vunpack.c.l.s4 1934713408
    %v3003 = vunpack.c.0.s8 %v3002
    %v3004 = vperm.slane %v2998, %v3003
    %v3006 = vunpack.c.l.s4 1934713408
    %v3007 = vunpack.c.0.s8 %v3006
    %v3008 = vperm.slane %v3000, %v3007
    %v3009 = vrot.slane %v3004, 4
    %v3010 = vsel %vm63, 0, %v3009
    %v3011 = vrot.slane %v3008, 4
    %v3012 = vsel %vm63, 0, %v3011
    %v3015 = vunpack.c.l.s4 1983009808
    %v3016 = vunpack.c.0.s8 %v3015
    %v3017 = vperm.slane %v2928, %v3016
    %v3020 = vunpack.c.l.s4 1983009808
    %v3021 = vunpack.c.0.s8 %v3020
    %v3022 = vperm.slane %v2934, %v3021
    %v3023 = vrot.slane %v3022, 4
    %v3024 = vsel %vm63, %v3023, %v3017
    %v3025 = vrot.slane %v3017, 4
    %v3026 = vsel %vm63, %v3022, %v3025
    %v3028 = vunpack.c.l.s4 1934713408
    %v3029 = vunpack.c.0.s8 %v3028
    %v3030 = vperm.slane %v3024, %v3029
    %v3032 = vunpack.c.l.s4 1934713408
    %v3033 = vunpack.c.0.s8 %v3032
    %v3034 = vperm.slane %v3026, %v3033
    %v3035 = vrot.slane %v3030, 4
    %v3036 = vsel %vm63, 0, %v3035
    %v3037 = vrot.slane %v3034, 4
    %v3038 = vsel %vm63, 0, %v3037
    %v3040 = vunpack.c.l.b16 %v2978
    %v3041 = vpack.c.b16 %v3040, %v3040
    %3042 = vrot.lane.b32.xlu0 %v3041, 16
    %v3043 = vpop.permute.xlu0 %3042
    %v3045 = vunpack.c.l.b16 %v2958
    %v3046 = vpack.c.b16 %v3045, %v3045
    %3047 = vrot.lane.b32.xlu0 %v3046, 32
    %v3048 = vpop.permute.xlu0 %3047
    %v3050 = vunpack.c.l.b16 %v2984
    %v3051 = vpack.c.b16 %v3050, %v3050
    %3052 = vrot.lane.b32.xlu0 %v3051, 48
    %v3053 = vpop.permute.xlu0 %3052
    %v3055 = vunpack.c.l.b16 %v2956
    %v3056 = vpack.c.b16 %v3055, %v3055
    %3057 = vrot.lane.b32.xlu0 %v3056, 64
    %v3058 = vpop.permute.xlu0 %3057
    %v3060 = vunpack.c.l.b16 %v2982
    %v3061 = vpack.c.b16 %v3060, %v3060
    %3062 = vrot.lane.b32.xlu0 %v3061, 80
    %v3063 = vpop.permute.xlu0 %3062
    %v3065 = vunpack.c.l.b16 %v2960
    %v3066 = vpack.c.b16 %v3065, %v3065
    %3067 = vrot.lane.b32.xlu0 %v3066, 96
    %v3068 = vpop.permute.xlu0 %3067
    %v3070 = vunpack.c.l.b16 %v2986
    %v3071 = vpack.c.b16 %v3070, %v3070
    %3072 = vrot.lane.b32.xlu0 %v3071, 112
    %v3073 = vpop.permute.xlu0 %3072
    %v3075 = vunpack.c.l.b16 %v3030
    %v3076 = vpack.c.b16 %v3075, %v3075
    %3077 = vrot.lane.b32.xlu0 %v3076, 16
    %v3078 = vpop.permute.xlu0 %3077
    %v3080 = vunpack.c.l.b16 %v3010
    %v3081 = vpack.c.b16 %v3080, %v3080
    %3082 = vrot.lane.b32.xlu0 %v3081, 32
    %v3083 = vpop.permute.xlu0 %3082
    %v3085 = vunpack.c.l.b16 %v3036
    %v3086 = vpack.c.b16 %v3085, %v3085
    %3087 = vrot.lane.b32.xlu0 %v3086, 48
    %v3088 = vpop.permute.xlu0 %3087
    %v3090 = vunpack.c.l.b16 %v3008
    %v3091 = vpack.c.b16 %v3090, %v3090
    %3092 = vrot.lane.b32.xlu0 %v3091, 64
    %v3093 = vpop.permute.xlu0 %3092
    %v3095 = vunpack.c.l.b16 %v3034
    %v3096 = vpack.c.b16 %v3095, %v3095
    %3097 = vrot.lane.b32.xlu0 %v3096, 80
    %v3098 = vpop.permute.xlu0 %3097
    %v3100 = vunpack.c.l.b16 %v3012
    %v3101 = vpack.c.b16 %v3100, %v3100
    %3102 = vrot.lane.b32.xlu0 %v3101, 96
    %v3103 = vpop.permute.xlu0 %3102
    %v3105 = vunpack.c.l.b16 %v3038
    %v3106 = vpack.c.b16 %v3105, %v3105
    %3107 = vrot.lane.b32.xlu0 %v3106, 112
    %v3108 = vpop.permute.xlu0 %3107
    %v3111 = vsel %vm227, %v2952, %v3043
    %v3113 = vsel %vm231, %v3111, %v3048
    %v3115 = vsel %vm234, %v3113, %v3053
    %v3117 = vsel %vm237, %v3115, %v3058
    %v3119 = vsel %vm240, %v3117, %v3063
    %v3121 = vsel %vm243, %v3119, %v3068
    %v3123 = vsel %vm246, %v3121, %v3073
    %v3126 = vsel %vm227, %v3004, %v3078
    %v3128 = vsel %vm231, %v3126, %v3083
    %v3130 = vsel %vm234, %v3128, %v3088
    %v3132 = vsel %vm237, %v3130, %v3093
    %v3134 = vsel %vm240, %v3132, %v3098
    %v3136 = vsel %vm243, %v3134, %v3103
    %v3138 = vsel %vm246, %v3136, %v3108
    %3147 = vrot.lane.b32.xlu0 %v2899, 127
    %v3148 = vpop.permute.xlu0 %3147
    %3149 = vrot.lane.b32.xlu0 %v2900, 127
    %v3150 = vpop.permute.xlu0 %3149
    %3151 = vrot.lane.b32.xlu0 %v2902, 127
    %v3152 = vpop.permute.xlu0 %3151
    %3153 = vrot.lane.b32.xlu0 %v2903, 127
    %v3154 = vpop.permute.xlu0 %3153
    %3155 = vrot.lane.b32.xlu0 %v2905, 127
    %v3156 = vpop.permute.xlu0 %3155
    %3157 = vrot.lane.b32.xlu0 %v2906, 127
    %v3158 = vpop.permute.xlu0 %3157
    %3159 = vrot.lane.b32.xlu0 %v2908, 127
    %v3160 = vpop.permute.xlu0 %3159
    %3161 = vrot.lane.b32.xlu0 %v2909, 127
    %v3162 = vpop.permute.xlu0 %3161
    %v3165 = vpack.i.b16 %v3152, %v3148
    %v3166 = vshrl.u32 %v3148, 16
    %v3167 = vshrl.u32 %v3152, 16
    %v3168 = vpack.i.b16 %v3167, %v3166
    %v3171 = vpack.i.b16 %v3160, %v3156
    %v3172 = vshrl.u32 %v3156, 16
    %v3173 = vshrl.u32 %v3160, 16
    %v3174 = vpack.i.b16 %v3173, %v3172
    %v3177 = vpack.i.b16 %v3154, %v3150
    %v3178 = vshrl.u32 %v3150, 16
    %v3179 = vshrl.u32 %v3154, 16
    %v3180 = vpack.i.b16 %v3179, %v3178
    %v3183 = vpack.i.b16 %v3162, %v3158
    %v3184 = vshrl.u32 %v3158, 16
    %v3185 = vshrl.u32 %v3162, 16
    %v3186 = vpack.i.b16 %v3185, %v3184
    %v3189 = vunpack.c.l.s4 1983009808
    %v3190 = vunpack.c.0.s8 %v3189
    %v3191 = vperm.slane %v3165, %v3190
    %v3194 = vunpack.c.l.s4 1983009808
    %v3195 = vunpack.c.0.s8 %v3194
    %v3196 = vperm.slane %v3171, %v3195
    %v3197 = vrot.slane %v3196, 4
    %v3198 = vsel %vm63, %v3197, %v3191
    %v3199 = vrot.slane %v3191, 4
    %v3200 = vsel %vm63, %v3196, %v3199
    %v3202 = vunpack.c.l.s4 1934713408
    %v3203 = vunpack.c.0.s8 %v3202
    %v3204 = vperm.slane %v3198, %v3203
    %v3206 = vunpack.c.l.s4 1934713408
    %v3207 = vunpack.c.0.s8 %v3206
    %v3208 = vperm.slane %v3200, %v3207
    %v3209 = vrot.slane %v3204, 4
    %v3210 = vsel %vm63, 0, %v3209
    %v3211 = vrot.slane %v3208, 4
    %v3212 = vsel %vm63, 0, %v3211
    %v3215 = vunpack.c.l.s4 1983009808
    %v3216 = vunpack.c.0.s8 %v3215
    %v3217 = vperm.slane %v3168, %v3216
    %v3220 = vunpack.c.l.s4 1983009808
    %v3221 = vunpack.c.0.s8 %v3220
    %v3222 = vperm.slane %v3174, %v3221
    %v3223 = vrot.slane %v3222, 4
    %v3224 = vsel %vm63, %v3223, %v3217
    %v3225 = vrot.slane %v3217, 4
    %v3226 = vsel %vm63, %v3222, %v3225
    %v3228 = vunpack.c.l.s4 1934713408
    %v3229 = vunpack.c.0.s8 %v3228
    %v3230 = vperm.slane %v3224, %v3229
    %v3232 = vunpack.c.l.s4 1934713408
    %v3233 = vunpack.c.0.s8 %v3232
    %v3234 = vperm.slane %v3226, %v3233
    %v3235 = vrot.slane %v3230, 4
    %v3236 = vsel %vm63, 0, %v3235
    %v3237 = vrot.slane %v3234, 4
    %v3238 = vsel %vm63, 0, %v3237
    %v3241 = vunpack.c.l.s4 1983009808
    %v3242 = vunpack.c.0.s8 %v3241
    %v3243 = vperm.slane %v3177, %v3242
    %v3246 = vunpack.c.l.s4 1983009808
    %v3247 = vunpack.c.0.s8 %v3246
    %v3248 = vperm.slane %v3183, %v3247
    %v3249 = vrot.slane %v3248, 4
    %v3250 = vsel %vm63, %v3249, %v3243
    %v3251 = vrot.slane %v3243, 4
    %v3252 = vsel %vm63, %v3248, %v3251
    %v3254 = vunpack.c.l.s4 1934713408
    %v3255 = vunpack.c.0.s8 %v3254
    %v3256 = vperm.slane %v3250, %v3255
    %v3258 = vunpack.c.l.s4 1934713408
    %v3259 = vunpack.c.0.s8 %v3258
    %v3260 = vperm.slane %v3252, %v3259
    %v3261 = vrot.slane %v3256, 4
    %v3262 = vsel %vm63, 0, %v3261
    %v3263 = vrot.slane %v3260, 4
    %v3264 = vsel %vm63, 0, %v3263
    %v3267 = vunpack.c.l.s4 1983009808
    %v3268 = vunpack.c.0.s8 %v3267
    %v3269 = vperm.slane %v3180, %v3268
    %v3272 = vunpack.c.l.s4 1983009808
    %v3273 = vunpack.c.0.s8 %v3272
    %v3274 = vperm.slane %v3186, %v3273
    %v3275 = vrot.slane %v3274, 4
    %v3276 = vsel %vm63, %v3275, %v3269
    %v3277 = vrot.slane %v3269, 4
    %v3278 = vsel %vm63, %v3274, %v3277
    %v3280 = vunpack.c.l.s4 1934713408
    %v3281 = vunpack.c.0.s8 %v3280
    %v3282 = vperm.slane %v3276, %v3281
    %v3284 = vunpack.c.l.s4 1934713408
    %v3285 = vunpack.c.0.s8 %v3284
    %v3286 = vperm.slane %v3278, %v3285
    %v3287 = vrot.slane %v3282, 4
    %v3288 = vsel %vm63, 0, %v3287
    %v3289 = vrot.slane %v3286, 4
    %v3290 = vsel %vm63, 0, %v3289
    %v3292 = vunpack.c.l.b16 %v3230
    %v3293 = vpack.c.b16 %v3292, %v3292
    %3294 = vrot.lane.b32.xlu0 %v3293, 16
    %v3295 = vpop.permute.xlu0 %3294
    %v3297 = vunpack.c.l.b16 %v3210
    %v3298 = vpack.c.b16 %v3297, %v3297
    %3299 = vrot.lane.b32.xlu0 %v3298, 32
    %v3300 = vpop.permute.xlu0 %3299
    %v3302 = vunpack.c.l.b16 %v3236
    %v3303 = vpack.c.b16 %v3302, %v3302
    %3304 = vrot.lane.b32.xlu0 %v3303, 48
    %v3305 = vpop.permute.xlu0 %3304
    %v3307 = vunpack.c.l.b16 %v3208
    %v3308 = vpack.c.b16 %v3307, %v3307
    %3309 = vrot.lane.b32.xlu0 %v3308, 64
    %v3310 = vpop.permute.xlu0 %3309
    %v3312 = vunpack.c.l.b16 %v3234
    %v3313 = vpack.c.b16 %v3312, %v3312
    %3314 = vrot.lane.b32.xlu0 %v3313, 80
    %v3315 = vpop.permute.xlu0 %3314
    %v3317 = vunpack.c.l.b16 %v3212
    %v3318 = vpack.c.b16 %v3317, %v3317
    %3319 = vrot.lane.b32.xlu0 %v3318, 96
    %v3320 = vpop.permute.xlu0 %3319
    %v3322 = vunpack.c.l.b16 %v3238
    %v3323 = vpack.c.b16 %v3322, %v3322
    %3324 = vrot.lane.b32.xlu0 %v3323, 112
    %v3325 = vpop.permute.xlu0 %3324
    %v3327 = vunpack.c.l.b16 %v3282
    %v3328 = vpack.c.b16 %v3327, %v3327
    %3329 = vrot.lane.b32.xlu0 %v3328, 16
    %v3330 = vpop.permute.xlu0 %3329
    %v3332 = vunpack.c.l.b16 %v3262
    %v3333 = vpack.c.b16 %v3332, %v3332
    %3334 = vrot.lane.b32.xlu0 %v3333, 32
    %v3335 = vpop.permute.xlu0 %3334
    %v3337 = vunpack.c.l.b16 %v3288
    %v3338 = vpack.c.b16 %v3337, %v3337
    %3339 = vrot.lane.b32.xlu0 %v3338, 48
    %v3340 = vpop.permute.xlu0 %3339
    %v3342 = vunpack.c.l.b16 %v3260
    %v3343 = vpack.c.b16 %v3342, %v3342
    %3344 = vrot.lane.b32.xlu0 %v3343, 64
    %v3345 = vpop.permute.xlu0 %3344
    %v3347 = vunpack.c.l.b16 %v3286
    %v3348 = vpack.c.b16 %v3347, %v3347
    %3349 = vrot.lane.b32.xlu0 %v3348, 80
    %v3350 = vpop.permute.xlu0 %3349
    %v3352 = vunpack.c.l.b16 %v3264
    %v3353 = vpack.c.b16 %v3352, %v3352
    %3354 = vrot.lane.b32.xlu0 %v3353, 96
    %v3355 = vpop.permute.xlu0 %3354
    %v3357 = vunpack.c.l.b16 %v3290
    %v3358 = vpack.c.b16 %v3357, %v3357
    %3359 = vrot.lane.b32.xlu0 %v3358, 112
    %v3360 = vpop.permute.xlu0 %3359
    %v3363 = vsel %vm227, %v3204, %v3295
    %v3365 = vsel %vm231, %v3363, %v3300
    %v3367 = vsel %vm234, %v3365, %v3305
    %v3369 = vsel %vm237, %v3367, %v3310
    %v3371 = vsel %vm240, %v3369, %v3315
    %v3373 = vsel %vm243, %v3371, %v3320
    %v3375 = vsel %vm246, %v3373, %v3325
    %v3378 = vsel %vm227, %v3256, %v3330
    %v3380 = vsel %vm231, %v3378, %v3335
    %v3382 = vsel %vm234, %v3380, %v3340
    %v3384 = vsel %vm237, %v3382, %v3345
    %v3386 = vsel %vm240, %v3384, %v3350
    %v3388 = vsel %vm243, %v3386, %v3355
    %v3390 = vsel %vm246, %v3388, %v3360
    %3391 = vrot.lane.b32.xlu0 %v2899, 126
    %v3392 = vpop.permute.xlu0 %3391
    %3393 = vrot.lane.b32.xlu0 %v2900, 126
    %v3394 = vpop.permute.xlu0 %3393
    %3395 = vrot.lane.b32.xlu0 %v2902, 126
    %v3396 = vpop.permute.xlu0 %3395
    %3397 = vrot.lane.b32.xlu0 %v2903, 126
    %v3398 = vpop.permute.xlu0 %3397
    %3399 = vrot.lane.b32.xlu0 %v2905, 126
    %v3400 = vpop.permute.xlu0 %3399
    %3401 = vrot.lane.b32.xlu0 %v2906, 126
    %v3402 = vpop.permute.xlu0 %3401
    %3403 = vrot.lane.b32.xlu0 %v2908, 126
    %v3404 = vpop.permute.xlu0 %3403
    %3405 = vrot.lane.b32.xlu0 %v2909, 126
    %v3406 = vpop.permute.xlu0 %3405
    %v3409 = vpack.i.b16 %v3396, %v3392
    %v3410 = vshrl.u32 %v3392, 16
    %v3411 = vshrl.u32 %v3396, 16
    %v3412 = vpack.i.b16 %v3411, %v3410
    %v3415 = vpack.i.b16 %v3404, %v3400
    %v3416 = vshrl.u32 %v3400, 16
    %v3417 = vshrl.u32 %v3404, 16
    %v3418 = vpack.i.b16 %v3417, %v3416
    %v3421 = vpack.i.b16 %v3398, %v3394
    %v3422 = vshrl.u32 %v3394, 16
    %v3423 = vshrl.u32 %v3398, 16
    %v3424 = vpack.i.b16 %v3423, %v3422
    %v3427 = vpack.i.b16 %v3406, %v3402
    %v3428 = vshrl.u32 %v3402, 16
    %v3429 = vshrl.u32 %v3406, 16
    %v3430 = vpack.i.b16 %v3429, %v3428
    %v3433 = vunpack.c.l.s4 1983009808
    %v3434 = vunpack.c.0.s8 %v3433
    %v3435 = vperm.slane %v3409, %v3434
    %v3438 = vunpack.c.l.s4 1983009808
    %v3439 = vunpack.c.0.s8 %v3438
    %v3440 = vperm.slane %v3415, %v3439
    %v3441 = vrot.slane %v3440, 4
    %v3442 = vsel %vm63, %v3441, %v3435
    %v3443 = vrot.slane %v3435, 4
    %v3444 = vsel %vm63, %v3440, %v3443
    %v3446 = vunpack.c.l.s4 1934713408
    %v3447 = vunpack.c.0.s8 %v3446
    %v3448 = vperm.slane %v3442, %v3447
    %v3450 = vunpack.c.l.s4 1934713408
    %v3451 = vunpack.c.0.s8 %v3450
    %v3452 = vperm.slane %v3444, %v3451
    %v3453 = vrot.slane %v3448, 4
    %v3454 = vsel %vm63, 0, %v3453
    %v3455 = vrot.slane %v3452, 4
    %v3456 = vsel %vm63, 0, %v3455
    %v3459 = vunpack.c.l.s4 1983009808
    %v3460 = vunpack.c.0.s8 %v3459
    %v3461 = vperm.slane %v3412, %v3460
    %v3464 = vunpack.c.l.s4 1983009808
    %v3465 = vunpack.c.0.s8 %v3464
    %v3466 = vperm.slane %v3418, %v3465
    %v3467 = vrot.slane %v3466, 4
    %v3468 = vsel %vm63, %v3467, %v3461
    %v3469 = vrot.slane %v3461, 4
    %v3470 = vsel %vm63, %v3466, %v3469
    %v3472 = vunpack.c.l.s4 1934713408
    %v3473 = vunpack.c.0.s8 %v3472
    %v3474 = vperm.slane %v3468, %v3473
    %v3476 = vunpack.c.l.s4 1934713408
    %v3477 = vunpack.c.0.s8 %v3476
    %v3478 = vperm.slane %v3470, %v3477
    %v3479 = vrot.slane %v3474, 4
    %v3480 = vsel %vm63, 0, %v3479
    %v3481 = vrot.slane %v3478, 4
    %v3482 = vsel %vm63, 0, %v3481
    %v3485 = vunpack.c.l.s4 1983009808
    %v3486 = vunpack.c.0.s8 %v3485
    %v3487 = vperm.slane %v3421, %v3486
    %v3490 = vunpack.c.l.s4 1983009808
    %v3491 = vunpack.c.0.s8 %v3490
    %v3492 = vperm.slane %v3427, %v3491
    %v3493 = vrot.slane %v3492, 4
    %v3494 = vsel %vm63, %v3493, %v3487
    %v3495 = vrot.slane %v3487, 4
    %v3496 = vsel %vm63, %v3492, %v3495
    %v3498 = vunpack.c.l.s4 1934713408
    %v3499 = vunpack.c.0.s8 %v3498
    %v3500 = vperm.slane %v3494, %v3499
    %v3502 = vunpack.c.l.s4 1934713408
    %v3503 = vunpack.c.0.s8 %v3502
    %v3504 = vperm.slane %v3496, %v3503
    %v3505 = vrot.slane %v3500, 4
    %v3506 = vsel %vm63, 0, %v3505
    %v3507 = vrot.slane %v3504, 4
    %v3508 = vsel %vm63, 0, %v3507
    %v3511 = vunpack.c.l.s4 1983009808
    %v3512 = vunpack.c.0.s8 %v3511
    %v3513 = vperm.slane %v3424, %v3512
    %v3516 = vunpack.c.l.s4 1983009808
    %v3517 = vunpack.c.0.s8 %v3516
    %v3518 = vperm.slane %v3430, %v3517
    %v3519 = vrot.slane %v3518, 4
    %v3520 = vsel %vm63, %v3519, %v3513
    %v3521 = vrot.slane %v3513, 4
    %v3522 = vsel %vm63, %v3518, %v3521
    %v3524 = vunpack.c.l.s4 1934713408
    %v3525 = vunpack.c.0.s8 %v3524
    %v3526 = vperm.slane %v3520, %v3525
    %v3528 = vunpack.c.l.s4 1934713408
    %v3529 = vunpack.c.0.s8 %v3528
    %v3530 = vperm.slane %v3522, %v3529
    %v3531 = vrot.slane %v3526, 4
    %v3532 = vsel %vm63, 0, %v3531
    %v3533 = vrot.slane %v3530, 4
    %v3534 = vsel %vm63, 0, %v3533
    %v3536 = vunpack.c.l.b16 %v3474
    %v3537 = vpack.c.b16 %v3536, %v3536
    %3538 = vrot.lane.b32.xlu0 %v3537, 16
    %v3539 = vpop.permute.xlu0 %3538
    %v3541 = vunpack.c.l.b16 %v3454
    %v3542 = vpack.c.b16 %v3541, %v3541
    %3543 = vrot.lane.b32.xlu0 %v3542, 32
    %v3544 = vpop.permute.xlu0 %3543
    %v3546 = vunpack.c.l.b16 %v3480
    %v3547 = vpack.c.b16 %v3546, %v3546
    %3548 = vrot.lane.b32.xlu0 %v3547, 48
    %v3549 = vpop.permute.xlu0 %3548
    %v3551 = vunpack.c.l.b16 %v3452
    %v3552 = vpack.c.b16 %v3551, %v3551
    %3553 = vrot.lane.b32.xlu0 %v3552, 64
    %v3554 = vpop.permute.xlu0 %3553
    %v3556 = vunpack.c.l.b16 %v3478
    %v3557 = vpack.c.b16 %v3556, %v3556
    %3558 = vrot.lane.b32.xlu0 %v3557, 80
    %v3559 = vpop.permute.xlu0 %3558
    %v3561 = vunpack.c.l.b16 %v3456
    %v3562 = vpack.c.b16 %v3561, %v3561
    %3563 = vrot.lane.b32.xlu0 %v3562, 96
    %v3564 = vpop.permute.xlu0 %3563
    %v3566 = vunpack.c.l.b16 %v3482
    %v3567 = vpack.c.b16 %v3566, %v3566
    %3568 = vrot.lane.b32.xlu0 %v3567, 112
    %v3569 = vpop.permute.xlu0 %3568
    %v3571 = vunpack.c.l.b16 %v3526
    %v3572 = vpack.c.b16 %v3571, %v3571
    %3573 = vrot.lane.b32.xlu0 %v3572, 16
    %v3574 = vpop.permute.xlu0 %3573
    %v3576 = vunpack.c.l.b16 %v3506
    %v3577 = vpack.c.b16 %v3576, %v3576
    %3578 = vrot.lane.b32.xlu0 %v3577, 32
    %v3579 = vpop.permute.xlu0 %3578
    %v3581 = vunpack.c.l.b16 %v3532
    %v3582 = vpack.c.b16 %v3581, %v3581
    %3583 = vrot.lane.b32.xlu0 %v3582, 48
    %v3584 = vpop.permute.xlu0 %3583
    %v3586 = vunpack.c.l.b16 %v3504
    %v3587 = vpack.c.b16 %v3586, %v3586
    %3588 = vrot.lane.b32.xlu0 %v3587, 64
    %v3589 = vpop.permute.xlu0 %3588
    %v3591 = vunpack.c.l.b16 %v3530
    %v3592 = vpack.c.b16 %v3591, %v3591
    %3593 = vrot.lane.b32.xlu0 %v3592, 80
    %v3594 = vpop.permute.xlu0 %3593
    %v3596 = vunpack.c.l.b16 %v3508
    %v3597 = vpack.c.b16 %v3596, %v3596
    %3598 = vrot.lane.b32.xlu0 %v3597, 96
    %v3599 = vpop.permute.xlu0 %3598
    %v3601 = vunpack.c.l.b16 %v3534
    %v3602 = vpack.c.b16 %v3601, %v3601
    %3603 = vrot.lane.b32.xlu0 %v3602, 112
    %v3604 = vpop.permute.xlu0 %3603
    %v3607 = vsel %vm227, %v3448, %v3539
    %v3609 = vsel %vm231, %v3607, %v3544
    %v3611 = vsel %vm234, %v3609, %v3549
    %v3613 = vsel %vm237, %v3611, %v3554
    %v3615 = vsel %vm240, %v3613, %v3559
    %v3617 = vsel %vm243, %v3615, %v3564
    %v3619 = vsel %vm246, %v3617, %v3569
    %v3622 = vsel %vm227, %v3500, %v3574
    %v3624 = vsel %vm231, %v3622, %v3579
    %v3626 = vsel %vm234, %v3624, %v3584
    %v3628 = vsel %vm237, %v3626, %v3589
    %v3630 = vsel %vm240, %v3628, %v3594
    %v3632 = vsel %vm243, %v3630, %v3599
    %v3634 = vsel %vm246, %v3632, %v3604
    %v3636 = vrot.slane %v2914, 4
    %v3637 = vshll.u32 %v2899, 16
    %v3639 = vrot.slane %v3637, 5
    %v3640 = vor.u32 %v3636, %v3639
    %v3641 = vrot.slane %v3640, 4
    %v3642 = vshll.u32 %v2900, 16
    %v3644 = vrot.slane %v3642, 5
    %v3645 = vsel %vm762, %v3641, %v3644
    %v3647 = vrot.slane %v2926, 4
    %v3648 = vor.u32 %v3647, %v3644
    %v3649 = vrot.slane %v3648, 4
    %v3651 = vshll.u32 %v2901, 16
    %v3653 = vrot.slane %v3651, 5
    %v3654 = vsel %vm762, %v3649, %v3653
    %v3656 = vrot.slane %v2915, 4
    %v3657 = vshll.u32 %v2902, 16
    %v3659 = vrot.slane %v3657, 5
    %v3660 = vor.u32 %v3656, %v3659
    %v3661 = vrot.slane %v3660, 4
    %v3662 = vshll.u32 %v2903, 16
    %v3664 = vrot.slane %v3662, 5
    %v3665 = vsel %vm762, %v3661, %v3664
    %v3667 = vrot.slane %v2927, 4
    %v3668 = vor.u32 %v3667, %v3664
    %v3669 = vrot.slane %v3668, 4
    %v3671 = vshll.u32 %v2904, 16
    %v3673 = vrot.slane %v3671, 5
    %v3674 = vsel %vm762, %v3669, %v3673
    %v3676 = vrot.slane %v2920, 4
    %v3677 = vshll.u32 %v2905, 16
    %v3679 = vrot.slane %v3677, 5
    %v3680 = vor.u32 %v3676, %v3679
    %v3681 = vrot.slane %v3680, 4
    %v3682 = vshll.u32 %v2906, 16
    %v3684 = vrot.slane %v3682, 5
    %v3685 = vsel %vm762, %v3681, %v3684
    %v3687 = vrot.slane %v2932, 4
    %v3688 = vor.u32 %v3687, %v3684
    %v3689 = vrot.slane %v3688, 4
    %v3691 = vshll.u32 %v2907, 16
    %v3693 = vrot.slane %v3691, 5
    %v3694 = vsel %vm762, %v3689, %v3693
    %v3696 = vrot.slane %v2921, 4
    %v3697 = vshll.u32 %v2908, 16
    %v3699 = vrot.slane %v3697, 5
    %v3700 = vor.u32 %v3696, %v3699
    %v3701 = vrot.slane %v3700, 4
    %v3702 = vshll.u32 %v2909, 16
    %v3704 = vrot.slane %v3702, 5
    %v3705 = vsel %vm762, %v3701, %v3704
    %v3707 = vrot.slane %v2933, 4
    %v3708 = vor.u32 %v3707, %v3704
    %v3709 = vrot.slane %v3708, 4
    %v3711 = vshll.u32 %v2910, 16
    %v3713 = vrot.slane %v3711, 5
    %v3714 = vsel %vm762, %v3709, %v3713
    %v3717 = vpack.i.b16 %v3665, %v3645
    %v3718 = vshrl.u32 %v3645, 16
    %v3719 = vshrl.u32 %v3665, 16
    %v3720 = vpack.i.b16 %v3719, %v3718
    %v3723 = vpack.i.b16 %v3705, %v3685
    %v3724 = vshrl.u32 %v3685, 16
    %v3725 = vshrl.u32 %v3705, 16
    %v3726 = vpack.i.b16 %v3725, %v3724
    %v3729 = vpack.i.b16 %v3674, %v3654
    %v3730 = vshrl.u32 %v3654, 16
    %v3731 = vshrl.u32 %v3674, 16
    %v3732 = vpack.i.b16 %v3731, %v3730
    %v3735 = vpack.i.b16 %v3714, %v3694
    %v3736 = vshrl.u32 %v3694, 16
    %v3737 = vshrl.u32 %v3714, 16
    %v3738 = vpack.i.b16 %v3737, %v3736
    %v3741 = vunpack.c.l.s4 1983009808
    %v3742 = vunpack.c.0.s8 %v3741
    %v3743 = vperm.slane %v3717, %v3742
    %v3746 = vunpack.c.l.s4 1983009808
    %v3747 = vunpack.c.0.s8 %v3746
    %v3748 = vperm.slane %v3723, %v3747
    %v3749 = vrot.slane %v3748, 4
    %v3750 = vsel %vm63, %v3749, %v3743
    %v3751 = vrot.slane %v3743, 4
    %v3752 = vsel %vm63, %v3748, %v3751
    %v3754 = vunpack.c.l.s4 1934713408
    %v3755 = vunpack.c.0.s8 %v3754
    %v3756 = vperm.slane %v3750, %v3755
    %v3758 = vunpack.c.l.s4 1934713408
    %v3759 = vunpack.c.0.s8 %v3758
    %v3760 = vperm.slane %v3752, %v3759
    %v3761 = vrot.slane %v3756, 4
    %v3762 = vsel %vm63, 0, %v3761
    %v3763 = vrot.slane %v3760, 4
    %v3764 = vsel %vm63, 0, %v3763
    %v3767 = vunpack.c.l.s4 1983009808
    %v3768 = vunpack.c.0.s8 %v3767
    %v3769 = vperm.slane %v3720, %v3768
    %v3772 = vunpack.c.l.s4 1983009808
    %v3773 = vunpack.c.0.s8 %v3772
    %v3774 = vperm.slane %v3726, %v3773
    %v3775 = vrot.slane %v3774, 4
    %v3776 = vsel %vm63, %v3775, %v3769
    %v3777 = vrot.slane %v3769, 4
    %v3778 = vsel %vm63, %v3774, %v3777
    %v3780 = vunpack.c.l.s4 1934713408
    %v3781 = vunpack.c.0.s8 %v3780
    %v3782 = vperm.slane %v3776, %v3781
    %v3784 = vunpack.c.l.s4 1934713408
    %v3785 = vunpack.c.0.s8 %v3784
    %v3786 = vperm.slane %v3778, %v3785
    %v3787 = vrot.slane %v3782, 4
    %v3788 = vsel %vm63, 0, %v3787
    %v3789 = vrot.slane %v3786, 4
    %v3790 = vsel %vm63, 0, %v3789
    %v3793 = vunpack.c.l.s4 1983009808
    %v3794 = vunpack.c.0.s8 %v3793
    %v3795 = vperm.slane %v3729, %v3794
    %v3798 = vunpack.c.l.s4 1983009808
    %v3799 = vunpack.c.0.s8 %v3798
    %v3800 = vperm.slane %v3735, %v3799
    %v3801 = vrot.slane %v3800, 4
    %v3802 = vsel %vm63, %v3801, %v3795
    %v3803 = vrot.slane %v3795, 4
    %v3804 = vsel %vm63, %v3800, %v3803
    %v3806 = vunpack.c.l.s4 1934713408
    %v3807 = vunpack.c.0.s8 %v3806
    %v3808 = vperm.slane %v3802, %v3807
    %v3810 = vunpack.c.l.s4 1934713408
    %v3811 = vunpack.c.0.s8 %v3810
    %v3812 = vperm.slane %v3804, %v3811
    %v3813 = vrot.slane %v3808, 4
    %v3814 = vsel %vm63, 0, %v3813
    %v3815 = vrot.slane %v3812, 4
    %v3816 = vsel %vm63, 0, %v3815
    %v3819 = vunpack.c.l.s4 1983009808
    %v3820 = vunpack.c.0.s8 %v3819
    %v3821 = vperm.slane %v3732, %v3820
    %v3824 = vunpack.c.l.s4 1983009808
    %v3825 = vunpack.c.0.s8 %v3824
    %v3826 = vperm.slane %v3738, %v3825
    %v3827 = vrot.slane %v3826, 4
    %v3828 = vsel %vm63, %v3827, %v3821
    %v3829 = vrot.slane %v3821, 4
    %v3830 = vsel %vm63, %v3826, %v3829
    %v3832 = vunpack.c.l.s4 1934713408
    %v3833 = vunpack.c.0.s8 %v3832
    %v3834 = vperm.slane %v3828, %v3833
    %v3836 = vunpack.c.l.s4 1934713408
    %v3837 = vunpack.c.0.s8 %v3836
    %v3838 = vperm.slane %v3830, %v3837
    %v3839 = vrot.slane %v3834, 4
    %v3840 = vsel %vm63, 0, %v3839
    %v3841 = vrot.slane %v3838, 4
    %v3842 = vsel %vm63, 0, %v3841
    %v3844 = vunpack.c.l.b16 %v3782
    %v3845 = vpack.c.b16 %v3844, %v3844
    %3846 = vrot.lane.b32.xlu0 %v3845, 16
    %v3847 = vpop.permute.xlu0 %3846
    %v3849 = vunpack.c.l.b16 %v3762
    %v3850 = vpack.c.b16 %v3849, %v3849
    %3851 = vrot.lane.b32.xlu0 %v3850, 32
    %v3852 = vpop.permute.xlu0 %3851
    %v3854 = vunpack.c.l.b16 %v3788
    %v3855 = vpack.c.b16 %v3854, %v3854
    %3856 = vrot.lane.b32.xlu0 %v3855, 48
    %v3857 = vpop.permute.xlu0 %3856
    %v3859 = vunpack.c.l.b16 %v3760
    %v3860 = vpack.c.b16 %v3859, %v3859
    %3861 = vrot.lane.b32.xlu0 %v3860, 64
    %v3862 = vpop.permute.xlu0 %3861
    %v3864 = vunpack.c.l.b16 %v3786
    %v3865 = vpack.c.b16 %v3864, %v3864
    %3866 = vrot.lane.b32.xlu0 %v3865, 80
    %v3867 = vpop.permute.xlu0 %3866
    %v3869 = vunpack.c.l.b16 %v3764
    %v3870 = vpack.c.b16 %v3869, %v3869
    %3871 = vrot.lane.b32.xlu0 %v3870, 96
    %v3872 = vpop.permute.xlu0 %3871
    %v3874 = vunpack.c.l.b16 %v3790
    %v3875 = vpack.c.b16 %v3874, %v3874
    %3876 = vrot.lane.b32.xlu0 %v3875, 112
    %v3877 = vpop.permute.xlu0 %3876
    %v3879 = vunpack.c.l.b16 %v3834
    %v3880 = vpack.c.b16 %v3879, %v3879
    %3881 = vrot.lane.b32.xlu0 %v3880, 16
    %v3882 = vpop.permute.xlu0 %3881
    %v3884 = vunpack.c.l.b16 %v3814
    %v3885 = vpack.c.b16 %v3884, %v3884
    %3886 = vrot.lane.b32.xlu0 %v3885, 32
    %v3887 = vpop.permute.xlu0 %3886
    %v3889 = vunpack.c.l.b16 %v3840
    %v3890 = vpack.c.b16 %v3889, %v3889
    %3891 = vrot.lane.b32.xlu0 %v3890, 48
    %v3892 = vpop.permute.xlu0 %3891
    %v3894 = vunpack.c.l.b16 %v3812
    %v3895 = vpack.c.b16 %v3894, %v3894
    %3896 = vrot.lane.b32.xlu0 %v3895, 64
    %v3897 = vpop.permute.xlu0 %3896
    %v3899 = vunpack.c.l.b16 %v3838
    %v3900 = vpack.c.b16 %v3899, %v3899
    %3901 = vrot.lane.b32.xlu0 %v3900, 80
    %v3902 = vpop.permute.xlu0 %3901
    %v3904 = vunpack.c.l.b16 %v3816
    %v3905 = vpack.c.b16 %v3904, %v3904
    %3906 = vrot.lane.b32.xlu0 %v3905, 96
    %v3907 = vpop.permute.xlu0 %3906
    %v3909 = vunpack.c.l.b16 %v3842
    %v3910 = vpack.c.b16 %v3909, %v3909
    %3911 = vrot.lane.b32.xlu0 %v3910, 112
    %v3912 = vpop.permute.xlu0 %3911
    %v3915 = vsel %vm227, %v3756, %v3847
    %v3917 = vsel %vm231, %v3915, %v3852
    %v3919 = vsel %vm234, %v3917, %v3857
    %v3921 = vsel %vm237, %v3919, %v3862
    %v3923 = vsel %vm240, %v3921, %v3867
    %v3925 = vsel %vm243, %v3923, %v3872
    %v3927 = vsel %vm246, %v3925, %v3877
    %v3930 = vsel %vm227, %v3808, %v3882
    %v3932 = vsel %vm231, %v3930, %v3887
    %v3934 = vsel %vm234, %v3932, %v3892
    %v3936 = vsel %vm237, %v3934, %v3897
    %v3938 = vsel %vm240, %v3936, %v3902
    %v3940 = vsel %vm243, %v3938, %v3907
    %v3942 = vsel %vm246, %v3940, %v3912
    %3943 = vrot.lane.b32.xlu0 %v3645, 127
    %v3944 = vpop.permute.xlu0 %3943
    %3945 = vrot.lane.b32.xlu0 %v3654, 127
    %v3946 = vpop.permute.xlu0 %3945
    %3947 = vrot.lane.b32.xlu0 %v3665, 127
    %v3948 = vpop.permute.xlu0 %3947
    %3949 = vrot.lane.b32.xlu0 %v3674, 127
    %v3950 = vpop.permute.xlu0 %3949
    %3951 = vrot.lane.b32.xlu0 %v3685, 127
    %v3952 = vpop.permute.xlu0 %3951
    %3953 = vrot.lane.b32.xlu0 %v3694, 127
    %v3954 = vpop.permute.xlu0 %3953
    %3955 = vrot.lane.b32.xlu0 %v3705, 127
    %v3956 = vpop.permute.xlu0 %3955
    %3957 = vrot.lane.b32.xlu0 %v3714, 127
    %v3958 = vpop.permute.xlu0 %3957
    %v3961 = vpack.i.b16 %v3948, %v3944
    %v3962 = vshrl.u32 %v3944, 16
    %v3963 = vshrl.u32 %v3948, 16
    %v3964 = vpack.i.b16 %v3963, %v3962
    %v3967 = vpack.i.b16 %v3956, %v3952
    %v3968 = vshrl.u32 %v3952, 16
    %v3969 = vshrl.u32 %v3956, 16
    %v3970 = vpack.i.b16 %v3969, %v3968
    %v3973 = vpack.i.b16 %v3950, %v3946
    %v3974 = vshrl.u32 %v3946, 16
    %v3975 = vshrl.u32 %v3950, 16
    %v3976 = vpack.i.b16 %v3975, %v3974
    %v3979 = vpack.i.b16 %v3958, %v3954
    %v3980 = vshrl.u32 %v3954, 16
    %v3981 = vshrl.u32 %v3958, 16
    %v3982 = vpack.i.b16 %v3981, %v3980
    %v3985 = vunpack.c.l.s4 1983009808
    %v3986 = vunpack.c.0.s8 %v3985
    %v3987 = vperm.slane %v3961, %v3986
    %v3990 = vunpack.c.l.s4 1983009808
    %v3991 = vunpack.c.0.s8 %v3990
    %v3992 = vperm.slane %v3967, %v3991
    %v3993 = vrot.slane %v3992, 4
    %v3994 = vsel %vm63, %v3993, %v3987
    %v3995 = vrot.slane %v3987, 4
    %v3996 = vsel %vm63, %v3992, %v3995
    %v3998 = vunpack.c.l.s4 1934713408
    %v3999 = vunpack.c.0.s8 %v3998
    %v4000 = vperm.slane %v3994, %v3999
    %v4002 = vunpack.c.l.s4 1934713408
    %v4003 = vunpack.c.0.s8 %v4002
    %v4004 = vperm.slane %v3996, %v4003
    %v4005 = vrot.slane %v4000, 4
    %v4006 = vsel %vm63, 0, %v4005
    %v4007 = vrot.slane %v4004, 4
    %v4008 = vsel %vm63, 0, %v4007
    %v4011 = vunpack.c.l.s4 1983009808
    %v4012 = vunpack.c.0.s8 %v4011
    %v4013 = vperm.slane %v3964, %v4012
    %v4016 = vunpack.c.l.s4 1983009808
    %v4017 = vunpack.c.0.s8 %v4016
    %v4018 = vperm.slane %v3970, %v4017
    %v4019 = vrot.slane %v4018, 4
    %v4020 = vsel %vm63, %v4019, %v4013
    %v4021 = vrot.slane %v4013, 4
    %v4022 = vsel %vm63, %v4018, %v4021
    %v4024 = vunpack.c.l.s4 1934713408
    %v4025 = vunpack.c.0.s8 %v4024
    %v4026 = vperm.slane %v4020, %v4025
    %v4028 = vunpack.c.l.s4 1934713408
    %v4029 = vunpack.c.0.s8 %v4028
    %v4030 = vperm.slane %v4022, %v4029
    %v4031 = vrot.slane %v4026, 4
    %v4032 = vsel %vm63, 0, %v4031
    %v4033 = vrot.slane %v4030, 4
    %v4034 = vsel %vm63, 0, %v4033
    %v4037 = vunpack.c.l.s4 1983009808
    %v4038 = vunpack.c.0.s8 %v4037
    %v4039 = vperm.slane %v3973, %v4038
    %v4042 = vunpack.c.l.s4 1983009808
    %v4043 = vunpack.c.0.s8 %v4042
    %v4044 = vperm.slane %v3979, %v4043
    %v4045 = vrot.slane %v4044, 4
    %v4046 = vsel %vm63, %v4045, %v4039
    %v4047 = vrot.slane %v4039, 4
    %v4048 = vsel %vm63, %v4044, %v4047
    %v4050 = vunpack.c.l.s4 1934713408
    %v4051 = vunpack.c.0.s8 %v4050
    %v4052 = vperm.slane %v4046, %v4051
    %v4054 = vunpack.c.l.s4 1934713408
    %v4055 = vunpack.c.0.s8 %v4054
    %v4056 = vperm.slane %v4048, %v4055
    %v4057 = vrot.slane %v4052, 4
    %v4058 = vsel %vm63, 0, %v4057
    %v4059 = vrot.slane %v4056, 4
    %v4060 = vsel %vm63, 0, %v4059
    %v4063 = vunpack.c.l.s4 1983009808
    %v4064 = vunpack.c.0.s8 %v4063
    %v4065 = vperm.slane %v3976, %v4064
    %v4068 = vunpack.c.l.s4 1983009808
    %v4069 = vunpack.c.0.s8 %v4068
    %v4070 = vperm.slane %v3982, %v4069
    %v4071 = vrot.slane %v4070, 4
    %v4072 = vsel %vm63, %v4071, %v4065
    %v4073 = vrot.slane %v4065, 4
    %v4074 = vsel %vm63, %v4070, %v4073
    %v4076 = vunpack.c.l.s4 1934713408
    %v4077 = vunpack.c.0.s8 %v4076
    %v4078 = vperm.slane %v4072, %v4077
    %v4080 = vunpack.c.l.s4 1934713408
    %v4081 = vunpack.c.0.s8 %v4080
    %v4082 = vperm.slane %v4074, %v4081
    %v4083 = vrot.slane %v4078, 4
    %v4084 = vsel %vm63, 0, %v4083
    %v4085 = vrot.slane %v4082, 4
    %v4086 = vsel %vm63, 0, %v4085
    %v4088 = vunpack.c.l.b16 %v4026
    %v4089 = vpack.c.b16 %v4088, %v4088
    %4090 = vrot.lane.b32.xlu0 %v4089, 16
    %v4091 = vpop.permute.xlu0 %4090
    %v4093 = vunpack.c.l.b16 %v4006
    %v4094 = vpack.c.b16 %v4093, %v4093
    %4095 = vrot.lane.b32.xlu0 %v4094, 32
    %v4096 = vpop.permute.xlu0 %4095
    %v4098 = vunpack.c.l.b16 %v4032
    %v4099 = vpack.c.b16 %v4098, %v4098
    %4100 = vrot.lane.b32.xlu0 %v4099, 48
    %v4101 = vpop.permute.xlu0 %4100
    %v4103 = vunpack.c.l.b16 %v4004
    %v4104 = vpack.c.b16 %v4103, %v4103
    %4105 = vrot.lane.b32.xlu0 %v4104, 64
    %v4106 = vpop.permute.xlu0 %4105
    %v4108 = vunpack.c.l.b16 %v4030
    %v4109 = vpack.c.b16 %v4108, %v4108
    %4110 = vrot.lane.b32.xlu0 %v4109, 80
    %v4111 = vpop.permute.xlu0 %4110
    %v4113 = vunpack.c.l.b16 %v4008
    %v4114 = vpack.c.b16 %v4113, %v4113
    %4115 = vrot.lane.b32.xlu0 %v4114, 96
    %v4116 = vpop.permute.xlu0 %4115
    %v4118 = vunpack.c.l.b16 %v4034
    %v4119 = vpack.c.b16 %v4118, %v4118
    %4120 = vrot.lane.b32.xlu0 %v4119, 112
    %v4121 = vpop.permute.xlu0 %4120
    %v4123 = vunpack.c.l.b16 %v4078
    %v4124 = vpack.c.b16 %v4123, %v4123
    %4125 = vrot.lane.b32.xlu0 %v4124, 16
    %v4126 = vpop.permute.xlu0 %4125
    %v4128 = vunpack.c.l.b16 %v4058
    %v4129 = vpack.c.b16 %v4128, %v4128
    %4130 = vrot.lane.b32.xlu0 %v4129, 32
    %v4131 = vpop.permute.xlu0 %4130
    %v4133 = vunpack.c.l.b16 %v4084
    %v4134 = vpack.c.b16 %v4133, %v4133
    %4135 = vrot.lane.b32.xlu0 %v4134, 48
    %v4136 = vpop.permute.xlu0 %4135
    %v4138 = vunpack.c.l.b16 %v4056
    %v4139 = vpack.c.b16 %v4138, %v4138
    %4140 = vrot.lane.b32.xlu0 %v4139, 64
    %v4141 = vpop.permute.xlu0 %4140
    %v4143 = vunpack.c.l.b16 %v4082
    %v4144 = vpack.c.b16 %v4143, %v4143
    %4145 = vrot.lane.b32.xlu0 %v4144, 80
    %v4146 = vpop.permute.xlu0 %4145
    %v4148 = vunpack.c.l.b16 %v4060
    %v4149 = vpack.c.b16 %v4148, %v4148
    %4150 = vrot.lane.b32.xlu0 %v4149, 96
    %v4151 = vpop.permute.xlu0 %4150
    %v4153 = vunpack.c.l.b16 %v4086
    %v4154 = vpack.c.b16 %v4153, %v4153
    %4155 = vrot.lane.b32.xlu0 %v4154, 112
    %v4156 = vpop.permute.xlu0 %4155
    %v4159 = vsel %vm227, %v4000, %v4091
    %v4161 = vsel %vm231, %v4159, %v4096
    %v4163 = vsel %vm234, %v4161, %v4101
    %v4165 = vsel %vm237, %v4163, %v4106
    %v4167 = vsel %vm240, %v4165, %v4111
    %v4169 = vsel %vm243, %v4167, %v4116
    %v4171 = vsel %vm246, %v4169, %v4121
    %v4174 = vsel %vm227, %v4052, %v4126
    %v4176 = vsel %vm231, %v4174, %v4131
    %v4178 = vsel %vm234, %v4176, %v4136
    %v4180 = vsel %vm237, %v4178, %v4141
    %v4182 = vsel %vm240, %v4180, %v4146
    %v4184 = vsel %vm243, %v4182, %v4151
    %v4186 = vsel %vm246, %v4184, %v4156
    %4187 = vrot.lane.b32.xlu0 %v3645, 126
    %v4188 = vpop.permute.xlu0 %4187
    %4189 = vrot.lane.b32.xlu0 %v3654, 126
    %v4190 = vpop.permute.xlu0 %4189
    %4191 = vrot.lane.b32.xlu0 %v3665, 126
    %v4192 = vpop.permute.xlu0 %4191
    %4193 = vrot.lane.b32.xlu0 %v3674, 126
    %v4194 = vpop.permute.xlu0 %4193
    %4195 = vrot.lane.b32.xlu0 %v3685, 126
    %v4196 = vpop.permute.xlu0 %4195
    %4197 = vrot.lane.b32.xlu0 %v3694, 126
    %v4198 = vpop.permute.xlu0 %4197
    %4199 = vrot.lane.b32.xlu0 %v3705, 126
    %v4200 = vpop.permute.xlu0 %4199
    %4201 = vrot.lane.b32.xlu0 %v3714, 126
    %v4202 = vpop.permute.xlu0 %4201
    %v4205 = vpack.i.b16 %v4192, %v4188
    %v4206 = vshrl.u32 %v4188, 16
    %v4207 = vshrl.u32 %v4192, 16
    %v4208 = vpack.i.b16 %v4207, %v4206
    %v4211 = vpack.i.b16 %v4200, %v4196
    %v4212 = vshrl.u32 %v4196, 16
    %v4213 = vshrl.u32 %v4200, 16
    %v4214 = vpack.i.b16 %v4213, %v4212
    %v4217 = vpack.i.b16 %v4194, %v4190
    %v4218 = vshrl.u32 %v4190, 16
    %v4219 = vshrl.u32 %v4194, 16
    %v4220 = vpack.i.b16 %v4219, %v4218
    %v4223 = vpack.i.b16 %v4202, %v4198
    %v4224 = vshrl.u32 %v4198, 16
    %v4225 = vshrl.u32 %v4202, 16
    %v4226 = vpack.i.b16 %v4225, %v4224
    %v4229 = vunpack.c.l.s4 1983009808
    %v4230 = vunpack.c.0.s8 %v4229
    %v4231 = vperm.slane %v4205, %v4230
    %v4234 = vunpack.c.l.s4 1983009808
    %v4235 = vunpack.c.0.s8 %v4234
    %v4236 = vperm.slane %v4211, %v4235
    %v4237 = vrot.slane %v4236, 4
    %v4238 = vsel %vm63, %v4237, %v4231
    %v4239 = vrot.slane %v4231, 4
    %v4240 = vsel %vm63, %v4236, %v4239
    %v4242 = vunpack.c.l.s4 1934713408
    %v4243 = vunpack.c.0.s8 %v4242
    %v4244 = vperm.slane %v4238, %v4243
    %v4246 = vunpack.c.l.s4 1934713408
    %v4247 = vunpack.c.0.s8 %v4246
    %v4248 = vperm.slane %v4240, %v4247
    %v4249 = vrot.slane %v4244, 4
    %v4250 = vsel %vm63, 0, %v4249
    %v4251 = vrot.slane %v4248, 4
    %v4252 = vsel %vm63, 0, %v4251
    %v4255 = vunpack.c.l.s4 1983009808
    %v4256 = vunpack.c.0.s8 %v4255
    %v4257 = vperm.slane %v4208, %v4256
    %v4260 = vunpack.c.l.s4 1983009808
    %v4261 = vunpack.c.0.s8 %v4260
    %v4262 = vperm.slane %v4214, %v4261
    %v4263 = vrot.slane %v4262, 4
    %v4264 = vsel %vm63, %v4263, %v4257
    %v4265 = vrot.slane %v4257, 4
    %v4266 = vsel %vm63, %v4262, %v4265
    %v4268 = vunpack.c.l.s4 1934713408
    %v4269 = vunpack.c.0.s8 %v4268
    %v4270 = vperm.slane %v4264, %v4269
    %v4272 = vunpack.c.l.s4 1934713408
    %v4273 = vunpack.c.0.s8 %v4272
    %v4274 = vperm.slane %v4266, %v4273
    %v4275 = vrot.slane %v4270, 4
    %v4276 = vsel %vm63, 0, %v4275
    %v4277 = vrot.slane %v4274, 4
    %v4278 = vsel %vm63, 0, %v4277
    %v4281 = vunpack.c.l.s4 1983009808
    %v4282 = vunpack.c.0.s8 %v4281
    %v4283 = vperm.slane %v4217, %v4282
    %v4286 = vunpack.c.l.s4 1983009808
    %v4287 = vunpack.c.0.s8 %v4286
    %v4288 = vperm.slane %v4223, %v4287
    %v4289 = vrot.slane %v4288, 4
    %v4290 = vsel %vm63, %v4289, %v4283
    %v4291 = vrot.slane %v4283, 4
    %v4292 = vsel %vm63, %v4288, %v4291
    %v4294 = vunpack.c.l.s4 1934713408
    %v4295 = vunpack.c.0.s8 %v4294
    %v4296 = vperm.slane %v4290, %v4295
    %v4298 = vunpack.c.l.s4 1934713408
    %v4299 = vunpack.c.0.s8 %v4298
    %v4300 = vperm.slane %v4292, %v4299
    %v4301 = vrot.slane %v4296, 4
    %v4302 = vsel %vm63, 0, %v4301
    %v4303 = vrot.slane %v4300, 4
    %v4304 = vsel %vm63, 0, %v4303
    %v4307 = vunpack.c.l.s4 1983009808
    %v4308 = vunpack.c.0.s8 %v4307
    %v4309 = vperm.slane %v4220, %v4308
    %v4312 = vunpack.c.l.s4 1983009808
    %v4313 = vunpack.c.0.s8 %v4312
    %v4314 = vperm.slane %v4226, %v4313
    %v4315 = vrot.slane %v4314, 4
    %v4316 = vsel %vm63, %v4315, %v4309
    %v4317 = vrot.slane %v4309, 4
    %v4318 = vsel %vm63, %v4314, %v4317
    %v4320 = vunpack.c.l.s4 1934713408
    %v4321 = vunpack.c.0.s8 %v4320
    %v4322 = vperm.slane %v4316, %v4321
    %v4324 = vunpack.c.l.s4 1934713408
    %v4325 = vunpack.c.0.s8 %v4324
    %v4326 = vperm.slane %v4318, %v4325
    %v4327 = vrot.slane %v4322, 4
    %v4328 = vsel %vm63, 0, %v4327
    %v4329 = vrot.slane %v4326, 4
    %v4330 = vsel %vm63, 0, %v4329
    %v4332 = vunpack.c.l.b16 %v4270
    %v4333 = vpack.c.b16 %v4332, %v4332
    %4334 = vrot.lane.b32.xlu0 %v4333, 16
    %v4335 = vpop.permute.xlu0 %4334
    %v4337 = vunpack.c.l.b16 %v4250
    %v4338 = vpack.c.b16 %v4337, %v4337
    %4339 = vrot.lane.b32.xlu0 %v4338, 32
    %v4340 = vpop.permute.xlu0 %4339
    %v4342 = vunpack.c.l.b16 %v4276
    %v4343 = vpack.c.b16 %v4342, %v4342
    %4344 = vrot.lane.b32.xlu0 %v4343, 48
    %v4345 = vpop.permute.xlu0 %4344
    %v4347 = vunpack.c.l.b16 %v4248
    %v4348 = vpack.c.b16 %v4347, %v4347
    %4349 = vrot.lane.b32.xlu0 %v4348, 64
    %v4350 = vpop.permute.xlu0 %4349
    %v4352 = vunpack.c.l.b16 %v4274
    %v4353 = vpack.c.b16 %v4352, %v4352
    %4354 = vrot.lane.b32.xlu0 %v4353, 80
    %v4355 = vpop.permute.xlu0 %4354
    %v4357 = vunpack.c.l.b16 %v4252
    %v4358 = vpack.c.b16 %v4357, %v4357
    %4359 = vrot.lane.b32.xlu0 %v4358, 96
    %v4360 = vpop.permute.xlu0 %4359
    %v4362 = vunpack.c.l.b16 %v4278
    %v4363 = vpack.c.b16 %v4362, %v4362
    %4364 = vrot.lane.b32.xlu0 %v4363, 112
    %v4365 = vpop.permute.xlu0 %4364
    %v4367 = vunpack.c.l.b16 %v4322
    %v4368 = vpack.c.b16 %v4367, %v4367
    %4369 = vrot.lane.b32.xlu0 %v4368, 16
    %v4370 = vpop.permute.xlu0 %4369
    %v4372 = vunpack.c.l.b16 %v4302
    %v4373 = vpack.c.b16 %v4372, %v4372
    %4374 = vrot.lane.b32.xlu0 %v4373, 32
    %v4375 = vpop.permute.xlu0 %4374
    %v4377 = vunpack.c.l.b16 %v4328
    %v4378 = vpack.c.b16 %v4377, %v4377
    %4379 = vrot.lane.b32.xlu0 %v4378, 48
    %v4380 = vpop.permute.xlu0 %4379
    %v4382 = vunpack.c.l.b16 %v4300
    %v4383 = vpack.c.b16 %v4382, %v4382
    %4384 = vrot.lane.b32.xlu0 %v4383, 64
    %v4385 = vpop.permute.xlu0 %4384
    %v4387 = vunpack.c.l.b16 %v4326
    %v4388 = vpack.c.b16 %v4387, %v4387
    %4389 = vrot.lane.b32.xlu0 %v4388, 80
    %v4390 = vpop.permute.xlu0 %4389
    %v4392 = vunpack.c.l.b16 %v4304
    %v4393 = vpack.c.b16 %v4392, %v4392
    %4394 = vrot.lane.b32.xlu0 %v4393, 96
    %v4395 = vpop.permute.xlu0 %4394
    %v4397 = vunpack.c.l.b16 %v4330
    %v4398 = vpack.c.b16 %v4397, %v4397
    %4399 = vrot.lane.b32.xlu0 %v4398, 112
    %v4400 = vpop.permute.xlu0 %4399
    %v4403 = vsel %vm227, %v4244, %v4335
    %v4405 = vsel %vm231, %v4403, %v4340
    %v4407 = vsel %vm234, %v4405, %v4345
    %v4409 = vsel %vm237, %v4407, %v4350
    %v4411 = vsel %vm240, %v4409, %v4355
    %v4413 = vsel %vm243, %v4411, %v4360
    %v4415 = vsel %vm246, %v4413, %v4365
    %v4418 = vsel %vm227, %v4296, %v4370
    %v4420 = vsel %vm231, %v4418, %v4375
    %v4422 = vsel %vm234, %v4420, %v4380
    %v4424 = vsel %vm237, %v4422, %v4385
    %v4426 = vsel %vm240, %v4424, %v4390
    %v4428 = vsel %vm243, %v4426, %v4395
    %v4430 = vsel %vm246, %v4428, %v4400
    %v4435 = vrot.slane %v2899, 5
    %v4436 = vrot.slane %v4435, 4
    %v4437 = vrot.slane %v2900, 5
    %v4438 = vsel %vm1565, %v4436, %v4437
    %v4439 = vrot.slane %v4437, 4
    %v4440 = vrot.slane %v2901, 5
    %v4441 = vsel %vm1565, %v4439, %v4440
    %v4442 = vrot.slane %v2902, 5
    %v4443 = vrot.slane %v4442, 4
    %v4444 = vrot.slane %v2903, 5
    %v4445 = vsel %vm1565, %v4443, %v4444
    %v4446 = vrot.slane %v4444, 4
    %v4447 = vrot.slane %v2904, 5
    %v4448 = vsel %vm1565, %v4446, %v4447
    %v4449 = vrot.slane %v2905, 5
    %v4450 = vrot.slane %v4449, 4
    %v4451 = vrot.slane %v2906, 5
    %v4452 = vsel %vm1565, %v4450, %v4451
    %v4453 = vrot.slane %v4451, 4
    %v4454 = vrot.slane %v2907, 5
    %v4455 = vsel %vm1565, %v4453, %v4454
    %v4456 = vrot.slane %v2908, 5
    %v4457 = vrot.slane %v4456, 4
    %v4458 = vrot.slane %v2909, 5
    %v4459 = vsel %vm1565, %v4457, %v4458
    %v4460 = vrot.slane %v4458, 4
    %v4461 = vrot.slane %v2910, 5
    %v4462 = vsel %vm1565, %v4460, %v4461
    %v4465 = vpack.i.b16 %v4445, %v4438
    %v4466 = vshrl.u32 %v4438, 16
    %v4467 = vshrl.u32 %v4445, 16
    %v4468 = vpack.i.b16 %v4467, %v4466
    %v4471 = vpack.i.b16 %v4459, %v4452
    %v4472 = vshrl.u32 %v4452, 16
    %v4473 = vshrl.u32 %v4459, 16
    %v4474 = vpack.i.b16 %v4473, %v4472
    %v4477 = vpack.i.b16 %v4448, %v4441
    %v4478 = vshrl.u32 %v4441, 16
    %v4479 = vshrl.u32 %v4448, 16
    %v4480 = vpack.i.b16 %v4479, %v4478
    %v4483 = vpack.i.b16 %v4462, %v4455
    %v4484 = vshrl.u32 %v4455, 16
    %v4485 = vshrl.u32 %v4462, 16
    %v4486 = vpack.i.b16 %v4485, %v4484
    %v4489 = vunpack.c.l.s4 1983009808
    %v4490 = vunpack.c.0.s8 %v4489
    %v4491 = vperm.slane %v4465, %v4490
    %v4494 = vunpack.c.l.s4 1983009808
    %v4495 = vunpack.c.0.s8 %v4494
    %v4496 = vperm.slane %v4471, %v4495
    %v4497 = vrot.slane %v4496, 4
    %v4498 = vsel %vm63, %v4497, %v4491
    %v4499 = vrot.slane %v4491, 4
    %v4500 = vsel %vm63, %v4496, %v4499
    %v4502 = vunpack.c.l.s4 1934713408
    %v4503 = vunpack.c.0.s8 %v4502
    %v4504 = vperm.slane %v4498, %v4503
    %v4506 = vunpack.c.l.s4 1934713408
    %v4507 = vunpack.c.0.s8 %v4506
    %v4508 = vperm.slane %v4500, %v4507
    %v4509 = vrot.slane %v4504, 4
    %v4510 = vsel %vm63, 0, %v4509
    %v4511 = vrot.slane %v4508, 4
    %v4512 = vsel %vm63, 0, %v4511
    %v4515 = vunpack.c.l.s4 1983009808
    %v4516 = vunpack.c.0.s8 %v4515
    %v4517 = vperm.slane %v4468, %v4516
    %v4520 = vunpack.c.l.s4 1983009808
    %v4521 = vunpack.c.0.s8 %v4520
    %v4522 = vperm.slane %v4474, %v4521
    %v4523 = vrot.slane %v4522, 4
    %v4524 = vsel %vm63, %v4523, %v4517
    %v4525 = vrot.slane %v4517, 4
    %v4526 = vsel %vm63, %v4522, %v4525
    %v4528 = vunpack.c.l.s4 1934713408
    %v4529 = vunpack.c.0.s8 %v4528
    %v4530 = vperm.slane %v4524, %v4529
    %v4532 = vunpack.c.l.s4 1934713408
    %v4533 = vunpack.c.0.s8 %v4532
    %v4534 = vperm.slane %v4526, %v4533
    %v4535 = vrot.slane %v4530, 4
    %v4536 = vsel %vm63, 0, %v4535
    %v4537 = vrot.slane %v4534, 4
    %v4538 = vsel %vm63, 0, %v4537
    %v4541 = vunpack.c.l.s4 1983009808
    %v4542 = vunpack.c.0.s8 %v4541
    %v4543 = vperm.slane %v4477, %v4542
    %v4546 = vunpack.c.l.s4 1983009808
    %v4547 = vunpack.c.0.s8 %v4546
    %v4548 = vperm.slane %v4483, %v4547
    %v4549 = vrot.slane %v4548, 4
    %v4550 = vsel %vm63, %v4549, %v4543
    %v4551 = vrot.slane %v4543, 4
    %v4552 = vsel %vm63, %v4548, %v4551
    %v4554 = vunpack.c.l.s4 1934713408
    %v4555 = vunpack.c.0.s8 %v4554
    %v4556 = vperm.slane %v4550, %v4555
    %v4558 = vunpack.c.l.s4 1934713408
    %v4559 = vunpack.c.0.s8 %v4558
    %v4560 = vperm.slane %v4552, %v4559
    %v4561 = vrot.slane %v4556, 4
    %v4562 = vsel %vm63, 0, %v4561
    %v4563 = vrot.slane %v4560, 4
    %v4564 = vsel %vm63, 0, %v4563
    %v4567 = vunpack.c.l.s4 1983009808
    %v4568 = vunpack.c.0.s8 %v4567
    %v4569 = vperm.slane %v4480, %v4568
    %v4572 = vunpack.c.l.s4 1983009808
    %v4573 = vunpack.c.0.s8 %v4572
    %v4574 = vperm.slane %v4486, %v4573
    %v4575 = vrot.slane %v4574, 4
    %v4576 = vsel %vm63, %v4575, %v4569
    %v4577 = vrot.slane %v4569, 4
    %v4578 = vsel %vm63, %v4574, %v4577
    %v4580 = vunpack.c.l.s4 1934713408
    %v4581 = vunpack.c.0.s8 %v4580
    %v4582 = vperm.slane %v4576, %v4581
    %v4584 = vunpack.c.l.s4 1934713408
    %v4585 = vunpack.c.0.s8 %v4584
    %v4586 = vperm.slane %v4578, %v4585
    %v4587 = vrot.slane %v4582, 4
    %v4588 = vsel %vm63, 0, %v4587
    %v4589 = vrot.slane %v4586, 4
    %v4590 = vsel %vm63, 0, %v4589
    %v4592 = vunpack.c.l.b16 %v4530
    %v4593 = vpack.c.b16 %v4592, %v4592
    %4594 = vrot.lane.b32.xlu0 %v4593, 16
    %v4595 = vpop.permute.xlu0 %4594
    %v4597 = vunpack.c.l.b16 %v4510
    %v4598 = vpack.c.b16 %v4597, %v4597
    %4599 = vrot.lane.b32.xlu0 %v4598, 32
    %v4600 = vpop.permute.xlu0 %4599
    %v4602 = vunpack.c.l.b16 %v4536
    %v4603 = vpack.c.b16 %v4602, %v4602
    %4604 = vrot.lane.b32.xlu0 %v4603, 48
    %v4605 = vpop.permute.xlu0 %4604
    %v4607 = vunpack.c.l.b16 %v4508
    %v4608 = vpack.c.b16 %v4607, %v4607
    %4609 = vrot.lane.b32.xlu0 %v4608, 64
    %v4610 = vpop.permute.xlu0 %4609
    %v4612 = vunpack.c.l.b16 %v4534
    %v4613 = vpack.c.b16 %v4612, %v4612
    %4614 = vrot.lane.b32.xlu0 %v4613, 80
    %v4615 = vpop.permute.xlu0 %4614
    %v4617 = vunpack.c.l.b16 %v4512
    %v4618 = vpack.c.b16 %v4617, %v4617
    %4619 = vrot.lane.b32.xlu0 %v4618, 96
    %v4620 = vpop.permute.xlu0 %4619
    %v4622 = vunpack.c.l.b16 %v4538
    %v4623 = vpack.c.b16 %v4622, %v4622
    %4624 = vrot.lane.b32.xlu0 %v4623, 112
    %v4625 = vpop.permute.xlu0 %4624
    %v4627 = vunpack.c.l.b16 %v4582
    %v4628 = vpack.c.b16 %v4627, %v4627
    %4629 = vrot.lane.b32.xlu0 %v4628, 16
    %v4630 = vpop.permute.xlu0 %4629
    %v4632 = vunpack.c.l.b16 %v4562
    %v4633 = vpack.c.b16 %v4632, %v4632
    %4634 = vrot.lane.b32.xlu0 %v4633, 32
    %v4635 = vpop.permute.xlu0 %4634
    %v4637 = vunpack.c.l.b16 %v4588
    %v4638 = vpack.c.b16 %v4637, %v4637
    %4639 = vrot.lane.b32.xlu0 %v4638, 48
    %v4640 = vpop.permute.xlu0 %4639
    %v4642 = vunpack.c.l.b16 %v4560
    %v4643 = vpack.c.b16 %v4642, %v4642
    %4644 = vrot.lane.b32.xlu0 %v4643, 64
    %v4645 = vpop.permute.xlu0 %4644
    %v4647 = vunpack.c.l.b16 %v4586
    %v4648 = vpack.c.b16 %v4647, %v4647
    %4649 = vrot.lane.b32.xlu0 %v4648, 80
    %v4650 = vpop.permute.xlu0 %4649
    %v4652 = vunpack.c.l.b16 %v4564
    %v4653 = vpack.c.b16 %v4652, %v4652
    %4654 = vrot.lane.b32.xlu0 %v4653, 96
    %v4655 = vpop.permute.xlu0 %4654
    %v4657 = vunpack.c.l.b16 %v4590
    %v4658 = vpack.c.b16 %v4657, %v4657
    %4659 = vrot.lane.b32.xlu0 %v4658, 112
    %v4660 = vpop.permute.xlu0 %4659
    %v4663 = vsel %vm227, %v4504, %v4595
    %v4665 = vsel %vm231, %v4663, %v4600
    %v4667 = vsel %vm234, %v4665, %v4605
    %v4669 = vsel %vm237, %v4667, %v4610
    %v4671 = vsel %vm240, %v4669, %v4615
    %v4673 = vsel %vm243, %v4671, %v4620
    %v4675 = vsel %vm246, %v4673, %v4625
    %v4678 = vsel %vm227, %v4556, %v4630
    %v4680 = vsel %vm231, %v4678, %v4635
    %v4682 = vsel %vm234, %v4680, %v4640
    %v4684 = vsel %vm237, %v4682, %v4645
    %v4686 = vsel %vm240, %v4684, %v4650
    %v4688 = vsel %vm243, %v4686, %v4655
    %v4690 = vsel %vm246, %v4688, %v4660
    %4691 = vrot.lane.b32.xlu0 %v4438, 127
    %v4692 = vpop.permute.xlu0 %4691
    %4693 = vrot.lane.b32.xlu0 %v4441, 127
    %v4694 = vpop.permute.xlu0 %4693
    %4695 = vrot.lane.b32.xlu0 %v4445, 127
    %v4696 = vpop.permute.xlu0 %4695
    %4697 = vrot.lane.b32.xlu0 %v4448, 127
    %v4698 = vpop.permute.xlu0 %4697
    %4699 = vrot.lane.b32.xlu0 %v4452, 127
    %v4700 = vpop.permute.xlu0 %4699
    %4701 = vrot.lane.b32.xlu0 %v4455, 127
    %v4702 = vpop.permute.xlu0 %4701
    %4703 = vrot.lane.b32.xlu0 %v4459, 127
    %v4704 = vpop.permute.xlu0 %4703
    %4705 = vrot.lane.b32.xlu0 %v4462, 127
    %v4706 = vpop.permute.xlu0 %4705
    %v4709 = vpack.i.b16 %v4696, %v4692
    %v4710 = vshrl.u32 %v4692, 16
    %v4711 = vshrl.u32 %v4696, 16
    %v4712 = vpack.i.b16 %v4711, %v4710
    %v4715 = vpack.i.b16 %v4704, %v4700
    %v4716 = vshrl.u32 %v4700, 16
    %v4717 = vshrl.u32 %v4704, 16
    %v4718 = vpack.i.b16 %v4717, %v4716
    %v4721 = vpack.i.b16 %v4698, %v4694
    %v4722 = vshrl.u32 %v4694, 16
    %v4723 = vshrl.u32 %v4698, 16
    %v4724 = vpack.i.b16 %v4723, %v4722
    %v4727 = vpack.i.b16 %v4706, %v4702
    %v4728 = vshrl.u32 %v4702, 16
    %v4729 = vshrl.u32 %v4706, 16
    %v4730 = vpack.i.b16 %v4729, %v4728
    %v4733 = vunpack.c.l.s4 1983009808
    %v4734 = vunpack.c.0.s8 %v4733
    %v4735 = vperm.slane %v4709, %v4734
    %v4738 = vunpack.c.l.s4 1983009808
    %v4739 = vunpack.c.0.s8 %v4738
    %v4740 = vperm.slane %v4715, %v4739
    %v4741 = vrot.slane %v4740, 4
    %v4742 = vsel %vm63, %v4741, %v4735
    %v4743 = vrot.slane %v4735, 4
    %v4744 = vsel %vm63, %v4740, %v4743
    %v4746 = vunpack.c.l.s4 1934713408
    %v4747 = vunpack.c.0.s8 %v4746
    %v4748 = vperm.slane %v4742, %v4747
    %v4750 = vunpack.c.l.s4 1934713408
    %v4751 = vunpack.c.0.s8 %v4750
    %v4752 = vperm.slane %v4744, %v4751
    %v4753 = vrot.slane %v4748, 4
    %v4754 = vsel %vm63, 0, %v4753
    %v4755 = vrot.slane %v4752, 4
    %v4756 = vsel %vm63, 0, %v4755
    %v4759 = vunpack.c.l.s4 1983009808
    %v4760 = vunpack.c.0.s8 %v4759
    %v4761 = vperm.slane %v4712, %v4760
    %v4764 = vunpack.c.l.s4 1983009808
    %v4765 = vunpack.c.0.s8 %v4764
    %v4766 = vperm.slane %v4718, %v4765
    %v4767 = vrot.slane %v4766, 4
    %v4768 = vsel %vm63, %v4767, %v4761
    %v4769 = vrot.slane %v4761, 4
    %v4770 = vsel %vm63, %v4766, %v4769
    %v4772 = vunpack.c.l.s4 1934713408
    %v4773 = vunpack.c.0.s8 %v4772
    %v4774 = vperm.slane %v4768, %v4773
    %v4776 = vunpack.c.l.s4 1934713408
    %v4777 = vunpack.c.0.s8 %v4776
    %v4778 = vperm.slane %v4770, %v4777
    %v4779 = vrot.slane %v4774, 4
    %v4780 = vsel %vm63, 0, %v4779
    %v4781 = vrot.slane %v4778, 4
    %v4782 = vsel %vm63, 0, %v4781
    %v4785 = vunpack.c.l.s4 1983009808
    %v4786 = vunpack.c.0.s8 %v4785
    %v4787 = vperm.slane %v4721, %v4786
    %v4790 = vunpack.c.l.s4 1983009808
    %v4791 = vunpack.c.0.s8 %v4790
    %v4792 = vperm.slane %v4727, %v4791
    %v4793 = vrot.slane %v4792, 4
    %v4794 = vsel %vm63, %v4793, %v4787
    %v4795 = vrot.slane %v4787, 4
    %v4796 = vsel %vm63, %v4792, %v4795
    %v4798 = vunpack.c.l.s4 1934713408
    %v4799 = vunpack.c.0.s8 %v4798
    %v4800 = vperm.slane %v4794, %v4799
    %v4802 = vunpack.c.l.s4 1934713408
    %v4803 = vunpack.c.0.s8 %v4802
    %v4804 = vperm.slane %v4796, %v4803
    %v4805 = vrot.slane %v4800, 4
    %v4806 = vsel %vm63, 0, %v4805
    %v4807 = vrot.slane %v4804, 4
    %v4808 = vsel %vm63, 0, %v4807
    %v4811 = vunpack.c.l.s4 1983009808
    %v4812 = vunpack.c.0.s8 %v4811
    %v4813 = vperm.slane %v4724, %v4812
    %v4816 = vunpack.c.l.s4 1983009808
    %v4817 = vunpack.c.0.s8 %v4816
    %v4818 = vperm.slane %v4730, %v4817
    %v4819 = vrot.slane %v4818, 4
    %v4820 = vsel %vm63, %v4819, %v4813
    %v4821 = vrot.slane %v4813, 4
    %v4822 = vsel %vm63, %v4818, %v4821
    %v4824 = vunpack.c.l.s4 1934713408
    %v4825 = vunpack.c.0.s8 %v4824
    %v4826 = vperm.slane %v4820, %v4825
    %v4828 = vunpack.c.l.s4 1934713408
    %v4829 = vunpack.c.0.s8 %v4828
    %v4830 = vperm.slane %v4822, %v4829
    %v4831 = vrot.slane %v4826, 4
    %v4832 = vsel %vm63, 0, %v4831
    %v4833 = vrot.slane %v4830, 4
    %v4834 = vsel %vm63, 0, %v4833
    %v4836 = vunpack.c.l.b16 %v4774
    %v4837 = vpack.c.b16 %v4836, %v4836
    %4838 = vrot.lane.b32.xlu0 %v4837, 16
    %v4839 = vpop.permute.xlu0 %4838
    %v4841 = vunpack.c.l.b16 %v4754
    %v4842 = vpack.c.b16 %v4841, %v4841
    %4843 = vrot.lane.b32.xlu0 %v4842, 32
    %v4844 = vpop.permute.xlu0 %4843
    %v4846 = vunpack.c.l.b16 %v4780
    %v4847 = vpack.c.b16 %v4846, %v4846
    %4848 = vrot.lane.b32.xlu0 %v4847, 48
    %v4849 = vpop.permute.xlu0 %4848
    %v4851 = vunpack.c.l.b16 %v4752
    %v4852 = vpack.c.b16 %v4851, %v4851
    %4853 = vrot.lane.b32.xlu0 %v4852, 64
    %v4854 = vpop.permute.xlu0 %4853
    %v4856 = vunpack.c.l.b16 %v4778
    %v4857 = vpack.c.b16 %v4856, %v4856
    %4858 = vrot.lane.b32.xlu0 %v4857, 80
    %v4859 = vpop.permute.xlu0 %4858
    %v4861 = vunpack.c.l.b16 %v4756
    %v4862 = vpack.c.b16 %v4861, %v4861
    %4863 = vrot.lane.b32.xlu0 %v4862, 96
    %v4864 = vpop.permute.xlu0 %4863
    %v4866 = vunpack.c.l.b16 %v4782
    %v4867 = vpack.c.b16 %v4866, %v4866
    %4868 = vrot.lane.b32.xlu0 %v4867, 112
    %v4869 = vpop.permute.xlu0 %4868
    %v4871 = vunpack.c.l.b16 %v4826
    %v4872 = vpack.c.b16 %v4871, %v4871
    %4873 = vrot.lane.b32.xlu0 %v4872, 16
    %v4874 = vpop.permute.xlu0 %4873
    %v4876 = vunpack.c.l.b16 %v4806
    %v4877 = vpack.c.b16 %v4876, %v4876
    %4878 = vrot.lane.b32.xlu0 %v4877, 32
    %v4879 = vpop.permute.xlu0 %4878
    %v4881 = vunpack.c.l.b16 %v4832
    %v4882 = vpack.c.b16 %v4881, %v4881
    %4883 = vrot.lane.b32.xlu0 %v4882, 48
    %v4884 = vpop.permute.xlu0 %4883
    %v4886 = vunpack.c.l.b16 %v4804
    %v4887 = vpack.c.b16 %v4886, %v4886
    %4888 = vrot.lane.b32.xlu0 %v4887, 64
    %v4889 = vpop.permute.xlu0 %4888
    %v4891 = vunpack.c.l.b16 %v4830
    %v4892 = vpack.c.b16 %v4891, %v4891
    %4893 = vrot.lane.b32.xlu0 %v4892, 80
    %v4894 = vpop.permute.xlu0 %4893
    %v4896 = vunpack.c.l.b16 %v4808
    %v4897 = vpack.c.b16 %v4896, %v4896
    %4898 = vrot.lane.b32.xlu0 %v4897, 96
    %v4899 = vpop.permute.xlu0 %4898
    %v4901 = vunpack.c.l.b16 %v4834
    %v4902 = vpack.c.b16 %v4901, %v4901
    %4903 = vrot.lane.b32.xlu0 %v4902, 112
    %v4904 = vpop.permute.xlu0 %4903
    %v4907 = vsel %vm227, %v4748, %v4839
    %v4909 = vsel %vm231, %v4907, %v4844
    %v4911 = vsel %vm234, %v4909, %v4849
    %v4913 = vsel %vm237, %v4911, %v4854
    %v4915 = vsel %vm240, %v4913, %v4859
    %v4917 = vsel %vm243, %v4915, %v4864
    %v4919 = vsel %vm246, %v4917, %v4869
    %v4922 = vsel %vm227, %v4800, %v4874
    %v4924 = vsel %vm231, %v4922, %v4879
    %v4926 = vsel %vm234, %v4924, %v4884
    %v4928 = vsel %vm237, %v4926, %v4889
    %v4930 = vsel %vm240, %v4928, %v4894
    %v4932 = vsel %vm243, %v4930, %v4899
    %v4934 = vsel %vm246, %v4932, %v4904
    %4935 = vrot.lane.b32.xlu0 %v4438, 126
    %v4936 = vpop.permute.xlu0 %4935
    %4937 = vrot.lane.b32.xlu0 %v4441, 126
    %v4938 = vpop.permute.xlu0 %4937
    %4939 = vrot.lane.b32.xlu0 %v4445, 126
    %v4940 = vpop.permute.xlu0 %4939
    %4941 = vrot.lane.b32.xlu0 %v4448, 126
    %v4942 = vpop.permute.xlu0 %4941
    %4943 = vrot.lane.b32.xlu0 %v4452, 126
    %v4944 = vpop.permute.xlu0 %4943
    %4945 = vrot.lane.b32.xlu0 %v4455, 126
    %v4946 = vpop.permute.xlu0 %4945
    %4947 = vrot.lane.b32.xlu0 %v4459, 126
    %v4948 = vpop.permute.xlu0 %4947
    %4949 = vrot.lane.b32.xlu0 %v4462, 126
    %v4950 = vpop.permute.xlu0 %4949
    %v4953 = vpack.i.b16 %v4940, %v4936
    %v4954 = vshrl.u32 %v4936, 16
    %v4955 = vshrl.u32 %v4940, 16
    %v4956 = vpack.i.b16 %v4955, %v4954
    %v4959 = vpack.i.b16 %v4948, %v4944
    %v4960 = vshrl.u32 %v4944, 16
    %v4961 = vshrl.u32 %v4948, 16
    %v4962 = vpack.i.b16 %v4961, %v4960
    %v4965 = vpack.i.b16 %v4942, %v4938
    %v4966 = vshrl.u32 %v4938, 16
    %v4967 = vshrl.u32 %v4942, 16
    %v4968 = vpack.i.b16 %v4967, %v4966
    %v4971 = vpack.i.b16 %v4950, %v4946
    %v4972 = vshrl.u32 %v4946, 16
    %v4973 = vshrl.u32 %v4950, 16
    %v4974 = vpack.i.b16 %v4973, %v4972
    %v4977 = vunpack.c.l.s4 1983009808
    %v4978 = vunpack.c.0.s8 %v4977
    %v4979 = vperm.slane %v4953, %v4978
    %v4982 = vunpack.c.l.s4 1983009808
    %v4983 = vunpack.c.0.s8 %v4982
    %v4984 = vperm.slane %v4959, %v4983
    %v4985 = vrot.slane %v4984, 4
    %v4986 = vsel %vm63, %v4985, %v4979
    %v4987 = vrot.slane %v4979, 4
    %v4988 = vsel %vm63, %v4984, %v4987
    %v4990 = vunpack.c.l.s4 1934713408
    %v4991 = vunpack.c.0.s8 %v4990
    %v4992 = vperm.slane %v4986, %v4991
    %v4994 = vunpack.c.l.s4 1934713408
    %v4995 = vunpack.c.0.s8 %v4994
    %v4996 = vperm.slane %v4988, %v4995
    %v4997 = vrot.slane %v4992, 4
    %v4998 = vsel %vm63, 0, %v4997
    %v4999 = vrot.slane %v4996, 4
    %v5000 = vsel %vm63, 0, %v4999
    %v5003 = vunpack.c.l.s4 1983009808
    %v5004 = vunpack.c.0.s8 %v5003
    %v5005 = vperm.slane %v4956, %v5004
    %v5008 = vunpack.c.l.s4 1983009808
    %v5009 = vunpack.c.0.s8 %v5008
    %v5010 = vperm.slane %v4962, %v5009
    %v5011 = vrot.slane %v5010, 4
    %v5012 = vsel %vm63, %v5011, %v5005
    %v5013 = vrot.slane %v5005, 4
    %v5014 = vsel %vm63, %v5010, %v5013
    %v5016 = vunpack.c.l.s4 1934713408
    %v5017 = vunpack.c.0.s8 %v5016
    %v5018 = vperm.slane %v5012, %v5017
    %v5020 = vunpack.c.l.s4 1934713408
    %v5021 = vunpack.c.0.s8 %v5020
    %v5022 = vperm.slane %v5014, %v5021
    %v5023 = vrot.slane %v5018, 4
    %v5024 = vsel %vm63, 0, %v5023
    %v5025 = vrot.slane %v5022, 4
    %v5026 = vsel %vm63, 0, %v5025
    %v5029 = vunpack.c.l.s4 1983009808
    %v5030 = vunpack.c.0.s8 %v5029
    %v5031 = vperm.slane %v4965, %v5030
    %v5034 = vunpack.c.l.s4 1983009808
    %v5035 = vunpack.c.0.s8 %v5034
    %v5036 = vperm.slane %v4971, %v5035
    %v5037 = vrot.slane %v5036, 4
    %v5038 = vsel %vm63, %v5037, %v5031
    %v5039 = vrot.slane %v5031, 4
    %v5040 = vsel %vm63, %v5036, %v5039
    %v5042 = vunpack.c.l.s4 1934713408
    %v5043 = vunpack.c.0.s8 %v5042
    %v5044 = vperm.slane %v5038, %v5043
    %v5046 = vunpack.c.l.s4 1934713408
    %v5047 = vunpack.c.0.s8 %v5046
    %v5048 = vperm.slane %v5040, %v5047
    %v5049 = vrot.slane %v5044, 4
    %v5050 = vsel %vm63, 0, %v5049
    %v5051 = vrot.slane %v5048, 4
    %v5052 = vsel %vm63, 0, %v5051
    %v5055 = vunpack.c.l.s4 1983009808
    %v5056 = vunpack.c.0.s8 %v5055
    %v5057 = vperm.slane %v4968, %v5056
    %v5060 = vunpack.c.l.s4 1983009808
    %v5061 = vunpack.c.0.s8 %v5060
    %v5062 = vperm.slane %v4974, %v5061
    %v5063 = vrot.slane %v5062, 4
    %v5064 = vsel %vm63, %v5063, %v5057
    %v5065 = vrot.slane %v5057, 4
    %v5066 = vsel %vm63, %v5062, %v5065
    %v5068 = vunpack.c.l.s4 1934713408
    %v5069 = vunpack.c.0.s8 %v5068
    %v5070 = vperm.slane %v5064, %v5069
    %v5072 = vunpack.c.l.s4 1934713408
    %v5073 = vunpack.c.0.s8 %v5072
    %v5074 = vperm.slane %v5066, %v5073
    %v5075 = vrot.slane %v5070, 4
    %v5076 = vsel %vm63, 0, %v5075
    %v5077 = vrot.slane %v5074, 4
    %v5078 = vsel %vm63, 0, %v5077
    %v5080 = vunpack.c.l.b16 %v5018
    %v5081 = vpack.c.b16 %v5080, %v5080
    %5082 = vrot.lane.b32.xlu0 %v5081, 16
    %v5083 = vpop.permute.xlu0 %5082
    %v5085 = vunpack.c.l.b16 %v4998
    %v5086 = vpack.c.b16 %v5085, %v5085
    %5087 = vrot.lane.b32.xlu0 %v5086, 32
    %v5088 = vpop.permute.xlu0 %5087
    %v5090 = vunpack.c.l.b16 %v5024
    %v5091 = vpack.c.b16 %v5090, %v5090
    %5092 = vrot.lane.b32.xlu0 %v5091, 48
    %v5093 = vpop.permute.xlu0 %5092
    %v5095 = vunpack.c.l.b16 %v4996
    %v5096 = vpack.c.b16 %v5095, %v5095
    %5097 = vrot.lane.b32.xlu0 %v5096, 64
    %v5098 = vpop.permute.xlu0 %5097
    %v5100 = vunpack.c.l.b16 %v5022
    %v5101 = vpack.c.b16 %v5100, %v5100
    %5102 = vrot.lane.b32.xlu0 %v5101, 80
    %v5103 = vpop.permute.xlu0 %5102
    %v5105 = vunpack.c.l.b16 %v5000
    %v5106 = vpack.c.b16 %v5105, %v5105
    %5107 = vrot.lane.b32.xlu0 %v5106, 96
    %v5108 = vpop.permute.xlu0 %5107
    %v5110 = vunpack.c.l.b16 %v5026
    %v5111 = vpack.c.b16 %v5110, %v5110
    %5112 = vrot.lane.b32.xlu0 %v5111, 112
    %v5113 = vpop.permute.xlu0 %5112
    %v5115 = vunpack.c.l.b16 %v5070
    %v5116 = vpack.c.b16 %v5115, %v5115
    %5117 = vrot.lane.b32.xlu0 %v5116, 16
    %v5118 = vpop.permute.xlu0 %5117
    %v5120 = vunpack.c.l.b16 %v5050
    %v5121 = vpack.c.b16 %v5120, %v5120
    %5122 = vrot.lane.b32.xlu0 %v5121, 32
    %v5123 = vpop.permute.xlu0 %5122
    %v5125 = vunpack.c.l.b16 %v5076
    %v5126 = vpack.c.b16 %v5125, %v5125
    %5127 = vrot.lane.b32.xlu0 %v5126, 48
    %v5128 = vpop.permute.xlu0 %5127
    %v5130 = vunpack.c.l.b16 %v5048
    %v5131 = vpack.c.b16 %v5130, %v5130
    %5132 = vrot.lane.b32.xlu0 %v5131, 64
    %v5133 = vpop.permute.xlu0 %5132
    %v5135 = vunpack.c.l.b16 %v5074
    %v5136 = vpack.c.b16 %v5135, %v5135
    %5137 = vrot.lane.b32.xlu0 %v5136, 80
    %v5138 = vpop.permute.xlu0 %5137
    %v5140 = vunpack.c.l.b16 %v5052
    %v5141 = vpack.c.b16 %v5140, %v5140
    %5142 = vrot.lane.b32.xlu0 %v5141, 96
    %v5143 = vpop.permute.xlu0 %5142
    %v5145 = vunpack.c.l.b16 %v5078
    %v5146 = vpack.c.b16 %v5145, %v5145
    %5147 = vrot.lane.b32.xlu0 %v5146, 112
    %v5148 = vpop.permute.xlu0 %5147
    %v5151 = vsel %vm227, %v4992, %v5083
    %v5153 = vsel %vm231, %v5151, %v5088
    %v5155 = vsel %vm234, %v5153, %v5093
    %v5157 = vsel %vm237, %v5155, %v5098
    %v5159 = vsel %vm240, %v5157, %v5103
    %v5161 = vsel %vm243, %v5159, %v5108
    %v5163 = vsel %vm246, %v5161, %v5113
    %v5166 = vsel %vm227, %v5044, %v5118
    %v5168 = vsel %vm231, %v5166, %v5123
    %v5170 = vsel %vm234, %v5168, %v5128
    %v5172 = vsel %vm237, %v5170, %v5133
    %v5174 = vsel %vm240, %v5172, %v5138
    %v5176 = vsel %vm243, %v5174, %v5143
    %v5178 = vsel %vm246, %v5176, %v5148
    %v5179 = vld [vmem:[%s1] sm:$0xf]
    %v5180 = vld [vmem:[%s2311] sm:$0xf]
    %v5182 = vsel %vm2313, %v5180, 0
    %v5184 = vsel %vm2317, %v3375, 0
    %v5186 = vsel %vm2317, %v3390, 0
    %5188 = vmatpush.bf16.msra.mxu0 0
    %5189 = vmatpush.bf16.msra.mxu0 0
    %5190 = vmatpush.bf16.msra.mxu0 0
    %5191 = vmatpush.bf16.msra.mxu0 0
    %5192 = vmatpush.bf16.msra.mxu0 0
    %5193 = vmatpush.bf16.msra.mxu0 0
    %5194 = vmatpush.bf16.msra.mxu0 0
    %5195 = vmatpush.bf16.msra.mxu0 %v5184
    %5196 = vmatmul.bf16.gmra.mxu0 %v5182
    %v5197 = vpop.f32.mrf.mxu0
    %v5198 = vadd.f32 0.0, %v5197
    %v5199 = vpop.f32.mrf.mxu0
    %5200 = vdwg.mxu0
    %5201 = vmatpush.bf16.msra.mxu0 0
    %5202 = vmatpush.bf16.msra.mxu0 0
    %5203 = vmatpush.bf16.msra.mxu0 0
    %5204 = vmatpush.bf16.msra.mxu0 0
    %5205 = vmatpush.bf16.msra.mxu0 0
    %5206 = vmatpush.bf16.msra.mxu0 0
    %5207 = vmatpush.bf16.msra.mxu0 0
    %5208 = vmatpush.bf16.msra.mxu0 %v5186
    %5209 = vmatmul.bf16.gmra.mxu0 %v5182
    %v5210 = vpop.f32.mrf.mxu0
    %v5211 = vadd.f32 0.0, %v5210
    %v5212 = vpop.f32.mrf.mxu0
    %5213 = vdwg.mxu0
    %v5215 = vsel %vm2313, %v5179, 0
    %v5217 = vsel %vm2317, %v3123, 0
    %v5219 = vsel %vm2317, %v3138, 0
    %5221 = vmatpush.bf16.msra.mxu0 0
    %5222 = vmatpush.bf16.msra.mxu0 0
    %5223 = vmatpush.bf16.msra.mxu0 0
    %5224 = vmatpush.bf16.msra.mxu0 0
    %5225 = vmatpush.bf16.msra.mxu0 0
    %5226 = vmatpush.bf16.msra.mxu0 0
    %5227 = vmatpush.bf16.msra.mxu0 0
    %5228 = vmatpush.bf16.msra.mxu0 %v5217
    %5229 = vmatmul.bf16.gmra.mxu0 %v5215
    %v5230 = vpop.f32.mrf.mxu0
    %v5231 = vadd.f32 %v5198, %v5230
    %v5232 = vpop.f32.mrf.mxu0
    %5233 = vdwg.mxu0
    %5234 = vmatpush.bf16.msra.mxu0 0
    %5235 = vmatpush.bf16.msra.mxu0 0
    %5236 = vmatpush.bf16.msra.mxu0 0
    %5237 = vmatpush.bf16.msra.mxu0 0
    %5238 = vmatpush.bf16.msra.mxu0 0
    %5239 = vmatpush.bf16.msra.mxu0 0
    %5240 = vmatpush.bf16.msra.mxu0 0
    %5241 = vmatpush.bf16.msra.mxu0 %v5219
    %5242 = vmatmul.bf16.gmra.mxu0 %v5215
    %v5243 = vpop.f32.mrf.mxu0
    %v5244 = vadd.f32 %v5211, %v5243
    %v5245 = vpop.f32.mrf.mxu0
    %5246 = vdwg.mxu0
    %v5247 = vld [vmem:[%s2381] sm:$0xf]
    %v5249 = vsel %vm2313, %v5247, 0
    %v5251 = vsel %vm2317, %v3927, 0
    %v5253 = vsel %vm2317, %v3942, 0
    %5255 = vmatpush.bf16.msra.mxu0 0
    %5256 = vmatpush.bf16.msra.mxu0 0
    %5257 = vmatpush.bf16.msra.mxu0 0
    %5258 = vmatpush.bf16.msra.mxu0 0
    %5259 = vmatpush.bf16.msra.mxu0 0
    %5260 = vmatpush.bf16.msra.mxu0 0
    %5261 = vmatpush.bf16.msra.mxu0 0
    %5262 = vmatpush.bf16.msra.mxu0 %v5251
    %5263 = vmatmul.bf16.gmra.mxu0 %v5249
    %v5264 = vpop.f32.mrf.mxu0
    %v5265 = vadd.f32 0.0, %v5264
    %v5266 = vpop.f32.mrf.mxu0
    %5267 = vdwg.mxu0
    %5268 = vmatpush.bf16.msra.mxu0 0
    %5269 = vmatpush.bf16.msra.mxu0 0
    %5270 = vmatpush.bf16.msra.mxu0 0
    %5271 = vmatpush.bf16.msra.mxu0 0
    %5272 = vmatpush.bf16.msra.mxu0 0
    %5273 = vmatpush.bf16.msra.mxu0 0
    %5274 = vmatpush.bf16.msra.mxu0 0
    %5275 = vmatpush.bf16.msra.mxu0 %v5253
    %5276 = vmatmul.bf16.gmra.mxu0 %v5249
    %v5277 = vpop.f32.mrf.mxu0
    %v5278 = vadd.f32 0.0, %v5277
    %v5279 = vpop.f32.mrf.mxu0
    %5280 = vdwg.mxu0
    %v5281 = vadd.f32 %v5231, %v5265
    %v5282 = vadd.f32 %v5244, %v5278
    %v5283 = vld [vmem:[%s2418] sm:$0xf]
    %v5285 = vsel %vm2313, %v5283, 0
    %v5287 = vsel %vm2317, %v4171, 0
    %v5289 = vsel %vm2317, %v4186, 0
    %5291 = vmatpush.bf16.msra.mxu0 0
    %5292 = vmatpush.bf16.msra.mxu0 0
    %5293 = vmatpush.bf16.msra.mxu0 0
    %5294 = vmatpush.bf16.msra.mxu0 0
    %5295 = vmatpush.bf16.msra.mxu0 0
    %5296 = vmatpush.bf16.msra.mxu0 0
    %5297 = vmatpush.bf16.msra.mxu0 0
    %5298 = vmatpush.bf16.msra.mxu0 %v5287
    %5299 = vmatmul.bf16.gmra.mxu0 %v5285
    %v5300 = vpop.f32.mrf.mxu0
    %v5301 = vadd.f32 0.0, %v5300
    %v5302 = vpop.f32.mrf.mxu0
    %5303 = vdwg.mxu0
    %5304 = vmatpush.bf16.msra.mxu0 0
    %5305 = vmatpush.bf16.msra.mxu0 0
    %5306 = vmatpush.bf16.msra.mxu0 0
    %5307 = vmatpush.bf16.msra.mxu0 0
    %5308 = vmatpush.bf16.msra.mxu0 0
    %5309 = vmatpush.bf16.msra.mxu0 0
    %5310 = vmatpush.bf16.msra.mxu0 0
    %5311 = vmatpush.bf16.msra.mxu0 %v5289
    %5312 = vmatmul.bf16.gmra.mxu0 %v5285
    %v5313 = vpop.f32.mrf.mxu0
    %v5314 = vadd.f32 0.0, %v5313
    %v5315 = vpop.f32.mrf.mxu0
    %5316 = vdwg.mxu0
    %v5317 = vadd.f32 %v5281, %v5301
    %v5318 = vadd.f32 %v5282, %v5314
    %v5319 = vpack.c.bf16 %v5318, %v5317
    %s5320 = scalar_lea.vmem [#allocation2], 32
    %5321 = vst [vmem:[%s5320] sm:$0xff] %v5319
    %v5322 = vld [vmem:[%s2457] sm:$0xf]
    %v5323 = vld [vmem:[%s2459] sm:$0xf]
    %v5325 = vsel %vm2313, %v5323, 0
    %v5327 = vsel %vm2317, %v3619, 0
    %v5329 = vsel %vm2317, %v3634, 0
    %5331 = vmatpush.bf16.msra.mxu0 0
    %5332 = vmatpush.bf16.msra.mxu0 0
    %5333 = vmatpush.bf16.msra.mxu0 0
    %5334 = vmatpush.bf16.msra.mxu0 0
    %5335 = vmatpush.bf16.msra.mxu0 0
    %5336 = vmatpush.bf16.msra.mxu0 0
    %5337 = vmatpush.bf16.msra.mxu0 0
    %5338 = vmatpush.bf16.msra.mxu0 %v5327
    %5339 = vmatmul.bf16.gmra.mxu0 %v5325
    %v5340 = vpop.f32.mrf.mxu0
    %v5341 = vadd.f32 0.0, %v5340
    %v5342 = vpop.f32.mrf.mxu0
    %5343 = vdwg.mxu0
    %5344 = vmatpush.bf16.msra.mxu0 0
    %5345 = vmatpush.bf16.msra.mxu0 0
    %5346 = vmatpush.bf16.msra.mxu0 0
    %5347 = vmatpush.bf16.msra.mxu0 0
    %5348 = vmatpush.bf16.msra.mxu0 0
    %5349 = vmatpush.bf16.msra.mxu0 0
    %5350 = vmatpush.bf16.msra.mxu0 0
    %5351 = vmatpush.bf16.msra.mxu0 %v5329
    %5352 = vmatmul.bf16.gmra.mxu0 %v5325
    %v5353 = vpop.f32.mrf.mxu0
    %v5354 = vadd.f32 0.0, %v5353
    %v5355 = vpop.f32.mrf.mxu0
    %5356 = vdwg.mxu0
    %v5358 = vsel %vm2313, %v5322, 0
    %5360 = vmatpush.bf16.msra.mxu0 0
    %5361 = vmatpush.bf16.msra.mxu0 0
    %5362 = vmatpush.bf16.msra.mxu0 0
    %5363 = vmatpush.bf16.msra.mxu0 0
    %5364 = vmatpush.bf16.msra.mxu0 0
    %5365 = vmatpush.bf16.msra.mxu0 0
    %5366 = vmatpush.bf16.msra.mxu0 0
    %5367 = vmatpush.bf16.msra.mxu0 %v5184
    %5368 = vmatmul.bf16.gmra.mxu0 %v5358
    %v5369 = vpop.f32.mrf.mxu0
    %v5370 = vadd.f32 %v5341, %v5369
    %v5371 = vpop.f32.mrf.mxu0
    %5372 = vdwg.mxu0
    %5373 = vmatpush.bf16.msra.mxu0 0
    %5374 = vmatpush.bf16.msra.mxu0 0
    %5375 = vmatpush.bf16.msra.mxu0 0
    %5376 = vmatpush.bf16.msra.mxu0 0
    %5377 = vmatpush.bf16.msra.mxu0 0
    %5378 = vmatpush.bf16.msra.mxu0 0
    %5379 = vmatpush.bf16.msra.mxu0 0
    %5380 = vmatpush.bf16.msra.mxu0 %v5186
    %5381 = vmatmul.bf16.gmra.mxu0 %v5358
    %v5382 = vpop.f32.mrf.mxu0
    %v5383 = vadd.f32 %v5354, %v5382
    %v5384 = vpop.f32.mrf.mxu0
    %5385 = vdwg.mxu0
    %v5386 = vld [vmem:[%s2523] sm:$0xf]
    %v5388 = vsel %vm2313, %v5386, 0
    %5390 = vmatpush.bf16.msra.mxu0 0
    %5391 = vmatpush.bf16.msra.mxu0 0
    %5392 = vmatpush.bf16.msra.mxu0 0
    %5393 = vmatpush.bf16.msra.mxu0 0
    %5394 = vmatpush.bf16.msra.mxu0 0
    %5395 = vmatpush.bf16.msra.mxu0 0
    %5396 = vmatpush.bf16.msra.mxu0 0
    %5397 = vmatpush.bf16.msra.mxu0 %v5287
    %5398 = vmatmul.bf16.gmra.mxu0 %v5388
    %v5399 = vpop.f32.mrf.mxu0
    %v5400 = vadd.f32 0.0, %v5399
    %v5401 = vpop.f32.mrf.mxu0
    %5402 = vdwg.mxu0
    %5403 = vmatpush.bf16.msra.mxu0 0
    %5404 = vmatpush.bf16.msra.mxu0 0
    %5405 = vmatpush.bf16.msra.mxu0 0
    %5406 = vmatpush.bf16.msra.mxu0 0
    %5407 = vmatpush.bf16.msra.mxu0 0
    %5408 = vmatpush.bf16.msra.mxu0 0
    %5409 = vmatpush.bf16.msra.mxu0 0
    %5410 = vmatpush.bf16.msra.mxu0 %v5289
    %5411 = vmatmul.bf16.gmra.mxu0 %v5388
    %v5412 = vpop.f32.mrf.mxu0
    %v5413 = vadd.f32 0.0, %v5412
    %v5414 = vpop.f32.mrf.mxu0
    %5415 = vdwg.mxu0
    %v5416 = vadd.f32 %v5370, %v5400
    %v5417 = vadd.f32 %v5383, %v5413
    %v5418 = vld [vmem:[%s2556] sm:$0xf]
    %v5420 = vsel %vm2313, %v5418, 0
    %v5422 = vsel %vm2317, %v4415, 0
    %v5424 = vsel %vm2317, %v4430, 0
    %5426 = vmatpush.bf16.msra.mxu0 0
    %5427 = vmatpush.bf16.msra.mxu0 0
    %5428 = vmatpush.bf16.msra.mxu0 0
    %5429 = vmatpush.bf16.msra.mxu0 0
    %5430 = vmatpush.bf16.msra.mxu0 0
    %5431 = vmatpush.bf16.msra.mxu0 0
    %5432 = vmatpush.bf16.msra.mxu0 0
    %5433 = vmatpush.bf16.msra.mxu0 %v5422
    %5434 = vmatmul.bf16.gmra.mxu0 %v5420
    %v5435 = vpop.f32.mrf.mxu0
    %v5436 = vadd.f32 0.0, %v5435
    %v5437 = vpop.f32.mrf.mxu0
    %5438 = vdwg.mxu0
    %5439 = vmatpush.bf16.msra.mxu0 0
    %5440 = vmatpush.bf16.msra.mxu0 0
    %5441 = vmatpush.bf16.msra.mxu0 0
    %5442 = vmatpush.bf16.msra.mxu0 0
    %5443 = vmatpush.bf16.msra.mxu0 0
    %5444 = vmatpush.bf16.msra.mxu0 0
    %5445 = vmatpush.bf16.msra.mxu0 0
    %5446 = vmatpush.bf16.msra.mxu0 %v5424
    %5447 = vmatmul.bf16.gmra.mxu0 %v5420
    %v5448 = vpop.f32.mrf.mxu0
    %v5449 = vadd.f32 0.0, %v5448
    %v5450 = vpop.f32.mrf.mxu0
    %5451 = vdwg.mxu0
    %v5452 = vadd.f32 %v5416, %v5436
    %v5453 = vadd.f32 %v5417, %v5449
    %v5454 = vpack.c.bf16 %v5453, %v5452
    %s5455 = scalar_lea.vmem [#allocation2], 40
    %5456 = vst [vmem:[%s5455] sm:$0xff] %v5454
    %v5457 = vld [vmem:[%s2596] sm:$0xf]
    %v5458 = vld [vmem:[%s2598] sm:$0xf]
    %v5460 = vsel %vm2313, %v5458, 0
    %5462 = vmatpush.bf16.msra.mxu0 0
    %5463 = vmatpush.bf16.msra.mxu0 0
    %5464 = vmatpush.bf16.msra.mxu0 0
    %5465 = vmatpush.bf16.msra.mxu0 0
    %5466 = vmatpush.bf16.msra.mxu0 0
    %5467 = vmatpush.bf16.msra.mxu0 0
    %5468 = vmatpush.bf16.msra.mxu0 0
    %5469 = vmatpush.bf16.msra.mxu0 %v5287
    %5470 = vmatmul.bf16.gmra.mxu0 %v5460
    %v5471 = vpop.f32.mrf.mxu0
    %v5472 = vadd.f32 0.0, %v5471
    %v5473 = vpop.f32.mrf.mxu0
    %5474 = vdwg.mxu0
    %5475 = vmatpush.bf16.msra.mxu0 0
    %5476 = vmatpush.bf16.msra.mxu0 0
    %5477 = vmatpush.bf16.msra.mxu0 0
    %5478 = vmatpush.bf16.msra.mxu0 0
    %5479 = vmatpush.bf16.msra.mxu0 0
    %5480 = vmatpush.bf16.msra.mxu0 0
    %5481 = vmatpush.bf16.msra.mxu0 0
    %5482 = vmatpush.bf16.msra.mxu0 %v5289
    %5483 = vmatmul.bf16.gmra.mxu0 %v5460
    %v5484 = vpop.f32.mrf.mxu0
    %v5485 = vadd.f32 0.0, %v5484
    %v5486 = vpop.f32.mrf.mxu0
    %5487 = vdwg.mxu0
    %v5489 = vsel %vm2313, %v5457, 0
    %5491 = vmatpush.bf16.msra.mxu0 0
    %5492 = vmatpush.bf16.msra.mxu0 0
    %5493 = vmatpush.bf16.msra.mxu0 0
    %5494 = vmatpush.bf16.msra.mxu0 0
    %5495 = vmatpush.bf16.msra.mxu0 0
    %5496 = vmatpush.bf16.msra.mxu0 0
    %5497 = vmatpush.bf16.msra.mxu0 0
    %5498 = vmatpush.bf16.msra.mxu0 %v5251
    %5499 = vmatmul.bf16.gmra.mxu0 %v5489
    %v5500 = vpop.f32.mrf.mxu0
    %v5501 = vadd.f32 %v5472, %v5500
    %v5502 = vpop.f32.mrf.mxu0
    %5503 = vdwg.mxu0
    %5504 = vmatpush.bf16.msra.mxu0 0
    %5505 = vmatpush.bf16.msra.mxu0 0
    %5506 = vmatpush.bf16.msra.mxu0 0
    %5507 = vmatpush.bf16.msra.mxu0 0
    %5508 = vmatpush.bf16.msra.mxu0 0
    %5509 = vmatpush.bf16.msra.mxu0 0
    %5510 = vmatpush.bf16.msra.mxu0 0
    %5511 = vmatpush.bf16.msra.mxu0 %v5253
    %5512 = vmatmul.bf16.gmra.mxu0 %v5489
    %v5513 = vpop.f32.mrf.mxu0
    %v5514 = vadd.f32 %v5485, %v5513
    %v5515 = vpop.f32.mrf.mxu0
    %5516 = vdwg.mxu0
    %v5517 = vld [vmem:[%s2658] sm:$0xf]
    %v5519 = vsel %vm2313, %v5517, 0
    %v5521 = vsel %vm2317, %v4675, 0
    %v5523 = vsel %vm2317, %v4690, 0
    %5525 = vmatpush.bf16.msra.mxu0 0
    %5526 = vmatpush.bf16.msra.mxu0 0
    %5527 = vmatpush.bf16.msra.mxu0 0
    %5528 = vmatpush.bf16.msra.mxu0 0
    %5529 = vmatpush.bf16.msra.mxu0 0
    %5530 = vmatpush.bf16.msra.mxu0 0
    %5531 = vmatpush.bf16.msra.mxu0 0
    %5532 = vmatpush.bf16.msra.mxu0 %v5521
    %5533 = vmatmul.bf16.gmra.mxu0 %v5519
    %v5534 = vpop.f32.mrf.mxu0
    %v5535 = vadd.f32 0.0, %v5534
    %v5536 = vpop.f32.mrf.mxu0
    %5537 = vdwg.mxu0
    %5538 = vmatpush.bf16.msra.mxu0 0
    %5539 = vmatpush.bf16.msra.mxu0 0
    %5540 = vmatpush.bf16.msra.mxu0 0
    %5541 = vmatpush.bf16.msra.mxu0 0
    %5542 = vmatpush.bf16.msra.mxu0 0
    %5543 = vmatpush.bf16.msra.mxu0 0
    %5544 = vmatpush.bf16.msra.mxu0 0
    %5545 = vmatpush.bf16.msra.mxu0 %v5523
    %5546 = vmatmul.bf16.gmra.mxu0 %v5519
    %v5547 = vpop.f32.mrf.mxu0
    %v5548 = vadd.f32 0.0, %v5547
    %v5549 = vpop.f32.mrf.mxu0
    %5550 = vdwg.mxu0
    %v5551 = vadd.f32 %v5501, %v5535
    %v5552 = vadd.f32 %v5514, %v5548
    %v5553 = vld [vmem:[%s2695] sm:$0xf]
    %v5555 = vsel %vm2313, %v5553, 0
    %v5557 = vsel %vm2317, %v4919, 0
    %v5559 = vsel %vm2317, %v4934, 0
    %5561 = vmatpush.bf16.msra.mxu0 0
    %5562 = vmatpush.bf16.msra.mxu0 0
    %5563 = vmatpush.bf16.msra.mxu0 0
    %5564 = vmatpush.bf16.msra.mxu0 0
    %5565 = vmatpush.bf16.msra.mxu0 0
    %5566 = vmatpush.bf16.msra.mxu0 0
    %5567 = vmatpush.bf16.msra.mxu0 0
    %5568 = vmatpush.bf16.msra.mxu0 %v5557
    %5569 = vmatmul.bf16.gmra.mxu0 %v5555
    %v5570 = vpop.f32.mrf.mxu0
    %v5571 = vadd.f32 0.0, %v5570
    %v5572 = vpop.f32.mrf.mxu0
    %5573 = vdwg.mxu0
    %5574 = vmatpush.bf16.msra.mxu0 0
    %5575 = vmatpush.bf16.msra.mxu0 0
    %5576 = vmatpush.bf16.msra.mxu0 0
    %5577 = vmatpush.bf16.msra.mxu0 0
    %5578 = vmatpush.bf16.msra.mxu0 0
    %5579 = vmatpush.bf16.msra.mxu0 0
    %5580 = vmatpush.bf16.msra.mxu0 0
    %5581 = vmatpush.bf16.msra.mxu0 %v5559
    %5582 = vmatmul.bf16.gmra.mxu0 %v5555
    %v5583 = vpop.f32.mrf.mxu0
    %v5584 = vadd.f32 0.0, %v5583
    %v5585 = vpop.f32.mrf.mxu0
    %5586 = vdwg.mxu0
    %v5587 = vadd.f32 %v5551, %v5571
    %v5588 = vadd.f32 %v5552, %v5584
    %v5589 = vpack.c.bf16 %v5588, %v5587
    %s5590 = scalar_lea.vmem [#allocation2], 48
    %5591 = vst [vmem:[%s5590] sm:$0xff] %v5589
    %v5592 = vld [vmem:[%s2735] sm:$0xf]
    %v5593 = vld [vmem:[%s2737] sm:$0xf]
    %v5595 = vsel %vm2313, %v5593, 0
    %5597 = vmatpush.bf16.msra.mxu0 0
    %5598 = vmatpush.bf16.msra.mxu0 0
    %5599 = vmatpush.bf16.msra.mxu0 0
    %5600 = vmatpush.bf16.msra.mxu0 0
    %5601 = vmatpush.bf16.msra.mxu0 0
    %5602 = vmatpush.bf16.msra.mxu0 0
    %5603 = vmatpush.bf16.msra.mxu0 0
    %5604 = vmatpush.bf16.msra.mxu0 %v5422
    %5605 = vmatmul.bf16.gmra.mxu0 %v5595
    %v5606 = vpop.f32.mrf.mxu0
    %v5607 = vadd.f32 0.0, %v5606
    %v5608 = vpop.f32.mrf.mxu0
    %5609 = vdwg.mxu0
    %5610 = vmatpush.bf16.msra.mxu0 0
    %5611 = vmatpush.bf16.msra.mxu0 0
    %5612 = vmatpush.bf16.msra.mxu0 0
    %5613 = vmatpush.bf16.msra.mxu0 0
    %5614 = vmatpush.bf16.msra.mxu0 0
    %5615 = vmatpush.bf16.msra.mxu0 0
    %5616 = vmatpush.bf16.msra.mxu0 0
    %5617 = vmatpush.bf16.msra.mxu0 %v5424
    %5618 = vmatmul.bf16.gmra.mxu0 %v5595
    %v5619 = vpop.f32.mrf.mxu0
    %v5620 = vadd.f32 0.0, %v5619
    %v5621 = vpop.f32.mrf.mxu0
    %5622 = vdwg.mxu0
    %v5624 = vsel %vm2313, %v5592, 0
    %5626 = vmatpush.bf16.msra.mxu0 0
    %5627 = vmatpush.bf16.msra.mxu0 0
    %5628 = vmatpush.bf16.msra.mxu0 0
    %5629 = vmatpush.bf16.msra.mxu0 0
    %5630 = vmatpush.bf16.msra.mxu0 0
    %5631 = vmatpush.bf16.msra.mxu0 0
    %5632 = vmatpush.bf16.msra.mxu0 0
    %5633 = vmatpush.bf16.msra.mxu0 %v5287
    %5634 = vmatmul.bf16.gmra.mxu0 %v5624
    %v5635 = vpop.f32.mrf.mxu0
    %v5636 = vadd.f32 %v5607, %v5635
    %v5637 = vpop.f32.mrf.mxu0
    %5638 = vdwg.mxu0
    %5639 = vmatpush.bf16.msra.mxu0 0
    %5640 = vmatpush.bf16.msra.mxu0 0
    %5641 = vmatpush.bf16.msra.mxu0 0
    %5642 = vmatpush.bf16.msra.mxu0 0
    %5643 = vmatpush.bf16.msra.mxu0 0
    %5644 = vmatpush.bf16.msra.mxu0 0
    %5645 = vmatpush.bf16.msra.mxu0 0
    %5646 = vmatpush.bf16.msra.mxu0 %v5289
    %5647 = vmatmul.bf16.gmra.mxu0 %v5624
    %v5648 = vpop.f32.mrf.mxu0
    %v5649 = vadd.f32 %v5620, %v5648
    %v5650 = vpop.f32.mrf.mxu0
    %5651 = vdwg.mxu0
    %v5652 = vld [vmem:[%s2797] sm:$0xf]
    %v5654 = vsel %vm2313, %v5652, 0
    %5656 = vmatpush.bf16.msra.mxu0 0
    %5657 = vmatpush.bf16.msra.mxu0 0
    %5658 = vmatpush.bf16.msra.mxu0 0
    %5659 = vmatpush.bf16.msra.mxu0 0
    %5660 = vmatpush.bf16.msra.mxu0 0
    %5661 = vmatpush.bf16.msra.mxu0 0
    %5662 = vmatpush.bf16.msra.mxu0 0
    %5663 = vmatpush.bf16.msra.mxu0 %v5557
    %5664 = vmatmul.bf16.gmra.mxu0 %v5654
    %v5665 = vpop.f32.mrf.mxu0
    %v5666 = vadd.f32 0.0, %v5665
    %v5667 = vpop.f32.mrf.mxu0
    %5668 = vdwg.mxu0
    %5669 = vmatpush.bf16.msra.mxu0 0
    %5670 = vmatpush.bf16.msra.mxu0 0
    %5671 = vmatpush.bf16.msra.mxu0 0
    %5672 = vmatpush.bf16.msra.mxu0 0
    %5673 = vmatpush.bf16.msra.mxu0 0
    %5674 = vmatpush.bf16.msra.mxu0 0
    %5675 = vmatpush.bf16.msra.mxu0 0
    %5676 = vmatpush.bf16.msra.mxu0 %v5559
    %5677 = vmatmul.bf16.gmra.mxu0 %v5654
    %v5678 = vpop.f32.mrf.mxu0
    %v5679 = vadd.f32 0.0, %v5678
    %v5680 = vpop.f32.mrf.mxu0
    %5681 = vdwg.mxu0
    %v5682 = vadd.f32 %v5636, %v5666
    %v5683 = vadd.f32 %v5649, %v5679
    %v5684 = vld [vmem:[%s2830] sm:$0xf]
    %v5686 = vsel %vm2313, %v5684, 0
    %v5688 = vsel %vm2317, %v5163, 0
    %v5690 = vsel %vm2317, %v5178, 0
    %5692 = vmatpush.bf16.msra.mxu0 0
    %5693 = vmatpush.bf16.msra.mxu0 0
    %5694 = vmatpush.bf16.msra.mxu0 0
    %5695 = vmatpush.bf16.msra.mxu0 0
    %5696 = vmatpush.bf16.msra.mxu0 0
    %5697 = vmatpush.bf16.msra.mxu0 0
    %5698 = vmatpush.bf16.msra.mxu0 0
    %5699 = vmatpush.bf16.msra.mxu0 %v5688
    %5700 = vmatmul.bf16.gmra.mxu0 %v5686
    %v5701 = vpop.f32.mrf.mxu0
    %v5702 = vadd.f32 0.0, %v5701
    %v5703 = vpop.f32.mrf.mxu0
    %5704 = vdwg.mxu0
    %5705 = vmatpush.bf16.msra.mxu0 0
    %5706 = vmatpush.bf16.msra.mxu0 0
    %5707 = vmatpush.bf16.msra.mxu0 0
    %5708 = vmatpush.bf16.msra.mxu0 0
    %5709 = vmatpush.bf16.msra.mxu0 0
    %5710 = vmatpush.bf16.msra.mxu0 0
    %5711 = vmatpush.bf16.msra.mxu0 0
    %5712 = vmatpush.bf16.msra.mxu0 %v5690
    %5713 = vmatmul.bf16.gmra.mxu0 %v5686
    %v5714 = vpop.f32.mrf.mxu0
    %v5715 = vadd.f32 0.0, %v5714
    %v5716 = vpop.f32.mrf.mxu0
    %5717 = vdwg.mxu0
    %v5718 = vadd.f32 %v5682, %v5702
    %v5719 = vadd.f32 %v5683, %v5715
    %v5720 = vpack.c.bf16 %v5719, %v5718
    %s5721 = scalar_lea.vmem [#allocation2], 56
    %5722 = vst [vmem:[%s5721] sm:$0xff] %v5720
    %v5723 = vadd.f32 %v5317, %v5452
    %v5724 = vadd.f32 %v5318, %v5453
    %v5725 = vadd.f32 %v5723, %v5587
    %v5726 = vadd.f32 %v5724, %v5588
    %v5727 = vadd.f32 %v5725, %v5718
    %v5728 = vadd.f32 %v5726, %v5719
    %v5729 = vmul.f32 %v5317, %v5317
    %v5730 = vmul.f32 %v5318, %v5318
    %v5731 = vmul.f32 %v5452, %v5452
    %v5732 = vmul.f32 %v5453, %v5453
    %v5733 = vadd.f32 %v5729, %v5731
    %v5734 = vadd.f32 %v5730, %v5732
    %v5735 = vmul.f32 %v5587, %v5587
    %v5736 = vmul.f32 %v5588, %v5588
    %v5737 = vadd.f32 %v5733, %v5735
    %v5738 = vadd.f32 %v5734, %v5736
    %v5739 = vmul.f32 %v5718, %v5718
    %v5740 = vmul.f32 %v5719, %v5719
    %v5741 = vadd.f32 %v5737, %v5739
    %v5742 = vadd.f32 %v5738, %v5740
    %v5743 = vadd.f32 %v5727, %v5728
    %5744 = vadd.xlane.f32.xlu0 %v5743
    %v5745 = vpop.xlane.xlu0 %5744
    %v5746 = vadd.f32 %v2893, %v5745
    %v5747 = vadd.f32 %v5741, %v5742
    %5748 = vadd.xlane.f32.xlu0 %v5747
    %v5749 = vpop.xlane.xlu0 %5748
    %v5750 = vadd.f32 %v2897, %v5749
    %v5752 = vlaneseq
    %v5753 = vand.u32 %v5752, 127
    %v5754 = vperm.slane %v5746, %v5753
    %v5757 = vperm.slane %v5750, %v5753
    %vm5759 = vcmask 1040384
    %v5760 = vsel %vm5759, %v5754, %v5757
    %vm5761 = vcmask 58368
    %5762 = vst.msk [vmem:[#allocation4] sm:$0x3] %vm5761, %v5760
    // Predicated region
    $region10: #{tpu_custom_call.1} parent=1 // pred_check
      _
    $region11: #{tpu_custom_call.1} parent=1 // pred_check_branch
      %5764 = sbr.rel (0) target = $region13
    $region12: #{tpu_custom_call.1} parent=1 // pred_region
      %5766 = vsyncadd [#allocation3], 0
      %s5767 = sshll.u32 [#allocation2], 4
      %s5768 = int_to_ptr.vmem [resolvable:$true] %s5767
      %s5769 = sshll.u32 %s2, 4
      %s5770 = int_to_ptr.hbm [resolvable:$true] %s5769
      %5775 = dma.vmem_to_hbm [thread:$0]  %s5768, 1024, %s5770, [#allocation3], 128, 128, 8
    $region13: #{tpu_custom_call.1} parent=1 // pred_fallthru
      _
    // Predicated region
    $region14: #{tpu_custom_call.1} parent=1 // pred_check
      _
    $region15: #{tpu_custom_call.1} parent=1 // pred_check_branch
      %5777 = sbr.rel (0) target = $region17
    $region16: #{tpu_custom_call.1} parent=1 // pred_region
      %5779 = vsyncadd [#allocation5], 0
      %s5781 = sshll.u32 [#allocation4], 4
      %s5782 = int_to_ptr.vmem [resolvable:$true] %s5781
      %s5783 = sshll.u32 %s3, 4
      %s5784 = int_to_ptr.hbm [resolvable:$true] %s5783
      %5786 = dma.vmem_to_hbm [thread:$0]  %s5782, 32, %s5784, [#allocation5]
    $region17: #{tpu_custom_call.1} parent=1 // pred_fallthru
      _
    // Predicated region
    $region18: #{tpu_custom_call.1} parent=1 // pred_check
      _
    $region19: #{tpu_custom_call.1} parent=1 // pred_check_branch
      %5788 = sbr.rel (0) target = $region21
    $region20: #{tpu_custom_call.1} parent=1 // pred_region
      %5790 = dma.done [#allocation3], 1024
    $region21: #{tpu_custom_call.1} parent=1 // pred_fallthru
      _
    // Predicated region
    $region22: #{tpu_custom_call.1} parent=1 // pred_check
      _
    $region23: #{tpu_custom_call.1} parent=1 // pred_check_branch
      %5792 = sbr.rel (0) target = $region25
    $region24: #{tpu_custom_call.1} parent=1 // pred_region
      %5794 = dma.done [#allocation5], 32
    $region25: #{tpu_custom_call.1} parent=1 // pred_fallthru
      _
    %5795 = vsyncpa [#allocation3], 1
    %5796 = vsyncpa [#allocation5], 1

</llo_original>
